<compile_context>
chip_gen: v6e
topology: v6e:2x2x1
jax: 0.10.0
libtpu: 0.0.40
codegen_flags: <defaults>
</compile_context>

<pallas_src>
import functools

import jax
import jax.numpy as jnp
from jax.experimental import pallas as pl
from jax.experimental.pallas import tpu as pltpu


# ---------------------------------------------------------------------------
# Fused forward kernel: everything resident in VMEM, single invocation.
# ---------------------------------------------------------------------------

def _fused_forward_kernel(
    # inputs
    x_ref,        # (B*T, F)   flattened encoder input
    y_ref,        # (B*T, F)   flattened target
    w1_ref,       # (F, R)     folded prenet weight  (fe_w @ pre_w)
    b1_ref,       # (1, R)     folded prenet bias    ((fe_b + sys_enc) @ pre_w + pre_b)
    c0_ref,       # (1, R)     SRU initial cell state (shared by all layers / batch rows)
    sru_w_ref,    # (L, R, 3R)
    vf_ref,       # (L, R)
    vr_ref,       # (L, R)
    bf_ref,       # (L, R)
    br_ref,       # (L, R)
    post_w_ref,   # (R, P)
    post_b_ref,   # (1, P)
    rest_w_ref,   # (P, F)
    rest_b_ref,   # (1, F)
    # outputs
    y_out_ref,    # (B*T, F)
    loss_ref,     # (1, 1)
    # scratch
    u_sc,         # VMEM (B, T, 3R)
    act_a,        # VMEM (B, T, R)
    act_b,        # VMEM (B, T, R)
    *, B, T, R, L, use_relu):

    # ---- prenet: folded FeatureEncoding + SystemEncoding-add + FeedForward (Linear+ReLU)
    h = jnp.dot(x_ref[...], w1_ref[...], preferred_element_type=jnp.float32)
    h = jnp.maximum(h + b1_ref[...], 0.0)                       # (B*T, R)
    act_a[...] = h.reshape(B, T, R)                             # layout-trivial reshape

    # ---- SRU stack, unrolled time loop (T is small & static)
    c0 = jnp.broadcast_to(c0_ref[...], (B, R))
    vf_all = vf_ref[...]
    vr_all = vr_ref[...]
    bf_all = bf_ref[...]
    br_all = br_ref[...]

    bufs = (act_a, act_b)
    for l in range(L):
        src = bufs[l % 2]
        dst = bufs[(l + 1) % 2]

        # per-layer input transform U = X @ W  (single tiny MXU pass, stays in VMEM)
        xin = src[...].reshape(B * T, R)
        u = jnp.dot(xin, sru_w_ref[l], preferred_element_type=jnp.float32)  # (B*T, 3R)
        u_sc[...] = u.reshape(B, T, 3 * R)

        vf = vf_all[l:l + 1, :]
        vr = vr_all[l:l + 1, :]
        bf = bf_all[l:l + 1, :]
        br = br_all[l:l + 1, :]

        c = c0
        for t in range(T):                                      # fully unrolled
            ut = u_sc[:, t, :]                                  # (B, 3R)
            x_tilde = ut[:, :R]
            uf = ut[:, R:2 * R]
            ur = ut[:, 2 * R:]
            xt = src[:, t, :]                                   # (B, R) skip-connection input

            f = jax.nn.sigmoid(uf + vf * c + bf)
            r = jax.nn.sigmoid(ur + vr * c + br)
            c = f * c + (1.0 - f) * x_tilde
            g = jnp.maximum(c, 0.0) if use_relu else c
            dst[:, t, :] = r * g + (1.0 - r) * xt

    rnn_out = bufs[L % 2][...].reshape(B * T, R)                # (B*T, R)

    # ---- postnet FeedForward (Linear + ReLU) then RestoreEmbedding (Linear)
    p = jnp.dot(rnn_out, post_w_ref[...], preferred_element_type=jnp.float32)
    p = jnp.maximum(p + post_b_ref[...], 0.0)
    y_pred = jnp.dot(p, rest_w_ref[...], preferred_element_type=jnp.float32)
    y_pred = y_pred + rest_b_ref[...]
    y_out_ref[...] = y_pred

    # ---- fused MSE loss
    d = y_ref[...] - y_pred
    loss_ref[...] = jnp.mean(d * d).reshape(1, 1)


# ---------------------------------------------------------------------------
# Model glue (parameter setup + forward)
# ---------------------------------------------------------------------------

class HP:
    max_particle = 3
    feature_embedding_size = 32
    system_embedding_size = 32
    prenet_units = 32
    rnn_units = 32
    rnn_layers = 2
    postnet_units = 32
    dropout_rate = 0.0        # deterministic (dropout is a no-op at rate 0)
    add_system_encoding = True
    use_relu = False
    layer_norm = False


def init_params(hp, key):
    H = hp.system_embedding_size
    R = hp.rnn_units
    P = hp.postnet_units
    F = 2 ** (hp.max_particle + 1)
    ks = jax.random.split(key, 16)

    def nrm(k, shape, scale=0.1):
        return (scale * jax.random.normal(k, shape)).astype(jnp.float32)

    return {
        "fe_w": nrm(ks[0], (F, hp.feature_embedding_size)),
        "fe_b": jnp.zeros((hp.feature_embedding_size,), jnp.float32),
        "sys_embed": nrm(ks[1], (hp.max_particle + 1, hp.system_embedding_size)),
        "pre_w": nrm(ks[2], (H, hp.prenet_units)),
        "pre_b": jnp.zeros((hp.prenet_units,), jnp.float32),
        "h0_w": nrm(ks[3], (H, R)),
        "h0_b": jnp.zeros((R,), jnp.float32),
        "post_w": nrm(ks[4], (R, P)),
        "post_b": jnp.zeros((P,), jnp.float32),
        "rest_w": nrm(ks[5], (P, F)),
        "rest_b": jnp.zeros((F,), jnp.float32),
        "sru_w": [nrm(ks[6 + l], (R, 3 * R)) for l in range(hp.rnn_layers)],
        "sru_vf": [nrm(ks[8 + l], (R,)) for l in range(hp.rnn_layers)],
        "sru_vr": [nrm(ks[10 + l], (R,)) for l in range(hp.rnn_layers)],
        "sru_bf": [jnp.zeros((R,), jnp.float32) for _ in range(hp.rnn_layers)],
        "sru_br": [jnp.zeros((R,), jnp.float32) for _ in range(hp.rnn_layers)],
    }


def rnn_model_forward(params, hp, x, y, num_particle):
    B, T, F = x.shape
    R = hp.rnn_units
    L = hp.rnn_layers
    P = hp.postnet_units

    # ---- tiny weight preprocessing outside the kernel (plain XLA, once per call) ----
    sys_enc = params["sys_embed"][num_particle]                     # (H,)

    # Fold FeatureEncoding + SystemEncoding-add + prenet FeedForward (no nonlinearity
    # between the first two matmuls, so they compose exactly up to fp32 rounding).
    fe_b_eff = params["fe_b"] + (sys_enc if hp.add_system_encoding else 0.0)
    w1 = params["fe_w"] @ params["pre_w"]                           # (F, prenet_units)
    b1 = fe_b_eff @ params["pre_w"] + params["pre_b"]               # (prenet_units,)

    # h0_dense_layer(prenet_system(x, n)[0, 0, :]): 1-row matmul -> leave to XLA.
    h0 = jnp.maximum(sys_enc @ params["h0_w"] + params["h0_b"], 0.0)  # (R,)

    sru_w = jnp.stack(params["sru_w"])                              # (L, R, 3R)
    sru_vf = jnp.stack(params["sru_vf"])                            # (L, R)
    sru_vr = jnp.stack(params["sru_vr"])                            # (L, R)
    sru_bf = jnp.stack(params["sru_bf"])                            # (L, R)
    sru_br = jnp.stack(params["sru_br"])                            # (L, R)

    # ---- single fused kernel launch ----
    y_pred2d, loss2d = pl.pallas_call(
        functools.partial(_fused_forward_kernel, B=B, T=T, R=R, L=L,
                          use_relu=hp.use_relu),
        out_shape=(
            jax.ShapeDtypeStruct((B * T, F), jnp.float32),
            jax.ShapeDtypeStruct((1, 1), jnp.float32),
        ),
        scratch_shapes=[
            pltpu.VMEM((B, T, 3 * R), jnp.float32),   # u_sc
            pltpu.VMEM((B, T, R), jnp.float32),       # act ping
            pltpu.VMEM((B, T, R), jnp.float32),       # act pong
        ],
    )(
        x.reshape(B * T, F), y.reshape(B * T, F),
        w1, b1.reshape(1, -1), h0.reshape(1, R),
        sru_w, sru_vf, sru_vr, sru_bf, sru_br,
        params["post_w"], params["post_b"].reshape(1, P),
        params["rest_w"], params["rest_b"].reshape(1, F),
    )

    return loss2d[0, 0], y_pred2d.reshape(B, T, F)


# ---------------------------------------------------------------------------
# Pure-JAX reference (unfolded weights) for a numerical sanity check.
# ---------------------------------------------------------------------------

def reference_forward(params, hp, x, y, num_particle):
    B, T, F = x.shape
    R = hp.rnn_units
    sys_enc = params["sys_embed"][num_particle]

    h = x @ params["fe_w"] + params["fe_b"]
    if hp.add_system_encoding:
        h = h + sys_enc
    h = jax.nn.relu(h @ params["pre_w"] + params["pre_b"])          # (B, T, R)

    h0 = jax.nn.relu(sys_enc @ params["h0_w"] + params["h0_b"])     # (R,)
    c0 = jnp.broadcast_to(h0, (B, R))

    xr = jnp.transpose(h, (1, 0, 2))                                # (T, B, R)
    for l in range(hp.rnn_layers):
        u = xr @ params["sru_w"][l]                                 # (T, B, 3R)
        vf, vr = params["sru_vf"][l], params["sru_vr"][l]
        bf, br = params["sru_bf"][l], params["sru_br"][l]

        def step(c, inputs):
            u_t, x_t = inputs
            x_tilde, uf, ur = u_t[:, :R], u_t[:, R:2 * R], u_t[:, 2 * R:]
            f = jax.nn.sigmoid(uf + vf * c + bf)
            r = jax.nn.sigmoid(ur + vr * c + br)
            c_new = f * c + (1.0 - f) * x_tilde
            g = jax.nn.relu(c_new) if hp.use_relu else c_new
            h_t = r * g + (1.0 - r) * x_t
            return c_new, h_t

        _, hs = jax.lax.scan(step, c0, (u, xr))
        xr = hs

    rnn_out = jnp.transpose(xr, (1, 0, 2))                          # (B, T, R)
    p = jax.nn.relu(rnn_out @ params["post_w"] + params["post_b"])
    y_ = p @ params["rest_w"] + params["rest_b"]
    loss = jnp.mean((y - y_) ** 2)
    return loss, y_


if __name__ == "__main__":
    hp = HP()
    num_particle = hp.max_particle
    F = 2 ** (num_particle + 1)       # 16
    B, T = 2, 8

    key = jax.random.PRNGKey(0)
    kx, ky, kp = jax.random.split(key, 3)
    x = jax.random.normal(kx, (B, T, F), jnp.float32)
    y = jax.random.normal(ky, (B, T, F), jnp.float32)
    params = init_params(hp, kp)

    fwd = jax.jit(lambda p, xx, yy: rnn_model_forward(p, hp, xx, yy, num_particle))
    loss, y_pred = fwd(params, x, y)
    jax.block_until_ready((loss, y_pred))

    assert y_pred.shape == (B, T, F)
    assert loss.shape == ()

    # Sanity check against the unfolded pure-JAX reference (loose tolerance: the
    # weight folding + MXU matmul passes change fp32 summation order slightly).
    ref_loss, ref_y = reference_forward(params, hp, x, y, num_particle)
    assert float(jnp.max(jnp.abs(y_pred - ref_y))) < 1e-2
    assert abs(float(loss) - float(ref_loss)) < 1e-2

    print("KERNEL_OK")
</pallas_src>

<mosaic_0001>
module attributes {stable_mosaic.version = 11 : i64} {
  func.func @_fused_forward_kernel(%arg0: memref<16x16xf32, #tpu.memory_space<vmem>>, %arg1: memref<16x16xf32, #tpu.memory_space<vmem>>, %arg2: memref<16x32xf32, #tpu.memory_space<vmem>>, %arg3: memref<1x32xf32, #tpu.memory_space<vmem>>, %arg4: memref<1x32xf32, #tpu.memory_space<vmem>>, %arg5: memref<2x32x96xf32, #tpu.memory_space<vmem>>, %arg6: memref<2x32xf32, #tpu.memory_space<vmem>>, %arg7: memref<2x32xf32, #tpu.memory_space<vmem>>, %arg8: memref<2x32xf32, #tpu.memory_space<vmem>>, %arg9: memref<2x32xf32, #tpu.memory_space<vmem>>, %arg10: memref<32x32xf32, #tpu.memory_space<vmem>>, %arg11: memref<1x32xf32, #tpu.memory_space<vmem>>, %arg12: memref<32x16xf32, #tpu.memory_space<vmem>>, %arg13: memref<1x16xf32, #tpu.memory_space<vmem>>, %arg14: memref<16x16xf32, #tpu.memory_space<vmem>>, %arg15: memref<1x1xf32, #tpu.memory_space<vmem>>, %arg16: memref<2x8x96xf32, #tpu.memory_space<vmem>>, %arg17: memref<2x8x32xf32, #tpu.memory_space<vmem>>, %arg18: memref<2x8x32xf32, #tpu.memory_space<vmem>>) attributes {dimension_semantics = [], scalar_prefetch = 0 : i64, scratch_operands = 3 : i64, tpu.core_type = #tpu.core_type<tc>} {
    %c0 = arith.constant 0 : index
    %c0_0 = arith.constant 0 : index
    %0 = vector.load %arg0[%c0, %c0_0] : memref<16x16xf32, #tpu.memory_space<vmem>>, vector<16x16xf32>
    %c0_1 = arith.constant 0 : index
    %c0_2 = arith.constant 0 : index
    %1 = vector.load %arg2[%c0_1, %c0_2] : memref<16x32xf32, #tpu.memory_space<vmem>>, vector<16x32xf32>
    %cst = arith.constant dense<0.000000e+00> : vector<16x32xf32>
    %2 = tpu.matmul %0, %1, %cst {dimension_numbers = #tpu.dot_dimension_numbers<[1], [0], [0], [1], [0, 0, 1, 1], [], []>} : vector<16x16xf32>, vector<16x32xf32>, vector<16x32xf32> -> vector<16x32xf32>
    %c0_3 = arith.constant 0 : index
    %c0_4 = arith.constant 0 : index
    %3 = vector.load %arg3[%c0_3, %c0_4] : memref<1x32xf32, #tpu.memory_space<vmem>>, vector<1x32xf32>
    %4 = vector.broadcast %3 : vector<1x32xf32> to vector<16x32xf32>
    %5 = arith.addf %2, %4 : vector<16x32xf32>
    %cst_5 = arith.constant 0.000000e+00 : f32
    %6 = vector.broadcast %cst_5 : f32 to vector<16x32xf32>
    %7 = arith.maximumf %5, %6 : vector<16x32xf32>
    %8 = vector.shape_cast %7 : vector<16x32xf32> to vector<2x8x32xf32>
    %c0_6 = arith.constant 0 : index
    %c0_7 = arith.constant 0 : index
    %c0_8 = arith.constant 0 : index
    %9 = vector.load %arg17[%c0_6, %c0_7, %c0_8] : memref<2x8x32xf32, #tpu.memory_space<vmem>>, vector<2x8x32xf32>
    tpu.vector_store %arg17[%c0_6, %c0_7, %c0_8], %8 {strides = array<i32>} : memref<2x8x32xf32, #tpu.memory_space<vmem>>, vector<2x8x32xf32>,
    %c0_9 = arith.constant 0 : index
    %c0_10 = arith.constant 0 : index
    %10 = vector.load %arg4[%c0_9, %c0_10] : memref<1x32xf32, #tpu.memory_space<vmem>>, vector<1x32xf32>
    %11 = vector.shape_cast %10 : vector<1x32xf32> to vector<1x32xf32>
    %12 = vector.broadcast %11 : vector<1x32xf32> to vector<2x32xf32>
    %c0_11 = arith.constant 0 : index
    %c0_12 = arith.constant 0 : index
    %13 = vector.load %arg6[%c0_11, %c0_12] : memref<2x32xf32, #tpu.memory_space<vmem>>, vector<2x32xf32>
    %c0_13 = arith.constant 0 : index
    %c0_14 = arith.constant 0 : index
    %14 = vector.load %arg7[%c0_13, %c0_14] : memref<2x32xf32, #tpu.memory_space<vmem>>, vector<2x32xf32>
    %c0_15 = arith.constant 0 : index
    %c0_16 = arith.constant 0 : index
    %15 = vector.load %arg8[%c0_15, %c0_16] : memref<2x32xf32, #tpu.memory_space<vmem>>, vector<2x32xf32>
    %c0_17 = arith.constant 0 : index
    %c0_18 = arith.constant 0 : index
    %16 = vector.load %arg9[%c0_17, %c0_18] : memref<2x32xf32, #tpu.memory_space<vmem>>, vector<2x32xf32>
    %c0_19 = arith.constant 0 : index
    %c0_20 = arith.constant 0 : index
    %c0_21 = arith.constant 0 : index
    %17 = vector.load %arg17[%c0_19, %c0_20, %c0_21] : memref<2x8x32xf32, #tpu.memory_space<vmem>>, vector<2x8x32xf32>
    %18 = vector.shape_cast %17 : vector<2x8x32xf32> to vector<16x32xf32>
    %c0_22 = arith.constant 0 : index
    %c0_23 = arith.constant 0 : index
    %c0_24 = arith.constant 0 : index
    %19 = vector.load %arg5[%c0_22, %c0_23, %c0_24] : memref<2x32x96xf32, #tpu.memory_space<vmem>>, vector<1x32x96xf32>
    %20 = vector.shape_cast %19 : vector<1x32x96xf32> to vector<32x96xf32>
    %cst_25 = arith.constant dense<0.000000e+00> : vector<16x96xf32>
    %21 = tpu.matmul %18, %20, %cst_25 {dimension_numbers = #tpu.dot_dimension_numbers<[1], [0], [0], [1], [0, 0, 1, 1], [], []>} : vector<16x32xf32>, vector<32x96xf32>, vector<16x96xf32> -> vector<16x96xf32>
    %22 = vector.shape_cast %21 : vector<16x96xf32> to vector<2x8x96xf32>
    %c0_26 = arith.constant 0 : index
    %c0_27 = arith.constant 0 : index
    %c0_28 = arith.constant 0 : index
    %23 = vector.load %arg16[%c0_26, %c0_27, %c0_28] : memref<2x8x96xf32, #tpu.memory_space<vmem>>, vector<2x8x96xf32>
    tpu.vector_store %arg16[%c0_26, %c0_27, %c0_28], %22 {strides = array<i32>} : memref<2x8x96xf32, #tpu.memory_space<vmem>>, vector<2x8x96xf32>,
    %24 = vector.extract_strided_slice %13 {offsets = [0, 0], sizes = [1, 32], strides = [1, 1]} : vector<2x32xf32> to vector<1x32xf32>
    %25 = vector.extract_strided_slice %14 {offsets = [0, 0], sizes = [1, 32], strides = [1, 1]} : vector<2x32xf32> to vector<1x32xf32>
    %26 = vector.extract_strided_slice %15 {offsets = [0, 0], sizes = [1, 32], strides = [1, 1]} : vector<2x32xf32> to vector<1x32xf32>
    %27 = vector.extract_strided_slice %16 {offsets = [0, 0], sizes = [1, 32], strides = [1, 1]} : vector<2x32xf32> to vector<1x32xf32>
    %c0_29 = arith.constant 0 : index
    %c0_30 = arith.constant 0 : index
    %c0_31 = arith.constant 0 : index
    %28 = vector.load %arg16[%c0_29, %c0_30, %c0_31] : memref<2x8x96xf32, #tpu.memory_space<vmem>>, vector<2x1x96xf32>
    %29 = vector.shape_cast %28 : vector<2x1x96xf32> to vector<2x96xf32>
    %30 = vector.extract_strided_slice %29 {offsets = [0, 0], sizes = [2, 32], strides = [1, 1]} : vector<2x96xf32> to vector<2x32xf32>
    %31 = vector.extract_strided_slice %29 {offsets = [0, 32], sizes = [2, 32], strides = [1, 1]} : vector<2x96xf32> to vector<2x32xf32>
    %32 = vector.extract_strided_slice %29 {offsets = [0, 64], sizes = [2, 32], strides = [1, 1]} : vector<2x96xf32> to vector<2x32xf32>
    %c0_32 = arith.constant 0 : index
    %c0_33 = arith.constant 0 : index
    %c0_34 = arith.constant 0 : index
    %33 = vector.load %arg17[%c0_32, %c0_33, %c0_34] : memref<2x8x32xf32, #tpu.memory_space<vmem>>, vector<2x1x32xf32>
    %34 = vector.shape_cast %33 : vector<2x1x32xf32> to vector<2x32xf32>
    %35 = vector.broadcast %24 : vector<1x32xf32> to vector<2x32xf32>
    %36 = arith.mulf %35, %12 : vector<2x32xf32>
    %37 = arith.addf %31, %36 : vector<2x32xf32>
    %38 = vector.broadcast %26 : vector<1x32xf32> to vector<2x32xf32>
    %39 = arith.addf %37, %38 : vector<2x32xf32>
    %40 = arith.negf %39 : vector<2x32xf32>
    %41 = math.exp %40 : vector<2x32xf32>
    %cst_35 = arith.constant 1.000000e+00 : f32
    %42 = vector.broadcast %cst_35 : f32 to vector<2x32xf32>
    %43 = arith.addf %42, %41 : vector<2x32xf32>
    %44 = arith.divf %42, %43 : vector<2x32xf32>
    %45 = vector.broadcast %25 : vector<1x32xf32> to vector<2x32xf32>
    %46 = arith.mulf %45, %12 : vector<2x32xf32>
    %47 = arith.addf %32, %46 : vector<2x32xf32>
    %48 = vector.broadcast %27 : vector<1x32xf32> to vector<2x32xf32>
    %49 = arith.addf %47, %48 : vector<2x32xf32>
    %50 = arith.negf %49 : vector<2x32xf32>
    %51 = math.exp %50 : vector<2x32xf32>
    %cst_36 = arith.constant 1.000000e+00 : f32
    %52 = vector.broadcast %cst_36 : f32 to vector<2x32xf32>
    %53 = arith.addf %52, %51 : vector<2x32xf32>
    %54 = arith.divf %52, %53 : vector<2x32xf32>
    %55 = arith.mulf %44, %12 : vector<2x32xf32>
    %cst_37 = arith.constant 1.000000e+00 : f32
    %56 = vector.broadcast %cst_37 : f32 to vector<2x32xf32>
    %57 = arith.subf %56, %44 : vector<2x32xf32>
    %58 = arith.mulf %57, %30 : vector<2x32xf32>
    %59 = arith.addf %55, %58 : vector<2x32xf32>
    %60 = arith.mulf %54, %59 : vector<2x32xf32>
    %cst_38 = arith.constant 1.000000e+00 : f32
    %61 = vector.broadcast %cst_38 : f32 to vector<2x32xf32>
    %62 = arith.subf %61, %54 : vector<2x32xf32>
    %63 = arith.mulf %62, %34 : vector<2x32xf32>
    %64 = arith.addf %60, %63 : vector<2x32xf32>
    %c0_39 = arith.constant 0 : index
    %c0_40 = arith.constant 0 : index
    %c0_41 = arith.constant 0 : index
    %65 = vector.load %arg18[%c0_39, %c0_40, %c0_41] : memref<2x8x32xf32, #tpu.memory_space<vmem>>, vector<2x1x32xf32>
    %66 = vector.shape_cast %65 : vector<2x1x32xf32> to vector<2x32xf32>
    %67 = vector.shape_cast %64 : vector<2x32xf32> to vector<2x1x32xf32>
    tpu.vector_store %arg18[%c0_39, %c0_40, %c0_41], %67 {strides = array<i32>} : memref<2x8x32xf32, #tpu.memory_space<vmem>>, vector<2x1x32xf32>,
    %c0_42 = arith.constant 0 : index
    %c1 = arith.constant 1 : index
    %c0_43 = arith.constant 0 : index
    %68 = vector.load %arg16[%c0_42, %c1, %c0_43] : memref<2x8x96xf32, #tpu.memory_space<vmem>>, vector<2x1x96xf32>
    %69 = vector.shape_cast %68 : vector<2x1x96xf32> to vector<2x96xf32>
    %70 = vector.extract_strided_slice %69 {offsets = [0, 0], sizes = [2, 32], strides = [1, 1]} : vector<2x96xf32> to vector<2x32xf32>
    %71 = vector.extract_strided_slice %69 {offsets = [0, 32], sizes = [2, 32], strides = [1, 1]} : vector<2x96xf32> to vector<2x32xf32>
    %72 = vector.extract_strided_slice %69 {offsets = [0, 64], sizes = [2, 32], strides = [1, 1]} : vector<2x96xf32> to vector<2x32xf32>
    %c0_44 = arith.constant 0 : index
    %c1_45 = arith.constant 1 : index
    %c0_46 = arith.constant 0 : index
    %73 = vector.load %arg17[%c0_44, %c1_45, %c0_46] : memref<2x8x32xf32, #tpu.memory_space<vmem>>, vector<2x1x32xf32>
    %74 = vector.shape_cast %73 : vector<2x1x32xf32> to vector<2x32xf32>
    %75 = vector.broadcast %24 : vector<1x32xf32> to vector<2x32xf32>
    %76 = arith.mulf %75, %59 : vector<2x32xf32>
    %77 = arith.addf %71, %76 : vector<2x32xf32>
    %78 = vector.broadcast %26 : vector<1x32xf32> to vector<2x32xf32>
    %79 = arith.addf %77, %78 : vector<2x32xf32>
    %80 = arith.negf %79 : vector<2x32xf32>
    %81 = math.exp %80 : vector<2x32xf32>
    %cst_47 = arith.constant 1.000000e+00 : f32
    %82 = vector.broadcast %cst_47 : f32 to vector<2x32xf32>
    %83 = arith.addf %82, %81 : vector<2x32xf32>
    %84 = arith.divf %82, %83 : vector<2x32xf32>
    %85 = vector.broadcast %25 : vector<1x32xf32> to vector<2x32xf32>
    %86 = arith.mulf %85, %59 : vector<2x32xf32>
    %87 = arith.addf %72, %86 : vector<2x32xf32>
    %88 = vector.broadcast %27 : vector<1x32xf32> to vector<2x32xf32>
    %89 = arith.addf %87, %88 : vector<2x32xf32>
    %90 = arith.negf %89 : vector<2x32xf32>
    %91 = math.exp %90 : vector<2x32xf32>
    %cst_48 = arith.constant 1.000000e+00 : f32
    %92 = vector.broadcast %cst_48 : f32 to vector<2x32xf32>
    %93 = arith.addf %92, %91 : vector<2x32xf32>
    %94 = arith.divf %92, %93 : vector<2x32xf32>
    %95 = arith.mulf %84, %59 : vector<2x32xf32>
    %cst_49 = arith.constant 1.000000e+00 : f32
    %96 = vector.broadcast %cst_49 : f32 to vector<2x32xf32>
    %97 = arith.subf %96, %84 : vector<2x32xf32>
    %98 = arith.mulf %97, %70 : vector<2x32xf32>
    %99 = arith.addf %95, %98 : vector<2x32xf32>
    %100 = arith.mulf %94, %99 : vector<2x32xf32>
    %cst_50 = arith.constant 1.000000e+00 : f32
    %101 = vector.broadcast %cst_50 : f32 to vector<2x32xf32>
    %102 = arith.subf %101, %94 : vector<2x32xf32>
    %103 = arith.mulf %102, %74 : vector<2x32xf32>
    %104 = arith.addf %100, %103 : vector<2x32xf32>
    %c0_51 = arith.constant 0 : index
    %c1_52 = arith.constant 1 : index
    %c0_53 = arith.constant 0 : index
    %105 = vector.load %arg18[%c0_51, %c1_52, %c0_53] : memref<2x8x32xf32, #tpu.memory_space<vmem>>, vector<2x1x32xf32>
    %106 = vector.shape_cast %105 : vector<2x1x32xf32> to vector<2x32xf32>
    %107 = vector.shape_cast %104 : vector<2x32xf32> to vector<2x1x32xf32>
    tpu.vector_store %arg18[%c0_51, %c1_52, %c0_53], %107 {strides = array<i32>} : memref<2x8x32xf32, #tpu.memory_space<vmem>>, vector<2x1x32xf32>,
    %c0_54 = arith.constant 0 : index
    %c2 = arith.constant 2 : index
    %c0_55 = arith.constant 0 : index
    %108 = vector.load %arg16[%c0_54, %c2, %c0_55] : memref<2x8x96xf32, #tpu.memory_space<vmem>>, vector<2x1x96xf32>
    %109 = vector.shape_cast %108 : vector<2x1x96xf32> to vector<2x96xf32>
    %110 = vector.extract_strided_slice %109 {offsets = [0, 0], sizes = [2, 32], strides = [1, 1]} : vector<2x96xf32> to vector<2x32xf32>
    %111 = vector.extract_strided_slice %109 {offsets = [0, 32], sizes = [2, 32], strides = [1, 1]} : vector<2x96xf32> to vector<2x32xf32>
    %112 = vector.extract_strided_slice %109 {offsets = [0, 64], sizes = [2, 32], strides = [1, 1]} : vector<2x96xf32> to vector<2x32xf32>
    %c0_56 = arith.constant 0 : index
    %c2_57 = arith.constant 2 : index
    %c0_58 = arith.constant 0 : index
    %113 = vector.load %arg17[%c0_56, %c2_57, %c0_58] : memref<2x8x32xf32, #tpu.memory_space<vmem>>, vector<2x1x32xf32>
    %114 = vector.shape_cast %113 : vector<2x1x32xf32> to vector<2x32xf32>
    %115 = vector.broadcast %24 : vector<1x32xf32> to vector<2x32xf32>
    %116 = arith.mulf %115, %99 : vector<2x32xf32>
    %117 = arith.addf %111, %116 : vector<2x32xf32>
    %118 = vector.broadcast %26 : vector<1x32xf32> to vector<2x32xf32>
    %119 = arith.addf %117, %118 : vector<2x32xf32>
    %120 = arith.negf %119 : vector<2x32xf32>
    %121 = math.exp %120 : vector<2x32xf32>
    %cst_59 = arith.constant 1.000000e+00 : f32
    %122 = vector.broadcast %cst_59 : f32 to vector<2x32xf32>
    %123 = arith.addf %122, %121 : vector<2x32xf32>
    %124 = arith.divf %122, %123 : vector<2x32xf32>
    %125 = vector.broadcast %25 : vector<1x32xf32> to vector<2x32xf32>
    %126 = arith.mulf %125, %99 : vector<2x32xf32>
    %127 = arith.addf %112, %126 : vector<2x32xf32>
    %128 = vector.broadcast %27 : vector<1x32xf32> to vector<2x32xf32>
    %129 = arith.addf %127, %128 : vector<2x32xf32>
    %130 = arith.negf %129 : vector<2x32xf32>
    %131 = math.exp %130 : vector<2x32xf32>
    %cst_60 = arith.constant 1.000000e+00 : f32
    %132 = vector.broadcast %cst_60 : f32 to vector<2x32xf32>
    %133 = arith.addf %132, %131 : vector<2x32xf32>
    %134 = arith.divf %132, %133 : vector<2x32xf32>
    %135 = arith.mulf %124, %99 : vector<2x32xf32>
    %cst_61 = arith.constant 1.000000e+00 : f32
    %136 = vector.broadcast %cst_61 : f32 to vector<2x32xf32>
    %137 = arith.subf %136, %124 : vector<2x32xf32>
    %138 = arith.mulf %137, %110 : vector<2x32xf32>
    %139 = arith.addf %135, %138 : vector<2x32xf32>
    %140 = arith.mulf %134, %139 : vector<2x32xf32>
    %cst_62 = arith.constant 1.000000e+00 : f32
    %141 = vector.broadcast %cst_62 : f32 to vector<2x32xf32>
    %142 = arith.subf %141, %134 : vector<2x32xf32>
    %143 = arith.mulf %142, %114 : vector<2x32xf32>
    %144 = arith.addf %140, %143 : vector<2x32xf32>
    %c0_63 = arith.constant 0 : index
    %c2_64 = arith.constant 2 : index
    %c0_65 = arith.constant 0 : index
    %145 = vector.load %arg18[%c0_63, %c2_64, %c0_65] : memref<2x8x32xf32, #tpu.memory_space<vmem>>, vector<2x1x32xf32>
    %146 = vector.shape_cast %145 : vector<2x1x32xf32> to vector<2x32xf32>
    %147 = vector.shape_cast %144 : vector<2x32xf32> to vector<2x1x32xf32>
    tpu.vector_store %arg18[%c0_63, %c2_64, %c0_65], %147 {strides = array<i32>} : memref<2x8x32xf32, #tpu.memory_space<vmem>>, vector<2x1x32xf32>,
    %c0_66 = arith.constant 0 : index
    %c3 = arith.constant 3 : index
    %c0_67 = arith.constant 0 : index
    %148 = vector.load %arg16[%c0_66, %c3, %c0_67] : memref<2x8x96xf32, #tpu.memory_space<vmem>>, vector<2x1x96xf32>
    %149 = vector.shape_cast %148 : vector<2x1x96xf32> to vector<2x96xf32>
    %150 = vector.extract_strided_slice %149 {offsets = [0, 0], sizes = [2, 32], strides = [1, 1]} : vector<2x96xf32> to vector<2x32xf32>
    %151 = vector.extract_strided_slice %149 {offsets = [0, 32], sizes = [2, 32], strides = [1, 1]} : vector<2x96xf32> to vector<2x32xf32>
    %152 = vector.extract_strided_slice %149 {offsets = [0, 64], sizes = [2, 32], strides = [1, 1]} : vector<2x96xf32> to vector<2x32xf32>
    %c0_68 = arith.constant 0 : index
    %c3_69 = arith.constant 3 : index
    %c0_70 = arith.constant 0 : index
    %153 = vector.load %arg17[%c0_68, %c3_69, %c0_70] : memref<2x8x32xf32, #tpu.memory_space<vmem>>, vector<2x1x32xf32>
    %154 = vector.shape_cast %153 : vector<2x1x32xf32> to vector<2x32xf32>
    %155 = vector.broadcast %24 : vector<1x32xf32> to vector<2x32xf32>
    %156 = arith.mulf %155, %139 : vector<2x32xf32>
    %157 = arith.addf %151, %156 : vector<2x32xf32>
    %158 = vector.broadcast %26 : vector<1x32xf32> to vector<2x32xf32>
    %159 = arith.addf %157, %158 : vector<2x32xf32>
    %160 = arith.negf %159 : vector<2x32xf32>
    %161 = math.exp %160 : vector<2x32xf32>
    %cst_71 = arith.constant 1.000000e+00 : f32
    %162 = vector.broadcast %cst_71 : f32 to vector<2x32xf32>
    %163 = arith.addf %162, %161 : vector<2x32xf32>
    %164 = arith.divf %162, %163 : vector<2x32xf32>
    %165 = vector.broadcast %25 : vector<1x32xf32> to vector<2x32xf32>
    %166 = arith.mulf %165, %139 : vector<2x32xf32>
    %167 = arith.addf %152, %166 : vector<2x32xf32>
    %168 = vector.broadcast %27 : vector<1x32xf32> to vector<2x32xf32>
    %169 = arith.addf %167, %168 : vector<2x32xf32>
    %170 = arith.negf %169 : vector<2x32xf32>
    %171 = math.exp %170 : vector<2x32xf32>
    %cst_72 = arith.constant 1.000000e+00 : f32
    %172 = vector.broadcast %cst_72 : f32 to vector<2x32xf32>
    %173 = arith.addf %172, %171 : vector<2x32xf32>
    %174 = arith.divf %172, %173 : vector<2x32xf32>
    %175 = arith.mulf %164, %139 : vector<2x32xf32>
    %cst_73 = arith.constant 1.000000e+00 : f32
    %176 = vector.broadcast %cst_73 : f32 to vector<2x32xf32>
    %177 = arith.subf %176, %164 : vector<2x32xf32>
    %178 = arith.mulf %177, %150 : vector<2x32xf32>
    %179 = arith.addf %175, %178 : vector<2x32xf32>
    %180 = arith.mulf %174, %179 : vector<2x32xf32>
    %cst_74 = arith.constant 1.000000e+00 : f32
    %181 = vector.broadcast %cst_74 : f32 to vector<2x32xf32>
    %182 = arith.subf %181, %174 : vector<2x32xf32>
    %183 = arith.mulf %182, %154 : vector<2x32xf32>
    %184 = arith.addf %180, %183 : vector<2x32xf32>
    %c0_75 = arith.constant 0 : index
    %c3_76 = arith.constant 3 : index
    %c0_77 = arith.constant 0 : index
    %185 = vector.load %arg18[%c0_75, %c3_76, %c0_77] : memref<2x8x32xf32, #tpu.memory_space<vmem>>, vector<2x1x32xf32>
    %186 = vector.shape_cast %185 : vector<2x1x32xf32> to vector<2x32xf32>
    %187 = vector.shape_cast %184 : vector<2x32xf32> to vector<2x1x32xf32>
    tpu.vector_store %arg18[%c0_75, %c3_76, %c0_77], %187 {strides = array<i32>} : memref<2x8x32xf32, #tpu.memory_space<vmem>>, vector<2x1x32xf32>,
    %c0_78 = arith.constant 0 : index
    %c4 = arith.constant 4 : index
    %c0_79 = arith.constant 0 : index
    %188 = vector.load %arg16[%c0_78, %c4, %c0_79] : memref<2x8x96xf32, #tpu.memory_space<vmem>>, vector<2x1x96xf32>
    %189 = vector.shape_cast %188 : vector<2x1x96xf32> to vector<2x96xf32>
    %190 = vector.extract_strided_slice %189 {offsets = [0, 0], sizes = [2, 32], strides = [1, 1]} : vector<2x96xf32> to vector<2x32xf32>
    %191 = vector.extract_strided_slice %189 {offsets = [0, 32], sizes = [2, 32], strides = [1, 1]} : vector<2x96xf32> to vector<2x32xf32>
    %192 = vector.extract_strided_slice %189 {offsets = [0, 64], sizes = [2, 32], strides = [1, 1]} : vector<2x96xf32> to vector<2x32xf32>
    %c0_80 = arith.constant 0 : index
    %c4_81 = arith.constant 4 : index
    %c0_82 = arith.constant 0 : index
    %193 = vector.load %arg17[%c0_80, %c4_81, %c0_82] : memref<2x8x32xf32, #tpu.memory_space<vmem>>, vector<2x1x32xf32>
    %194 = vector.shape_cast %193 : vector<2x1x32xf32> to vector<2x32xf32>
    %195 = vector.broadcast %24 : vector<1x32xf32> to vector<2x32xf32>
    %196 = arith.mulf %195, %179 : vector<2x32xf32>
    %197 = arith.addf %191, %196 : vector<2x32xf32>
    %198 = vector.broadcast %26 : vector<1x32xf32> to vector<2x32xf32>
    %199 = arith.addf %197, %198 : vector<2x32xf32>
    %200 = arith.negf %199 : vector<2x32xf32>
    %201 = math.exp %200 : vector<2x32xf32>
    %cst_83 = arith.constant 1.000000e+00 : f32
    %202 = vector.broadcast %cst_83 : f32 to vector<2x32xf32>
    %203 = arith.addf %202, %201 : vector<2x32xf32>
    %204 = arith.divf %202, %203 : vector<2x32xf32>
    %205 = vector.broadcast %25 : vector<1x32xf32> to vector<2x32xf32>
    %206 = arith.mulf %205, %179 : vector<2x32xf32>
    %207 = arith.addf %192, %206 : vector<2x32xf32>
    %208 = vector.broadcast %27 : vector<1x32xf32> to vector<2x32xf32>
    %209 = arith.addf %207, %208 : vector<2x32xf32>
    %210 = arith.negf %209 : vector<2x32xf32>
    %211 = math.exp %210 : vector<2x32xf32>
    %cst_84 = arith.constant 1.000000e+00 : f32
    %212 = vector.broadcast %cst_84 : f32 to vector<2x32xf32>
    %213 = arith.addf %212, %211 : vector<2x32xf32>
    %214 = arith.divf %212, %213 : vector<2x32xf32>
    %215 = arith.mulf %204, %179 : vector<2x32xf32>
    %cst_85 = arith.constant 1.000000e+00 : f32
    %216 = vector.broadcast %cst_85 : f32 to vector<2x32xf32>
    %217 = arith.subf %216, %204 : vector<2x32xf32>
    %218 = arith.mulf %217, %190 : vector<2x32xf32>
    %219 = arith.addf %215, %218 : vector<2x32xf32>
    %220 = arith.mulf %214, %219 : vector<2x32xf32>
    %cst_86 = arith.constant 1.000000e+00 : f32
    %221 = vector.broadcast %cst_86 : f32 to vector<2x32xf32>
    %222 = arith.subf %221, %214 : vector<2x32xf32>
    %223 = arith.mulf %222, %194 : vector<2x32xf32>
    %224 = arith.addf %220, %223 : vector<2x32xf32>
    %c0_87 = arith.constant 0 : index
    %c4_88 = arith.constant 4 : index
    %c0_89 = arith.constant 0 : index
    %225 = vector.load %arg18[%c0_87, %c4_88, %c0_89] : memref<2x8x32xf32, #tpu.memory_space<vmem>>, vector<2x1x32xf32>
    %226 = vector.shape_cast %225 : vector<2x1x32xf32> to vector<2x32xf32>
    %227 = vector.shape_cast %224 : vector<2x32xf32> to vector<2x1x32xf32>
    tpu.vector_store %arg18[%c0_87, %c4_88, %c0_89], %227 {strides = array<i32>} : memref<2x8x32xf32, #tpu.memory_space<vmem>>, vector<2x1x32xf32>,
    %c0_90 = arith.constant 0 : index
    %c5 = arith.constant 5 : index
    %c0_91 = arith.constant 0 : index
    %228 = vector.load %arg16[%c0_90, %c5, %c0_91] : memref<2x8x96xf32, #tpu.memory_space<vmem>>, vector<2x1x96xf32>
    %229 = vector.shape_cast %228 : vector<2x1x96xf32> to vector<2x96xf32>
    %230 = vector.extract_strided_slice %229 {offsets = [0, 0], sizes = [2, 32], strides = [1, 1]} : vector<2x96xf32> to vector<2x32xf32>
    %231 = vector.extract_strided_slice %229 {offsets = [0, 32], sizes = [2, 32], strides = [1, 1]} : vector<2x96xf32> to vector<2x32xf32>
    %232 = vector.extract_strided_slice %229 {offsets = [0, 64], sizes = [2, 32], strides = [1, 1]} : vector<2x96xf32> to vector<2x32xf32>
    %c0_92 = arith.constant 0 : index
    %c5_93 = arith.constant 5 : index
    %c0_94 = arith.constant 0 : index
    %233 = vector.load %arg17[%c0_92, %c5_93, %c0_94] : memref<2x8x32xf32, #tpu.memory_space<vmem>>, vector<2x1x32xf32>
    %234 = vector.shape_cast %233 : vector<2x1x32xf32> to vector<2x32xf32>
    %235 = vector.broadcast %24 : vector<1x32xf32> to vector<2x32xf32>
    %236 = arith.mulf %235, %219 : vector<2x32xf32>
    %237 = arith.addf %231, %236 : vector<2x32xf32>
    %238 = vector.broadcast %26 : vector<1x32xf32> to vector<2x32xf32>
    %239 = arith.addf %237, %238 : vector<2x32xf32>
    %240 = arith.negf %239 : vector<2x32xf32>
    %241 = math.exp %240 : vector<2x32xf32>
    %cst_95 = arith.constant 1.000000e+00 : f32
    %242 = vector.broadcast %cst_95 : f32 to vector<2x32xf32>
    %243 = arith.addf %242, %241 : vector<2x32xf32>
    %244 = arith.divf %242, %243 : vector<2x32xf32>
    %245 = vector.broadcast %25 : vector<1x32xf32> to vector<2x32xf32>
    %246 = arith.mulf %245, %219 : vector<2x32xf32>
    %247 = arith.addf %232, %246 : vector<2x32xf32>
    %248 = vector.broadcast %27 : vector<1x32xf32> to vector<2x32xf32>
    %249 = arith.addf %247, %248 : vector<2x32xf32>
    %250 = arith.negf %249 : vector<2x32xf32>
    %251 = math.exp %250 : vector<2x32xf32>
    %cst_96 = arith.constant 1.000000e+00 : f32
    %252 = vector.broadcast %cst_96 : f32 to vector<2x32xf32>
    %253 = arith.addf %252, %251 : vector<2x32xf32>
    %254 = arith.divf %252, %253 : vector<2x32xf32>
    %255 = arith.mulf %244, %219 : vector<2x32xf32>
    %cst_97 = arith.constant 1.000000e+00 : f32
    %256 = vector.broadcast %cst_97 : f32 to vector<2x32xf32>
    %257 = arith.subf %256, %244 : vector<2x32xf32>
    %258 = arith.mulf %257, %230 : vector<2x32xf32>
    %259 = arith.addf %255, %258 : vector<2x32xf32>
    %260 = arith.mulf %254, %259 : vector<2x32xf32>
    %cst_98 = arith.constant 1.000000e+00 : f32
    %261 = vector.broadcast %cst_98 : f32 to vector<2x32xf32>
    %262 = arith.subf %261, %254 : vector<2x32xf32>
    %263 = arith.mulf %262, %234 : vector<2x32xf32>
    %264 = arith.addf %260, %263 : vector<2x32xf32>
    %c0_99 = arith.constant 0 : index
    %c5_100 = arith.constant 5 : index
    %c0_101 = arith.constant 0 : index
    %265 = vector.load %arg18[%c0_99, %c5_100, %c0_101] : memref<2x8x32xf32, #tpu.memory_space<vmem>>, vector<2x1x32xf32>
    %266 = vector.shape_cast %265 : vector<2x1x32xf32> to vector<2x32xf32>
    %267 = vector.shape_cast %264 : vector<2x32xf32> to vector<2x1x32xf32>
    tpu.vector_store %arg18[%c0_99, %c5_100, %c0_101], %267 {strides = array<i32>} : memref<2x8x32xf32, #tpu.memory_space<vmem>>, vector<2x1x32xf32>,
    %c0_102 = arith.constant 0 : index
    %c6 = arith.constant 6 : index
    %c0_103 = arith.constant 0 : index
    %268 = vector.load %arg16[%c0_102, %c6, %c0_103] : memref<2x8x96xf32, #tpu.memory_space<vmem>>, vector<2x1x96xf32>
    %269 = vector.shape_cast %268 : vector<2x1x96xf32> to vector<2x96xf32>
    %270 = vector.extract_strided_slice %269 {offsets = [0, 0], sizes = [2, 32], strides = [1, 1]} : vector<2x96xf32> to vector<2x32xf32>
    %271 = vector.extract_strided_slice %269 {offsets = [0, 32], sizes = [2, 32], strides = [1, 1]} : vector<2x96xf32> to vector<2x32xf32>
    %272 = vector.extract_strided_slice %269 {offsets = [0, 64], sizes = [2, 32], strides = [1, 1]} : vector<2x96xf32> to vector<2x32xf32>
    %c0_104 = arith.constant 0 : index
    %c6_105 = arith.constant 6 : index
    %c0_106 = arith.constant 0 : index
    %273 = vector.load %arg17[%c0_104, %c6_105, %c0_106] : memref<2x8x32xf32, #tpu.memory_space<vmem>>, vector<2x1x32xf32>
    %274 = vector.shape_cast %273 : vector<2x1x32xf32> to vector<2x32xf32>
    %275 = vector.broadcast %24 : vector<1x32xf32> to vector<2x32xf32>
    %276 = arith.mulf %275, %259 : vector<2x32xf32>
    %277 = arith.addf %271, %276 : vector<2x32xf32>
    %278 = vector.broadcast %26 : vector<1x32xf32> to vector<2x32xf32>
    %279 = arith.addf %277, %278 : vector<2x32xf32>
    %280 = arith.negf %279 : vector<2x32xf32>
    %281 = math.exp %280 : vector<2x32xf32>
    %cst_107 = arith.constant 1.000000e+00 : f32
    %282 = vector.broadcast %cst_107 : f32 to vector<2x32xf32>
    %283 = arith.addf %282, %281 : vector<2x32xf32>
    %284 = arith.divf %282, %283 : vector<2x32xf32>
    %285 = vector.broadcast %25 : vector<1x32xf32> to vector<2x32xf32>
    %286 = arith.mulf %285, %259 : vector<2x32xf32>
    %287 = arith.addf %272, %286 : vector<2x32xf32>
    %288 = vector.broadcast %27 : vector<1x32xf32> to vector<2x32xf32>
    %289 = arith.addf %287, %288 : vector<2x32xf32>
    %290 = arith.negf %289 : vector<2x32xf32>
    %291 = math.exp %290 : vector<2x32xf32>
    %cst_108 = arith.constant 1.000000e+00 : f32
    %292 = vector.broadcast %cst_108 : f32 to vector<2x32xf32>
    %293 = arith.addf %292, %291 : vector<2x32xf32>
    %294 = arith.divf %292, %293 : vector<2x32xf32>
    %295 = arith.mulf %284, %259 : vector<2x32xf32>
    %cst_109 = arith.constant 1.000000e+00 : f32
    %296 = vector.broadcast %cst_109 : f32 to vector<2x32xf32>
    %297 = arith.subf %296, %284 : vector<2x32xf32>
    %298 = arith.mulf %297, %270 : vector<2x32xf32>
    %299 = arith.addf %295, %298 : vector<2x32xf32>
    %300 = arith.mulf %294, %299 : vector<2x32xf32>
    %cst_110 = arith.constant 1.000000e+00 : f32
    %301 = vector.broadcast %cst_110 : f32 to vector<2x32xf32>
    %302 = arith.subf %301, %294 : vector<2x32xf32>
    %303 = arith.mulf %302, %274 : vector<2x32xf32>
    %304 = arith.addf %300, %303 : vector<2x32xf32>
    %c0_111 = arith.constant 0 : index
    %c6_112 = arith.constant 6 : index
    %c0_113 = arith.constant 0 : index
    %305 = vector.load %arg18[%c0_111, %c6_112, %c0_113] : memref<2x8x32xf32, #tpu.memory_space<vmem>>, vector<2x1x32xf32>
    %306 = vector.shape_cast %305 : vector<2x1x32xf32> to vector<2x32xf32>
    %307 = vector.shape_cast %304 : vector<2x32xf32> to vector<2x1x32xf32>
    tpu.vector_store %arg18[%c0_111, %c6_112, %c0_113], %307 {strides = array<i32>} : memref<2x8x32xf32, #tpu.memory_space<vmem>>, vector<2x1x32xf32>,
    %c0_114 = arith.constant 0 : index
    %c7 = arith.constant 7 : index
    %c0_115 = arith.constant 0 : index
    %308 = vector.load %arg16[%c0_114, %c7, %c0_115] : memref<2x8x96xf32, #tpu.memory_space<vmem>>, vector<2x1x96xf32>
    %309 = vector.shape_cast %308 : vector<2x1x96xf32> to vector<2x96xf32>
    %310 = vector.extract_strided_slice %309 {offsets = [0, 0], sizes = [2, 32], strides = [1, 1]} : vector<2x96xf32> to vector<2x32xf32>
    %311 = vector.extract_strided_slice %309 {offsets = [0, 32], sizes = [2, 32], strides = [1, 1]} : vector<2x96xf32> to vector<2x32xf32>
    %312 = vector.extract_strided_slice %309 {offsets = [0, 64], sizes = [2, 32], strides = [1, 1]} : vector<2x96xf32> to vector<2x32xf32>
    %c0_116 = arith.constant 0 : index
    %c7_117 = arith.constant 7 : index
    %c0_118 = arith.constant 0 : index
    %313 = vector.load %arg17[%c0_116, %c7_117, %c0_118] : memref<2x8x32xf32, #tpu.memory_space<vmem>>, vector<2x1x32xf32>
    %314 = vector.shape_cast %313 : vector<2x1x32xf32> to vector<2x32xf32>
    %315 = vector.broadcast %24 : vector<1x32xf32> to vector<2x32xf32>
    %316 = arith.mulf %315, %299 : vector<2x32xf32>
    %317 = arith.addf %311, %316 : vector<2x32xf32>
    %318 = vector.broadcast %26 : vector<1x32xf32> to vector<2x32xf32>
    %319 = arith.addf %317, %318 : vector<2x32xf32>
    %320 = arith.negf %319 : vector<2x32xf32>
    %321 = math.exp %320 : vector<2x32xf32>
    %cst_119 = arith.constant 1.000000e+00 : f32
    %322 = vector.broadcast %cst_119 : f32 to vector<2x32xf32>
    %323 = arith.addf %322, %321 : vector<2x32xf32>
    %324 = arith.divf %322, %323 : vector<2x32xf32>
    %325 = vector.broadcast %25 : vector<1x32xf32> to vector<2x32xf32>
    %326 = arith.mulf %325, %299 : vector<2x32xf32>
    %327 = arith.addf %312, %326 : vector<2x32xf32>
    %328 = vector.broadcast %27 : vector<1x32xf32> to vector<2x32xf32>
    %329 = arith.addf %327, %328 : vector<2x32xf32>
    %330 = arith.negf %329 : vector<2x32xf32>
    %331 = math.exp %330 : vector<2x32xf32>
    %cst_120 = arith.constant 1.000000e+00 : f32
    %332 = vector.broadcast %cst_120 : f32 to vector<2x32xf32>
    %333 = arith.addf %332, %331 : vector<2x32xf32>
    %334 = arith.divf %332, %333 : vector<2x32xf32>
    %335 = arith.mulf %324, %299 : vector<2x32xf32>
    %cst_121 = arith.constant 1.000000e+00 : f32
    %336 = vector.broadcast %cst_121 : f32 to vector<2x32xf32>
    %337 = arith.subf %336, %324 : vector<2x32xf32>
    %338 = arith.mulf %337, %310 : vector<2x32xf32>
    %339 = arith.addf %335, %338 : vector<2x32xf32>
    %340 = arith.mulf %334, %339 : vector<2x32xf32>
    %cst_122 = arith.constant 1.000000e+00 : f32
    %341 = vector.broadcast %cst_122 : f32 to vector<2x32xf32>
    %342 = arith.subf %341, %334 : vector<2x32xf32>
    %343 = arith.mulf %342, %314 : vector<2x32xf32>
    %344 = arith.addf %340, %343 : vector<2x32xf32>
    %c0_123 = arith.constant 0 : index
    %c7_124 = arith.constant 7 : index
    %c0_125 = arith.constant 0 : index
    %345 = vector.load %arg18[%c0_123, %c7_124, %c0_125] : memref<2x8x32xf32, #tpu.memory_space<vmem>>, vector<2x1x32xf32>
    %346 = vector.shape_cast %345 : vector<2x1x32xf32> to vector<2x32xf32>
    %347 = vector.shape_cast %344 : vector<2x32xf32> to vector<2x1x32xf32>
    tpu.vector_store %arg18[%c0_123, %c7_124, %c0_125], %347 {strides = array<i32>} : memref<2x8x32xf32, #tpu.memory_space<vmem>>, vector<2x1x32xf32>,
    %c0_126 = arith.constant 0 : index
    %c0_127 = arith.constant 0 : index
    %c0_128 = arith.constant 0 : index
    %348 = vector.load %arg18[%c0_126, %c0_127, %c0_128] : memref<2x8x32xf32, #tpu.memory_space<vmem>>, vector<2x8x32xf32>
    %349 = vector.shape_cast %348 : vector<2x8x32xf32> to vector<16x32xf32>
    %c1_129 = arith.constant 1 : index
    %c0_130 = arith.constant 0 : index
    %c0_131 = arith.constant 0 : index
    %350 = vector.load %arg5[%c1_129, %c0_130, %c0_131] : memref<2x32x96xf32, #tpu.memory_space<vmem>>, vector<1x32x96xf32>
    %351 = vector.shape_cast %350 : vector<1x32x96xf32> to vector<32x96xf32>
    %cst_132 = arith.constant dense<0.000000e+00> : vector<16x96xf32>
    %352 = tpu.matmul %349, %351, %cst_132 {dimension_numbers = #tpu.dot_dimension_numbers<[1], [0], [0], [1], [0, 0, 1, 1], [], []>} : vector<16x32xf32>, vector<32x96xf32>, vector<16x96xf32> -> vector<16x96xf32>
    %353 = vector.shape_cast %352 : vector<16x96xf32> to vector<2x8x96xf32>
    %c0_133 = arith.constant 0 : index
    %c0_134 = arith.constant 0 : index
    %c0_135 = arith.constant 0 : index
    %354 = vector.load %arg16[%c0_133, %c0_134, %c0_135] : memref<2x8x96xf32, #tpu.memory_space<vmem>>, vector<2x8x96xf32>
    tpu.vector_store %arg16[%c0_133, %c0_134, %c0_135], %353 {strides = array<i32>} : memref<2x8x96xf32, #tpu.memory_space<vmem>>, vector<2x8x96xf32>,
    %355 = vector.extract_strided_slice %13 {offsets = [1, 0], sizes = [1, 32], strides = [1, 1]} : vector<2x32xf32> to vector<1x32xf32>
    %356 = vector.extract_strided_slice %14 {offsets = [1, 0], sizes = [1, 32], strides = [1, 1]} : vector<2x32xf32> to vector<1x32xf32>
    %357 = vector.extract_strided_slice %15 {offsets = [1, 0], sizes = [1, 32], strides = [1, 1]} : vector<2x32xf32> to vector<1x32xf32>
    %358 = vector.extract_strided_slice %16 {offsets = [1, 0], sizes = [1, 32], strides = [1, 1]} : vector<2x32xf32> to vector<1x32xf32>
    %c0_136 = arith.constant 0 : index
    %c0_137 = arith.constant 0 : index
    %c0_138 = arith.constant 0 : index
    %359 = vector.load %arg16[%c0_136, %c0_137, %c0_138] : memref<2x8x96xf32, #tpu.memory_space<vmem>>, vector<2x1x96xf32>
    %360 = vector.shape_cast %359 : vector<2x1x96xf32> to vector<2x96xf32>
    %361 = vector.extract_strided_slice %360 {offsets = [0, 0], sizes = [2, 32], strides = [1, 1]} : vector<2x96xf32> to vector<2x32xf32>
    %362 = vector.extract_strided_slice %360 {offsets = [0, 32], sizes = [2, 32], strides = [1, 1]} : vector<2x96xf32> to vector<2x32xf32>
    %363 = vector.extract_strided_slice %360 {offsets = [0, 64], sizes = [2, 32], strides = [1, 1]} : vector<2x96xf32> to vector<2x32xf32>
    %c0_139 = arith.constant 0 : index
    %c0_140 = arith.constant 0 : index
    %c0_141 = arith.constant 0 : index
    %364 = vector.load %arg18[%c0_139, %c0_140, %c0_141] : memref<2x8x32xf32, #tpu.memory_space<vmem>>, vector<2x1x32xf32>
    %365 = vector.shape_cast %364 : vector<2x1x32xf32> to vector<2x32xf32>
    %366 = vector.broadcast %355 : vector<1x32xf32> to vector<2x32xf32>
    %367 = arith.mulf %366, %12 : vector<2x32xf32>
    %368 = arith.addf %362, %367 : vector<2x32xf32>
    %369 = vector.broadcast %357 : vector<1x32xf32> to vector<2x32xf32>
    %370 = arith.addf %368, %369 : vector<2x32xf32>
    %371 = arith.negf %370 : vector<2x32xf32>
    %372 = math.exp %371 : vector<2x32xf32>
    %cst_142 = arith.constant 1.000000e+00 : f32
    %373 = vector.broadcast %cst_142 : f32 to vector<2x32xf32>
    %374 = arith.addf %373, %372 : vector<2x32xf32>
    %375 = arith.divf %373, %374 : vector<2x32xf32>
    %376 = vector.broadcast %356 : vector<1x32xf32> to vector<2x32xf32>
    %377 = arith.mulf %376, %12 : vector<2x32xf32>
    %378 = arith.addf %363, %377 : vector<2x32xf32>
    %379 = vector.broadcast %358 : vector<1x32xf32> to vector<2x32xf32>
    %380 = arith.addf %378, %379 : vector<2x32xf32>
    %381 = arith.negf %380 : vector<2x32xf32>
    %382 = math.exp %381 : vector<2x32xf32>
    %cst_143 = arith.constant 1.000000e+00 : f32
    %383 = vector.broadcast %cst_143 : f32 to vector<2x32xf32>
    %384 = arith.addf %383, %382 : vector<2x32xf32>
    %385 = arith.divf %383, %384 : vector<2x32xf32>
    %386 = arith.mulf %375, %12 : vector<2x32xf32>
    %cst_144 = arith.constant 1.000000e+00 : f32
    %387 = vector.broadcast %cst_144 : f32 to vector<2x32xf32>
    %388 = arith.subf %387, %375 : vector<2x32xf32>
    %389 = arith.mulf %388, %361 : vector<2x32xf32>
    %390 = arith.addf %386, %389 : vector<2x32xf32>
    %391 = arith.mulf %385, %390 : vector<2x32xf32>
    %cst_145 = arith.constant 1.000000e+00 : f32
    %392 = vector.broadcast %cst_145 : f32 to vector<2x32xf32>
    %393 = arith.subf %392, %385 : vector<2x32xf32>
    %394 = arith.mulf %393, %365 : vector<2x32xf32>
    %395 = arith.addf %391, %394 : vector<2x32xf32>
    %c0_146 = arith.constant 0 : index
    %c0_147 = arith.constant 0 : index
    %c0_148 = arith.constant 0 : index
    %396 = vector.load %arg17[%c0_146, %c0_147, %c0_148] : memref<2x8x32xf32, #tpu.memory_space<vmem>>, vector<2x1x32xf32>
    %397 = vector.shape_cast %396 : vector<2x1x32xf32> to vector<2x32xf32>
    %398 = vector.shape_cast %395 : vector<2x32xf32> to vector<2x1x32xf32>
    tpu.vector_store %arg17[%c0_146, %c0_147, %c0_148], %398 {strides = array<i32>} : memref<2x8x32xf32, #tpu.memory_space<vmem>>, vector<2x1x32xf32>,
    %c0_149 = arith.constant 0 : index
    %c1_150 = arith.constant 1 : index
    %c0_151 = arith.constant 0 : index
    %399 = vector.load %arg16[%c0_149, %c1_150, %c0_151] : memref<2x8x96xf32, #tpu.memory_space<vmem>>, vector<2x1x96xf32>
    %400 = vector.shape_cast %399 : vector<2x1x96xf32> to vector<2x96xf32>
    %401 = vector.extract_strided_slice %400 {offsets = [0, 0], sizes = [2, 32], strides = [1, 1]} : vector<2x96xf32> to vector<2x32xf32>
    %402 = vector.extract_strided_slice %400 {offsets = [0, 32], sizes = [2, 32], strides = [1, 1]} : vector<2x96xf32> to vector<2x32xf32>
    %403 = vector.extract_strided_slice %400 {offsets = [0, 64], sizes = [2, 32], strides = [1, 1]} : vector<2x96xf32> to vector<2x32xf32>
    %c0_152 = arith.constant 0 : index
    %c1_153 = arith.constant 1 : index
    %c0_154 = arith.constant 0 : index
    %404 = vector.load %arg18[%c0_152, %c1_153, %c0_154] : memref<2x8x32xf32, #tpu.memory_space<vmem>>, vector<2x1x32xf32>
    %405 = vector.shape_cast %404 : vector<2x1x32xf32> to vector<2x32xf32>
    %406 = vector.broadcast %355 : vector<1x32xf32> to vector<2x32xf32>
    %407 = arith.mulf %406, %390 : vector<2x32xf32>
    %408 = arith.addf %402, %407 : vector<2x32xf32>
    %409 = vector.broadcast %357 : vector<1x32xf32> to vector<2x32xf32>
    %410 = arith.addf %408, %409 : vector<2x32xf32>
    %411 = arith.negf %410 : vector<2x32xf32>
    %412 = math.exp %411 : vector<2x32xf32>
    %cst_155 = arith.constant 1.000000e+00 : f32
    %413 = vector.broadcast %cst_155 : f32 to vector<2x32xf32>
    %414 = arith.addf %413, %412 : vector<2x32xf32>
    %415 = arith.divf %413, %414 : vector<2x32xf32>
    %416 = vector.broadcast %356 : vector<1x32xf32> to vector<2x32xf32>
    %417 = arith.mulf %416, %390 : vector<2x32xf32>
    %418 = arith.addf %403, %417 : vector<2x32xf32>
    %419 = vector.broadcast %358 : vector<1x32xf32> to vector<2x32xf32>
    %420 = arith.addf %418, %419 : vector<2x32xf32>
    %421 = arith.negf %420 : vector<2x32xf32>
    %422 = math.exp %421 : vector<2x32xf32>
    %cst_156 = arith.constant 1.000000e+00 : f32
    %423 = vector.broadcast %cst_156 : f32 to vector<2x32xf32>
    %424 = arith.addf %423, %422 : vector<2x32xf32>
    %425 = arith.divf %423, %424 : vector<2x32xf32>
    %426 = arith.mulf %415, %390 : vector<2x32xf32>
    %cst_157 = arith.constant 1.000000e+00 : f32
    %427 = vector.broadcast %cst_157 : f32 to vector<2x32xf32>
    %428 = arith.subf %427, %415 : vector<2x32xf32>
    %429 = arith.mulf %428, %401 : vector<2x32xf32>
    %430 = arith.addf %426, %429 : vector<2x32xf32>
    %431 = arith.mulf %425, %430 : vector<2x32xf32>
    %cst_158 = arith.constant 1.000000e+00 : f32
    %432 = vector.broadcast %cst_158 : f32 to vector<2x32xf32>
    %433 = arith.subf %432, %425 : vector<2x32xf32>
    %434 = arith.mulf %433, %405 : vector<2x32xf32>
    %435 = arith.addf %431, %434 : vector<2x32xf32>
    %c0_159 = arith.constant 0 : index
    %c1_160 = arith.constant 1 : index
    %c0_161 = arith.constant 0 : index
    %436 = vector.load %arg17[%c0_159, %c1_160, %c0_161] : memref<2x8x32xf32, #tpu.memory_space<vmem>>, vector<2x1x32xf32>
    %437 = vector.shape_cast %436 : vector<2x1x32xf32> to vector<2x32xf32>
    %438 = vector.shape_cast %435 : vector<2x32xf32> to vector<2x1x32xf32>
    tpu.vector_store %arg17[%c0_159, %c1_160, %c0_161], %438 {strides = array<i32>} : memref<2x8x32xf32, #tpu.memory_space<vmem>>, vector<2x1x32xf32>,
    %c0_162 = arith.constant 0 : index
    %c2_163 = arith.constant 2 : index
    %c0_164 = arith.constant 0 : index
    %439 = vector.load %arg16[%c0_162, %c2_163, %c0_164] : memref<2x8x96xf32, #tpu.memory_space<vmem>>, vector<2x1x96xf32>
    %440 = vector.shape_cast %439 : vector<2x1x96xf32> to vector<2x96xf32>
    %441 = vector.extract_strided_slice %440 {offsets = [0, 0], sizes = [2, 32], strides = [1, 1]} : vector<2x96xf32> to vector<2x32xf32>
    %442 = vector.extract_strided_slice %440 {offsets = [0, 32], sizes = [2, 32], strides = [1, 1]} : vector<2x96xf32> to vector<2x32xf32>
    %443 = vector.extract_strided_slice %440 {offsets = [0, 64], sizes = [2, 32], strides = [1, 1]} : vector<2x96xf32> to vector<2x32xf32>
    %c0_165 = arith.constant 0 : index
    %c2_166 = arith.constant 2 : index
    %c0_167 = arith.constant 0 : index
    %444 = vector.load %arg18[%c0_165, %c2_166, %c0_167] : memref<2x8x32xf32, #tpu.memory_space<vmem>>, vector<2x1x32xf32>
    %445 = vector.shape_cast %444 : vector<2x1x32xf32> to vector<2x32xf32>
    %446 = vector.broadcast %355 : vector<1x32xf32> to vector<2x32xf32>
    %447 = arith.mulf %446, %430 : vector<2x32xf32>
    %448 = arith.addf %442, %447 : vector<2x32xf32>
    %449 = vector.broadcast %357 : vector<1x32xf32> to vector<2x32xf32>
    %450 = arith.addf %448, %449 : vector<2x32xf32>
    %451 = arith.negf %450 : vector<2x32xf32>
    %452 = math.exp %451 : vector<2x32xf32>
    %cst_168 = arith.constant 1.000000e+00 : f32
    %453 = vector.broadcast %cst_168 : f32 to vector<2x32xf32>
    %454 = arith.addf %453, %452 : vector<2x32xf32>
    %455 = arith.divf %453, %454 : vector<2x32xf32>
    %456 = vector.broadcast %356 : vector<1x32xf32> to vector<2x32xf32>
    %457 = arith.mulf %456, %430 : vector<2x32xf32>
    %458 = arith.addf %443, %457 : vector<2x32xf32>
    %459 = vector.broadcast %358 : vector<1x32xf32> to vector<2x32xf32>
    %460 = arith.addf %458, %459 : vector<2x32xf32>
    %461 = arith.negf %460 : vector<2x32xf32>
    %462 = math.exp %461 : vector<2x32xf32>
    %cst_169 = arith.constant 1.000000e+00 : f32
    %463 = vector.broadcast %cst_169 : f32 to vector<2x32xf32>
    %464 = arith.addf %463, %462 : vector<2x32xf32>
    %465 = arith.divf %463, %464 : vector<2x32xf32>
    %466 = arith.mulf %455, %430 : vector<2x32xf32>
    %cst_170 = arith.constant 1.000000e+00 : f32
    %467 = vector.broadcast %cst_170 : f32 to vector<2x32xf32>
    %468 = arith.subf %467, %455 : vector<2x32xf32>
    %469 = arith.mulf %468, %441 : vector<2x32xf32>
    %470 = arith.addf %466, %469 : vector<2x32xf32>
    %471 = arith.mulf %465, %470 : vector<2x32xf32>
    %cst_171 = arith.constant 1.000000e+00 : f32
    %472 = vector.broadcast %cst_171 : f32 to vector<2x32xf32>
    %473 = arith.subf %472, %465 : vector<2x32xf32>
    %474 = arith.mulf %473, %445 : vector<2x32xf32>
    %475 = arith.addf %471, %474 : vector<2x32xf32>
    %c0_172 = arith.constant 0 : index
    %c2_173 = arith.constant 2 : index
    %c0_174 = arith.constant 0 : index
    %476 = vector.load %arg17[%c0_172, %c2_173, %c0_174] : memref<2x8x32xf32, #tpu.memory_space<vmem>>, vector<2x1x32xf32>
    %477 = vector.shape_cast %476 : vector<2x1x32xf32> to vector<2x32xf32>
    %478 = vector.shape_cast %475 : vector<2x32xf32> to vector<2x1x32xf32>
    tpu.vector_store %arg17[%c0_172, %c2_173, %c0_174], %478 {strides = array<i32>} : memref<2x8x32xf32, #tpu.memory_space<vmem>>, vector<2x1x32xf32>,
    %c0_175 = arith.constant 0 : index
    %c3_176 = arith.constant 3 : index
    %c0_177 = arith.constant 0 : index
    %479 = vector.load %arg16[%c0_175, %c3_176, %c0_177] : memref<2x8x96xf32, #tpu.memory_space<vmem>>, vector<2x1x96xf32>
    %480 = vector.shape_cast %479 : vector<2x1x96xf32> to vector<2x96xf32>
    %481 = vector.extract_strided_slice %480 {offsets = [0, 0], sizes = [2, 32], strides = [1, 1]} : vector<2x96xf32> to vector<2x32xf32>
    %482 = vector.extract_strided_slice %480 {offsets = [0, 32], sizes = [2, 32], strides = [1, 1]} : vector<2x96xf32> to vector<2x32xf32>
    %483 = vector.extract_strided_slice %480 {offsets = [0, 64], sizes = [2, 32], strides = [1, 1]} : vector<2x96xf32> to vector<2x32xf32>
    %c0_178 = arith.constant 0 : index
    %c3_179 = arith.constant 3 : index
    %c0_180 = arith.constant 0 : index
    %484 = vector.load %arg18[%c0_178, %c3_179, %c0_180] : memref<2x8x32xf32, #tpu.memory_space<vmem>>, vector<2x1x32xf32>
    %485 = vector.shape_cast %484 : vector<2x1x32xf32> to vector<2x32xf32>
    %486 = vector.broadcast %355 : vector<1x32xf32> to vector<2x32xf32>
    %487 = arith.mulf %486, %470 : vector<2x32xf32>
    %488 = arith.addf %482, %487 : vector<2x32xf32>
    %489 = vector.broadcast %357 : vector<1x32xf32> to vector<2x32xf32>
    %490 = arith.addf %488, %489 : vector<2x32xf32>
    %491 = arith.negf %490 : vector<2x32xf32>
    %492 = math.exp %491 : vector<2x32xf32>
    %cst_181 = arith.constant 1.000000e+00 : f32
    %493 = vector.broadcast %cst_181 : f32 to vector<2x32xf32>
    %494 = arith.addf %493, %492 : vector<2x32xf32>
    %495 = arith.divf %493, %494 : vector<2x32xf32>
    %496 = vector.broadcast %356 : vector<1x32xf32> to vector<2x32xf32>
    %497 = arith.mulf %496, %470 : vector<2x32xf32>
    %498 = arith.addf %483, %497 : vector<2x32xf32>
    %499 = vector.broadcast %358 : vector<1x32xf32> to vector<2x32xf32>
    %500 = arith.addf %498, %499 : vector<2x32xf32>
    %501 = arith.negf %500 : vector<2x32xf32>
    %502 = math.exp %501 : vector<2x32xf32>
    %cst_182 = arith.constant 1.000000e+00 : f32
    %503 = vector.broadcast %cst_182 : f32 to vector<2x32xf32>
    %504 = arith.addf %503, %502 : vector<2x32xf32>
    %505 = arith.divf %503, %504 : vector<2x32xf32>
    %506 = arith.mulf %495, %470 : vector<2x32xf32>
    %cst_183 = arith.constant 1.000000e+00 : f32
    %507 = vector.broadcast %cst_183 : f32 to vector<2x32xf32>
    %508 = arith.subf %507, %495 : vector<2x32xf32>
    %509 = arith.mulf %508, %481 : vector<2x32xf32>
    %510 = arith.addf %506, %509 : vector<2x32xf32>
    %511 = arith.mulf %505, %510 : vector<2x32xf32>
    %cst_184 = arith.constant 1.000000e+00 : f32
    %512 = vector.broadcast %cst_184 : f32 to vector<2x32xf32>
    %513 = arith.subf %512, %505 : vector<2x32xf32>
    %514 = arith.mulf %513, %485 : vector<2x32xf32>
    %515 = arith.addf %511, %514 : vector<2x32xf32>
    %c0_185 = arith.constant 0 : index
    %c3_186 = arith.constant 3 : index
    %c0_187 = arith.constant 0 : index
    %516 = vector.load %arg17[%c0_185, %c3_186, %c0_187] : memref<2x8x32xf32, #tpu.memory_space<vmem>>, vector<2x1x32xf32>
    %517 = vector.shape_cast %516 : vector<2x1x32xf32> to vector<2x32xf32>
    %518 = vector.shape_cast %515 : vector<2x32xf32> to vector<2x1x32xf32>
    tpu.vector_store %arg17[%c0_185, %c3_186, %c0_187], %518 {strides = array<i32>} : memref<2x8x32xf32, #tpu.memory_space<vmem>>, vector<2x1x32xf32>,
    %c0_188 = arith.constant 0 : index
    %c4_189 = arith.constant 4 : index
    %c0_190 = arith.constant 0 : index
    %519 = vector.load %arg16[%c0_188, %c4_189, %c0_190] : memref<2x8x96xf32, #tpu.memory_space<vmem>>, vector<2x1x96xf32>
    %520 = vector.shape_cast %519 : vector<2x1x96xf32> to vector<2x96xf32>
    %521 = vector.extract_strided_slice %520 {offsets = [0, 0], sizes = [2, 32], strides = [1, 1]} : vector<2x96xf32> to vector<2x32xf32>
    %522 = vector.extract_strided_slice %520 {offsets = [0, 32], sizes = [2, 32], strides = [1, 1]} : vector<2x96xf32> to vector<2x32xf32>
    %523 = vector.extract_strided_slice %520 {offsets = [0, 64], sizes = [2, 32], strides = [1, 1]} : vector<2x96xf32> to vector<2x32xf32>
    %c0_191 = arith.constant 0 : index
    %c4_192 = arith.constant 4 : index
    %c0_193 = arith.constant 0 : index
    %524 = vector.load %arg18[%c0_191, %c4_192, %c0_193] : memref<2x8x32xf32, #tpu.memory_space<vmem>>, vector<2x1x32xf32>
    %525 = vector.shape_cast %524 : vector<2x1x32xf32> to vector<2x32xf32>
    %526 = vector.broadcast %355 : vector<1x32xf32> to vector<2x32xf32>
    %527 = arith.mulf %526, %510 : vector<2x32xf32>
    %528 = arith.addf %522, %527 : vector<2x32xf32>
    %529 = vector.broadcast %357 : vector<1x32xf32> to vector<2x32xf32>
    %530 = arith.addf %528, %529 : vector<2x32xf32>
    %531 = arith.negf %530 : vector<2x32xf32>
    %532 = math.exp %531 : vector<2x32xf32>
    %cst_194 = arith.constant 1.000000e+00 : f32
    %533 = vector.broadcast %cst_194 : f32 to vector<2x32xf32>
    %534 = arith.addf %533, %532 : vector<2x32xf32>
    %535 = arith.divf %533, %534 : vector<2x32xf32>
    %536 = vector.broadcast %356 : vector<1x32xf32> to vector<2x32xf32>
    %537 = arith.mulf %536, %510 : vector<2x32xf32>
    %538 = arith.addf %523, %537 : vector<2x32xf32>
    %539 = vector.broadcast %358 : vector<1x32xf32> to vector<2x32xf32>
    %540 = arith.addf %538, %539 : vector<2x32xf32>
    %541 = arith.negf %540 : vector<2x32xf32>
    %542 = math.exp %541 : vector<2x32xf32>
    %cst_195 = arith.constant 1.000000e+00 : f32
    %543 = vector.broadcast %cst_195 : f32 to vector<2x32xf32>
    %544 = arith.addf %543, %542 : vector<2x32xf32>
    %545 = arith.divf %543, %544 : vector<2x32xf32>
    %546 = arith.mulf %535, %510 : vector<2x32xf32>
    %cst_196 = arith.constant 1.000000e+00 : f32
    %547 = vector.broadcast %cst_196 : f32 to vector<2x32xf32>
    %548 = arith.subf %547, %535 : vector<2x32xf32>
    %549 = arith.mulf %548, %521 : vector<2x32xf32>
    %550 = arith.addf %546, %549 : vector<2x32xf32>
    %551 = arith.mulf %545, %550 : vector<2x32xf32>
    %cst_197 = arith.constant 1.000000e+00 : f32
    %552 = vector.broadcast %cst_197 : f32 to vector<2x32xf32>
    %553 = arith.subf %552, %545 : vector<2x32xf32>
    %554 = arith.mulf %553, %525 : vector<2x32xf32>
    %555 = arith.addf %551, %554 : vector<2x32xf32>
    %c0_198 = arith.constant 0 : index
    %c4_199 = arith.constant 4 : index
    %c0_200 = arith.constant 0 : index
    %556 = vector.load %arg17[%c0_198, %c4_199, %c0_200] : memref<2x8x32xf32, #tpu.memory_space<vmem>>, vector<2x1x32xf32>
    %557 = vector.shape_cast %556 : vector<2x1x32xf32> to vector<2x32xf32>
    %558 = vector.shape_cast %555 : vector<2x32xf32> to vector<2x1x32xf32>
    tpu.vector_store %arg17[%c0_198, %c4_199, %c0_200], %558 {strides = array<i32>} : memref<2x8x32xf32, #tpu.memory_space<vmem>>, vector<2x1x32xf32>,
    %c0_201 = arith.constant 0 : index
    %c5_202 = arith.constant 5 : index
    %c0_203 = arith.constant 0 : index
    %559 = vector.load %arg16[%c0_201, %c5_202, %c0_203] : memref<2x8x96xf32, #tpu.memory_space<vmem>>, vector<2x1x96xf32>
    %560 = vector.shape_cast %559 : vector<2x1x96xf32> to vector<2x96xf32>
    %561 = vector.extract_strided_slice %560 {offsets = [0, 0], sizes = [2, 32], strides = [1, 1]} : vector<2x96xf32> to vector<2x32xf32>
    %562 = vector.extract_strided_slice %560 {offsets = [0, 32], sizes = [2, 32], strides = [1, 1]} : vector<2x96xf32> to vector<2x32xf32>
    %563 = vector.extract_strided_slice %560 {offsets = [0, 64], sizes = [2, 32], strides = [1, 1]} : vector<2x96xf32> to vector<2x32xf32>
    %c0_204 = arith.constant 0 : index
    %c5_205 = arith.constant 5 : index
    %c0_206 = arith.constant 0 : index
    %564 = vector.load %arg18[%c0_204, %c5_205, %c0_206] : memref<2x8x32xf32, #tpu.memory_space<vmem>>, vector<2x1x32xf32>
    %565 = vector.shape_cast %564 : vector<2x1x32xf32> to vector<2x32xf32>
    %566 = vector.broadcast %355 : vector<1x32xf32> to vector<2x32xf32>
    %567 = arith.mulf %566, %550 : vector<2x32xf32>
    %568 = arith.addf %562, %567 : vector<2x32xf32>
    %569 = vector.broadcast %357 : vector<1x32xf32> to vector<2x32xf32>
    %570 = arith.addf %568, %569 : vector<2x32xf32>
    %571 = arith.negf %570 : vector<2x32xf32>
    %572 = math.exp %571 : vector<2x32xf32>
    %cst_207 = arith.constant 1.000000e+00 : f32
    %573 = vector.broadcast %cst_207 : f32 to vector<2x32xf32>
    %574 = arith.addf %573, %572 : vector<2x32xf32>
    %575 = arith.divf %573, %574 : vector<2x32xf32>
    %576 = vector.broadcast %356 : vector<1x32xf32> to vector<2x32xf32>
    %577 = arith.mulf %576, %550 : vector<2x32xf32>
    %578 = arith.addf %563, %577 : vector<2x32xf32>
    %579 = vector.broadcast %358 : vector<1x32xf32> to vector<2x32xf32>
    %580 = arith.addf %578, %579 : vector<2x32xf32>
    %581 = arith.negf %580 : vector<2x32xf32>
    %582 = math.exp %581 : vector<2x32xf32>
    %cst_208 = arith.constant 1.000000e+00 : f32
    %583 = vector.broadcast %cst_208 : f32 to vector<2x32xf32>
    %584 = arith.addf %583, %582 : vector<2x32xf32>
    %585 = arith.divf %583, %584 : vector<2x32xf32>
    %586 = arith.mulf %575, %550 : vector<2x32xf32>
    %cst_209 = arith.constant 1.000000e+00 : f32
    %587 = vector.broadcast %cst_209 : f32 to vector<2x32xf32>
    %588 = arith.subf %587, %575 : vector<2x32xf32>
    %589 = arith.mulf %588, %561 : vector<2x32xf32>
    %590 = arith.addf %586, %589 : vector<2x32xf32>
    %591 = arith.mulf %585, %590 : vector<2x32xf32>
    %cst_210 = arith.constant 1.000000e+00 : f32
    %592 = vector.broadcast %cst_210 : f32 to vector<2x32xf32>
    %593 = arith.subf %592, %585 : vector<2x32xf32>
    %594 = arith.mulf %593, %565 : vector<2x32xf32>
    %595 = arith.addf %591, %594 : vector<2x32xf32>
    %c0_211 = arith.constant 0 : index
    %c5_212 = arith.constant 5 : index
    %c0_213 = arith.constant 0 : index
    %596 = vector.load %arg17[%c0_211, %c5_212, %c0_213] : memref<2x8x32xf32, #tpu.memory_space<vmem>>, vector<2x1x32xf32>
    %597 = vector.shape_cast %596 : vector<2x1x32xf32> to vector<2x32xf32>
    %598 = vector.shape_cast %595 : vector<2x32xf32> to vector<2x1x32xf32>
    tpu.vector_store %arg17[%c0_211, %c5_212, %c0_213], %598 {strides = array<i32>} : memref<2x8x32xf32, #tpu.memory_space<vmem>>, vector<2x1x32xf32>,
    %c0_214 = arith.constant 0 : index
    %c6_215 = arith.constant 6 : index
    %c0_216 = arith.constant 0 : index
    %599 = vector.load %arg16[%c0_214, %c6_215, %c0_216] : memref<2x8x96xf32, #tpu.memory_space<vmem>>, vector<2x1x96xf32>
    %600 = vector.shape_cast %599 : vector<2x1x96xf32> to vector<2x96xf32>
    %601 = vector.extract_strided_slice %600 {offsets = [0, 0], sizes = [2, 32], strides = [1, 1]} : vector<2x96xf32> to vector<2x32xf32>
    %602 = vector.extract_strided_slice %600 {offsets = [0, 32], sizes = [2, 32], strides = [1, 1]} : vector<2x96xf32> to vector<2x32xf32>
    %603 = vector.extract_strided_slice %600 {offsets = [0, 64], sizes = [2, 32], strides = [1, 1]} : vector<2x96xf32> to vector<2x32xf32>
    %c0_217 = arith.constant 0 : index
    %c6_218 = arith.constant 6 : index
    %c0_219 = arith.constant 0 : index
    %604 = vector.load %arg18[%c0_217, %c6_218, %c0_219] : memref<2x8x32xf32, #tpu.memory_space<vmem>>, vector<2x1x32xf32>
    %605 = vector.shape_cast %604 : vector<2x1x32xf32> to vector<2x32xf32>
    %606 = vector.broadcast %355 : vector<1x32xf32> to vector<2x32xf32>
    %607 = arith.mulf %606, %590 : vector<2x32xf32>
    %608 = arith.addf %602, %607 : vector<2x32xf32>
    %609 = vector.broadcast %357 : vector<1x32xf32> to vector<2x32xf32>
    %610 = arith.addf %608, %609 : vector<2x32xf32>
    %611 = arith.negf %610 : vector<2x32xf32>
    %612 = math.exp %611 : vector<2x32xf32>
    %cst_220 = arith.constant 1.000000e+00 : f32
    %613 = vector.broadcast %cst_220 : f32 to vector<2x32xf32>
    %614 = arith.addf %613, %612 : vector<2x32xf32>
    %615 = arith.divf %613, %614 : vector<2x32xf32>
    %616 = vector.broadcast %356 : vector<1x32xf32> to vector<2x32xf32>
    %617 = arith.mulf %616, %590 : vector<2x32xf32>
    %618 = arith.addf %603, %617 : vector<2x32xf32>
    %619 = vector.broadcast %358 : vector<1x32xf32> to vector<2x32xf32>
    %620 = arith.addf %618, %619 : vector<2x32xf32>
    %621 = arith.negf %620 : vector<2x32xf32>
    %622 = math.exp %621 : vector<2x32xf32>
    %cst_221 = arith.constant 1.000000e+00 : f32
    %623 = vector.broadcast %cst_221 : f32 to vector<2x32xf32>
    %624 = arith.addf %623, %622 : vector<2x32xf32>
    %625 = arith.divf %623, %624 : vector<2x32xf32>
    %626 = arith.mulf %615, %590 : vector<2x32xf32>
    %cst_222 = arith.constant 1.000000e+00 : f32
    %627 = vector.broadcast %cst_222 : f32 to vector<2x32xf32>
    %628 = arith.subf %627, %615 : vector<2x32xf32>
    %629 = arith.mulf %628, %601 : vector<2x32xf32>
    %630 = arith.addf %626, %629 : vector<2x32xf32>
    %631 = arith.mulf %625, %630 : vector<2x32xf32>
    %cst_223 = arith.constant 1.000000e+00 : f32
    %632 = vector.broadcast %cst_223 : f32 to vector<2x32xf32>
    %633 = arith.subf %632, %625 : vector<2x32xf32>
    %634 = arith.mulf %633, %605 : vector<2x32xf32>
    %635 = arith.addf %631, %634 : vector<2x32xf32>
    %c0_224 = arith.constant 0 : index
    %c6_225 = arith.constant 6 : index
    %c0_226 = arith.constant 0 : index
    %636 = vector.load %arg17[%c0_224, %c6_225, %c0_226] : memref<2x8x32xf32, #tpu.memory_space<vmem>>, vector<2x1x32xf32>
    %637 = vector.shape_cast %636 : vector<2x1x32xf32> to vector<2x32xf32>
    %638 = vector.shape_cast %635 : vector<2x32xf32> to vector<2x1x32xf32>
    tpu.vector_store %arg17[%c0_224, %c6_225, %c0_226], %638 {strides = array<i32>} : memref<2x8x32xf32, #tpu.memory_space<vmem>>, vector<2x1x32xf32>,
    %c0_227 = arith.constant 0 : index
    %c7_228 = arith.constant 7 : index
    %c0_229 = arith.constant 0 : index
    %639 = vector.load %arg16[%c0_227, %c7_228, %c0_229] : memref<2x8x96xf32, #tpu.memory_space<vmem>>, vector<2x1x96xf32>
    %640 = vector.shape_cast %639 : vector<2x1x96xf32> to vector<2x96xf32>
    %641 = vector.extract_strided_slice %640 {offsets = [0, 0], sizes = [2, 32], strides = [1, 1]} : vector<2x96xf32> to vector<2x32xf32>
    %642 = vector.extract_strided_slice %640 {offsets = [0, 32], sizes = [2, 32], strides = [1, 1]} : vector<2x96xf32> to vector<2x32xf32>
    %643 = vector.extract_strided_slice %640 {offsets = [0, 64], sizes = [2, 32], strides = [1, 1]} : vector<2x96xf32> to vector<2x32xf32>
    %c0_230 = arith.constant 0 : index
    %c7_231 = arith.constant 7 : index
    %c0_232 = arith.constant 0 : index
    %644 = vector.load %arg18[%c0_230, %c7_231, %c0_232] : memref<2x8x32xf32, #tpu.memory_space<vmem>>, vector<2x1x32xf32>
    %645 = vector.shape_cast %644 : vector<2x1x32xf32> to vector<2x32xf32>
    %646 = vector.broadcast %355 : vector<1x32xf32> to vector<2x32xf32>
    %647 = arith.mulf %646, %630 : vector<2x32xf32>
    %648 = arith.addf %642, %647 : vector<2x32xf32>
    %649 = vector.broadcast %357 : vector<1x32xf32> to vector<2x32xf32>
    %650 = arith.addf %648, %649 : vector<2x32xf32>
    %651 = arith.negf %650 : vector<2x32xf32>
    %652 = math.exp %651 : vector<2x32xf32>
    %cst_233 = arith.constant 1.000000e+00 : f32
    %653 = vector.broadcast %cst_233 : f32 to vector<2x32xf32>
    %654 = arith.addf %653, %652 : vector<2x32xf32>
    %655 = arith.divf %653, %654 : vector<2x32xf32>
    %656 = vector.broadcast %356 : vector<1x32xf32> to vector<2x32xf32>
    %657 = arith.mulf %656, %630 : vector<2x32xf32>
    %658 = arith.addf %643, %657 : vector<2x32xf32>
    %659 = vector.broadcast %358 : vector<1x32xf32> to vector<2x32xf32>
    %660 = arith.addf %658, %659 : vector<2x32xf32>
    %661 = arith.negf %660 : vector<2x32xf32>
    %662 = math.exp %661 : vector<2x32xf32>
    %cst_234 = arith.constant 1.000000e+00 : f32
    %663 = vector.broadcast %cst_234 : f32 to vector<2x32xf32>
    %664 = arith.addf %663, %662 : vector<2x32xf32>
    %665 = arith.divf %663, %664 : vector<2x32xf32>
    %666 = arith.mulf %655, %630 : vector<2x32xf32>
    %cst_235 = arith.constant 1.000000e+00 : f32
    %667 = vector.broadcast %cst_235 : f32 to vector<2x32xf32>
    %668 = arith.subf %667, %655 : vector<2x32xf32>
    %669 = arith.mulf %668, %641 : vector<2x32xf32>
    %670 = arith.addf %666, %669 : vector<2x32xf32>
    %671 = arith.mulf %665, %670 : vector<2x32xf32>
    %cst_236 = arith.constant 1.000000e+00 : f32
    %672 = vector.broadcast %cst_236 : f32 to vector<2x32xf32>
    %673 = arith.subf %672, %665 : vector<2x32xf32>
    %674 = arith.mulf %673, %645 : vector<2x32xf32>
    %675 = arith.addf %671, %674 : vector<2x32xf32>
    %c0_237 = arith.constant 0 : index
    %c7_238 = arith.constant 7 : index
    %c0_239 = arith.constant 0 : index
    %676 = vector.load %arg17[%c0_237, %c7_238, %c0_239] : memref<2x8x32xf32, #tpu.memory_space<vmem>>, vector<2x1x32xf32>
    %677 = vector.shape_cast %676 : vector<2x1x32xf32> to vector<2x32xf32>
    %678 = vector.shape_cast %675 : vector<2x32xf32> to vector<2x1x32xf32>
    tpu.vector_store %arg17[%c0_237, %c7_238, %c0_239], %678 {strides = array<i32>} : memref<2x8x32xf32, #tpu.memory_space<vmem>>, vector<2x1x32xf32>,
    %c0_240 = arith.constant 0 : index
    %c0_241 = arith.constant 0 : index
    %c0_242 = arith.constant 0 : index
    %679 = vector.load %arg17[%c0_240, %c0_241, %c0_242] : memref<2x8x32xf32, #tpu.memory_space<vmem>>, vector<2x8x32xf32>
    %680 = vector.shape_cast %679 : vector<2x8x32xf32> to vector<16x32xf32>
    %c0_243 = arith.constant 0 : index
    %c0_244 = arith.constant 0 : index
    %681 = vector.load %arg10[%c0_243, %c0_244] : memref<32x32xf32, #tpu.memory_space<vmem>>, vector<32x32xf32>
    %cst_245 = arith.constant dense<0.000000e+00> : vector<16x32xf32>
    %682 = tpu.matmul %680, %681, %cst_245 {dimension_numbers = #tpu.dot_dimension_numbers<[1], [0], [0], [1], [0, 0, 1, 1], [], []>} : vector<16x32xf32>, vector<32x32xf32>, vector<16x32xf32> -> vector<16x32xf32>
    %c0_246 = arith.constant 0 : index
    %c0_247 = arith.constant 0 : index
    %683 = vector.load %arg11[%c0_246, %c0_247] : memref<1x32xf32, #tpu.memory_space<vmem>>, vector<1x32xf32>
    %684 = vector.broadcast %683 : vector<1x32xf32> to vector<16x32xf32>
    %685 = arith.addf %682, %684 : vector<16x32xf32>
    %cst_248 = arith.constant 0.000000e+00 : f32
    %686 = vector.broadcast %cst_248 : f32 to vector<16x32xf32>
    %687 = arith.maximumf %685, %686 : vector<16x32xf32>
    %c0_249 = arith.constant 0 : index
    %c0_250 = arith.constant 0 : index
    %688 = vector.load %arg12[%c0_249, %c0_250] : memref<32x16xf32, #tpu.memory_space<vmem>>, vector<32x16xf32>
    %cst_251 = arith.constant dense<0.000000e+00> : vector<16x16xf32>
    %689 = tpu.matmul %687, %688, %cst_251 {dimension_numbers = #tpu.dot_dimension_numbers<[1], [0], [0], [1], [0, 0, 1, 1], [], []>} : vector<16x32xf32>, vector<32x16xf32>, vector<16x16xf32> -> vector<16x16xf32>
    %c0_252 = arith.constant 0 : index
    %c0_253 = arith.constant 0 : index
    %690 = vector.load %arg13[%c0_252, %c0_253] : memref<1x16xf32, #tpu.memory_space<vmem>>, vector<1x16xf32>
    %691 = vector.broadcast %690 : vector<1x16xf32> to vector<16x16xf32>
    %692 = arith.addf %689, %691 : vector<16x16xf32>
    %c0_254 = arith.constant 0 : index
    %c0_255 = arith.constant 0 : index
    %693 = vector.load %arg14[%c0_254, %c0_255] : memref<16x16xf32, #tpu.memory_space<vmem>>, vector<16x16xf32>
    tpu.vector_store %arg14[%c0_254, %c0_255], %692 {strides = array<i32>} : memref<16x16xf32, #tpu.memory_space<vmem>>, vector<16x16xf32>,
    %c0_256 = arith.constant 0 : index
    %c0_257 = arith.constant 0 : index
    %694 = vector.load %arg1[%c0_256, %c0_257] : memref<16x16xf32, #tpu.memory_space<vmem>>, vector<16x16xf32>
    %695 = arith.subf %694, %692 : vector<16x16xf32>
    %696 = arith.mulf %695, %695 : vector<16x16xf32>
    %697 = vector.shape_cast %696 : vector<16x16xf32> to vector<1x16x16xf32>
    %cst_258 = arith.constant dense<0.000000e+00> : vector<1xf32>
    %698 = vector.multi_reduction <add>, %697, %cst_258 [1, 2] : vector<1x16x16xf32> to vector<1xf32>
    %699 = vector.shape_cast %698 : vector<1xf32> to vector<1x1x1xf32>
    %700 = vector.extract %699[0, 0, 0] : f32 from vector<1x1x1xf32>
    %cst_259 = arith.constant 2.560000e+02 : f32
    %701 = arith.divf %700, %cst_259 : f32
    %702 = vector.broadcast %701 : f32 to vector<1x1xf32>
    %c0_260 = arith.constant 0 : index
    %c0_261 = arith.constant 0 : index
    %703 = vector.load %arg15[%c0_260, %c0_261] : memref<1x1xf32, #tpu.memory_space<vmem>>, vector<1x1xf32>
    tpu.vector_store %arg15[%c0_260, %c0_261], %702 {strides = array<i32>} : memref<1x1xf32, #tpu.memory_space<vmem>>, vector<1x1xf32>,
    return
  }
}

</mosaic_0001>

<llo_original>
// kernel: _lambda_.1
$region0: #{_lambda_.1}
  #allocation0 [shape = 'u32[]', space=smem, size = 0x4, offset = 0x4, fixed_abs, tag = 'smem constant byte address 0x4 - core index']
  #allocation1 [shape = 'u32[144,128]{1,0:T(1,128)}', space=vmem, size = 0x12000, scoped, tag = 'internal scratch']
  #allocation2 [shape = 'f32[2,8,96]{2,1,0:T(8,128)}', space=vmem, size = 0x2000, scoped, tag = 'scratch operand']
  #allocation3 [shape = 'f32[2,8,32]{2,1,0:T(8,128)}', space=vmem, size = 0x2000, scoped, tag = 'scratch operand']
  #allocation4 [shape = 'f32[2,8,32]{2,1,0:T(8,128)}', space=vmem, size = 0x2000, scoped, tag = 'scratch operand']
  %s0 = inlined_call_operand.vmem [shape: f32[16,16], index: 0, kind: input, shape index: {}]
  %s1 = inlined_call_operand.vmem [shape: f32[16,16], index: 1, kind: input, shape index: {}]
  %s2 = inlined_call_operand.vmem [shape: f32[16,32], index: 2, kind: input, shape index: {}]
  %s3 = inlined_call_operand.vmem [shape: f32[1,32], index: 3, kind: input, shape index: {}]
  %s4 = inlined_call_operand.vmem [shape: f32[1,32], index: 4, kind: input, shape index: {}]
  %s5 = inlined_call_operand.vmem [shape: f32[2,32,96], index: 5, kind: input, shape index: {}]
  %s6 = inlined_call_operand.vmem [shape: f32[2,32], index: 6, kind: input, shape index: {}]
  %s7 = inlined_call_operand.vmem [shape: f32[2,32], index: 7, kind: input, shape index: {}]
  %s8 = inlined_call_operand.vmem [shape: f32[2,32], index: 8, kind: input, shape index: {}]
  %s9 = inlined_call_operand.vmem [shape: f32[2,32], index: 9, kind: input, shape index: {}]
  %s10 = inlined_call_operand.vmem [shape: f32[32,32], index: 10, kind: input, shape index: {}]
  %s11 = inlined_call_operand.vmem [shape: f32[1,32], index: 11, kind: input, shape index: {}]
  %s12 = inlined_call_operand.vmem [shape: f32[32,16], index: 12, kind: input, shape index: {}]
  %s13 = inlined_call_operand.vmem [shape: f32[1,16], index: 13, kind: input, shape index: {}]
  %s14 = inlined_call_operand.hbm [shape: f32[16,16], index: 14, kind: output, shape index: {0}]
  %s15 = inlined_call_operand.hbm [shape: f32[1,1], index: 15, kind: output, shape index: {1}]
  %16 = xla_tuple %s14, %s15
  %s17 = sld [smem:[#allocation0]]
  $region74: #{_lambda_.1} parent=0
    _
  %s19 = ssub.s32 1, %s17
  %s20 = scalar_select 0, %s19, %s17
  $region1: #{_lambda_.1} parent=0
    #allocation5 [shape = 'u8[8192]{0}', space=vmem, size = 0x2000, scoped, tag = 'output window, operand 0, single buffered']
    #allocation6 [shape = 's32[1]{0}', space=sflag, size = 0x4, scoped, tag = 'scoped memory for _lambda_.1']
    #allocation7 [shape = 'u8[512]{0}', space=vmem, size = 0x400, scoped, tag = 'output window, operand 1, single buffered']
    #allocation8 [shape = 's32[1]{0}', space=sflag, size = 0x4, scoped, tag = 'scoped memory for _lambda_.1']
    %21 = vsyncpa [#allocation6], 0
    %22 = vsyncpa [#allocation8], 0
    // Predicated region
    $region2: #{_lambda_.1} parent=1 // pred_check
      _
    $region3: #{_lambda_.1} parent=1 // pred_check_branch
      %24 = sbr.rel (0) target = $region5
    $region4: #{_lambda_.1} parent=1 // pred_region
      _
    $region5: #{_lambda_.1} parent=1 // pred_fallthru
      _
    // Predicated region
    $region6: #{_lambda_.1} parent=1 // pred_check
      _
    $region7: #{_lambda_.1} parent=1 // pred_check_branch
      %26 = sbr.rel (0) target = $region9
    $region8: #{_lambda_.1} parent=1 // pred_region
      _
    $region9: #{_lambda_.1} parent=1 // pred_fallthru
      _
    // Predicated region
    $region10: #{_lambda_.1} parent=1 // pred_check
      _
    $region11: #{_lambda_.1} parent=1 // pred_check_branch
      %28 = sbr.rel (0) target = $region13
    $region12: #{_lambda_.1} parent=1 // pred_region
      _
    $region13: #{_lambda_.1} parent=1 // pred_fallthru
      _
    // Predicated region
    $region14: #{_lambda_.1} parent=1 // pred_check
      _
    $region15: #{_lambda_.1} parent=1 // pred_check_branch
      %30 = sbr.rel (0) target = $region17
    $region16: #{_lambda_.1} parent=1 // pred_region
      _
    $region17: #{_lambda_.1} parent=1 // pred_fallthru
      _
    // Predicated region
    $region18: #{_lambda_.1} parent=1 // pred_check
      _
    $region19: #{_lambda_.1} parent=1 // pred_check_branch
      %32 = sbr.rel (0) target = $region21
    $region20: #{_lambda_.1} parent=1 // pred_region
      _
    $region21: #{_lambda_.1} parent=1 // pred_fallthru
      _
    // Predicated region
    $region22: #{_lambda_.1} parent=1 // pred_check
      _
    $region23: #{_lambda_.1} parent=1 // pred_check_branch
      %34 = sbr.rel (0) target = $region25
    $region24: #{_lambda_.1} parent=1 // pred_region
      _
    $region25: #{_lambda_.1} parent=1 // pred_fallthru
      _
    // Predicated region
    $region26: #{_lambda_.1} parent=1 // pred_check
      _
    $region27: #{_lambda_.1} parent=1 // pred_check_branch
      %36 = sbr.rel (0) target = $region29
    $region28: #{_lambda_.1} parent=1 // pred_region
      _
    $region29: #{_lambda_.1} parent=1 // pred_fallthru
      _
    // Predicated region
    $region30: #{_lambda_.1} parent=1 // pred_check
      _
    $region31: #{_lambda_.1} parent=1 // pred_check_branch
      %38 = sbr.rel (0) target = $region33
    $region32: #{_lambda_.1} parent=1 // pred_region
      _
    $region33: #{_lambda_.1} parent=1 // pred_fallthru
      _
    // Predicated region
    $region34: #{_lambda_.1} parent=1 // pred_check
      _
    $region35: #{_lambda_.1} parent=1 // pred_check_branch
      %40 = sbr.rel (0) target = $region37
    $region36: #{_lambda_.1} parent=1 // pred_region
      _
    $region37: #{_lambda_.1} parent=1 // pred_fallthru
      _
    // Predicated region
    $region38: #{_lambda_.1} parent=1 // pred_check
      _
    $region39: #{_lambda_.1} parent=1 // pred_check_branch
      %42 = sbr.rel (0) target = $region41
    $region40: #{_lambda_.1} parent=1 // pred_region
      _
    $region41: #{_lambda_.1} parent=1 // pred_fallthru
      _
    // Predicated region
    $region42: #{_lambda_.1} parent=1 // pred_check
      _
    $region43: #{_lambda_.1} parent=1 // pred_check_branch
      %44 = sbr.rel (0) target = $region45
    $region44: #{_lambda_.1} parent=1 // pred_region
      _
    $region45: #{_lambda_.1} parent=1 // pred_fallthru
      _
    // Predicated region
    $region46: #{_lambda_.1} parent=1 // pred_check
      _
    $region47: #{_lambda_.1} parent=1 // pred_check_branch
      %46 = sbr.rel (0) target = $region49
    $region48: #{_lambda_.1} parent=1 // pred_region
      _
    $region49: #{_lambda_.1} parent=1 // pred_fallthru
      _
    // Predicated region
    $region50: #{_lambda_.1} parent=1 // pred_check
      _
    $region51: #{_lambda_.1} parent=1 // pred_check_branch
      %48 = sbr.rel (0) target = $region53
    $region52: #{_lambda_.1} parent=1 // pred_region
      _
    $region53: #{_lambda_.1} parent=1 // pred_fallthru
      _
    // Predicated region
    $region54: #{_lambda_.1} parent=1 // pred_check
      _
    $region55: #{_lambda_.1} parent=1 // pred_check_branch
      %50 = sbr.rel (0) target = $region57
    $region56: #{_lambda_.1} parent=1 // pred_region
      _
    $region57: #{_lambda_.1} parent=1 // pred_fallthru
      _
    %v51 = vld [vmem:[%s0] sm:$0xff]
    %v52 = vld [vmem:[%s0 + $0x8] sm:$0xff]
    %v53 = vld [vmem:[%s2] sm:$0xff]
    %v54 = vld [vmem:[%s2 + $0x8] sm:$0xff]
    %v55 = vld [vmem:[%s3] sm:$0x1]
    %v57 = vlaneseq
    %v58 = vshrl.u32 %v57, 7
    %v59 = vsub.s32 0, %v58
    %v60 = vrot.slane %v55, %v59
    %vm62 = vcmask 130048
    %v64 = vsel %vm62, %v51, 0
    %v67 = vsel %vm62, %v52, 0
    %69 = vmatprep.subr.mxu0 0.0
    %70 = vmatpush1.msra.mxu0 0.0
    %71 = vmatprep.subr.mxu0 0.0
    %72 = vmatpush1.msra.mxu0 0.0
    %73 = vmatprep.subr.mxu0 0.0
    %74 = vmatpush1.msra.mxu0 0.0
    %75 = vmatprep.subr.mxu0 0.0
    %76 = vmatpush1.msra.mxu0 0.0
    %77 = vmatprep.subr.mxu0 0.0
    %78 = vmatpush1.msra.mxu0 0.0
    %79 = vmatprep.subr.mxu0 0.0
    %80 = vmatpush1.msra.mxu0 0.0
    %81 = vmatprep.subr.mxu0 0.0
    %82 = vmatpush1.msra.mxu0 0.0
    %83 = vmatprep.subr.mxu0 0.0
    %84 = vmatpush1.msra.mxu0 0.0
    %85 = vmatprep.subr.mxu0 0.0
    %86 = vmatpush1.msra.mxu0 0.0
    %87 = vmatprep.subr.mxu0 0.0
    %88 = vmatpush1.msra.mxu0 0.0
    %89 = vmatprep.subr.mxu0 0.0
    %90 = vmatpush1.msra.mxu0 0.0
    %91 = vmatprep.subr.mxu0 0.0
    %92 = vmatpush1.msra.mxu0 0.0
    %93 = vmatprep.subr.mxu0 0.0
    %94 = vmatpush1.msra.mxu0 0.0
    %95 = vmatprep.subr.mxu0 0.0
    %96 = vmatpush1.msra.mxu0 0.0
    %97 = vmatprep.subr.mxu0 0.0
    %98 = vmatpush1.msra.mxu0 %v54
    %99 = vmatprep.subr.mxu0 0.0
    %100 = vmatpush1.msra.mxu0 %v53
    %101 = vmatprep.subr.mxu0 0.0
    %102 = vmatpush2.msra.mxu0 0.0
    %103 = vmatprep.subr.mxu0 0.0
    %104 = vmatpush2.msra.mxu0 0.0
    %105 = vmatprep.subr.mxu0 0.0
    %106 = vmatpush2.msra.mxu0 0.0
    %107 = vmatprep.subr.mxu0 0.0
    %108 = vmatpush2.msra.mxu0 0.0
    %109 = vmatprep.subr.mxu0 0.0
    %110 = vmatpush2.msra.mxu0 0.0
    %111 = vmatprep.subr.mxu0 0.0
    %112 = vmatpush2.msra.mxu0 0.0
    %113 = vmatprep.subr.mxu0 0.0
    %114 = vmatpush2.msra.mxu0 0.0
    %115 = vmatprep.subr.mxu0 0.0
    %116 = vmatpush2.msra.mxu0 0.0
    %117 = vmatprep.subr.mxu0 0.0
    %118 = vmatpush2.msra.mxu0 0.0
    %119 = vmatprep.subr.mxu0 0.0
    %120 = vmatpush2.msra.mxu0 0.0
    %121 = vmatprep.subr.mxu0 0.0
    %122 = vmatpush2.msra.mxu0 0.0
    %123 = vmatprep.subr.mxu0 0.0
    %124 = vmatpush2.msra.mxu0 0.0
    %125 = vmatprep.subr.mxu0 0.0
    %126 = vmatpush2.msra.mxu0 0.0
    %127 = vmatprep.subr.mxu0 0.0
    %128 = vmatpush2.msra.mxu0 0.0
    %129 = vmatprep.subr.mxu0 0.0
    %130 = vmatpush2.msra.mxu0 0.0
    %131 = vmatprep.subr.mxu0 0.0
    %132 = vmatpush2.msra.mxu0 0.0
    %133 = vmatprep.mubr.f32.mxu0 0.0
    %134 = vmatmul.mubr.f32.gmra.mxu0 %v64
    %v135 = vpop.f32.mrf.mxu0
    %v136 = vadd.f32 %v60, %v135
    %v137 = vpop.f32.mrf.mxu0
    %138 = vmatprep.mubr.f32.mxu0 0.0
    %139 = vmatmul.mubr.f32.gmra.mxu0 %v67
    %v140 = vpop.f32.mrf.mxu0
    %v141 = vadd.f32 %v60, %v140
    %v142 = vpop.f32.mrf.mxu0
    %143 = vdwg.mxu0
    %v144 = vmax.f32 %v136, 0.0
    %v145 = vmax.f32 %v141, 0.0
    %vm146 = vcmask 261120
    %147 = vst.msk [vmem:[#allocation3] sm:$0xff] %vm146, %v144
    %148 = vst.msk [vmem:[#allocation3 + $0x8] sm:$0xff] %vm146, %v145
    %v149 = vld [vmem:[%s4] sm:$0x1]
    %v151 = vlaneseq
    %v152 = vshrl.u32 %v151, 7
    %v153 = vsub.s32 0, %v152
    %v154 = vrot.slane %v149, %v153
    %v156 = vld [vmem:[%s6] sm:$0x3]
    %v157 = vld [vmem:[%s7] sm:$0x3]
    %v158 = vld [vmem:[%s8] sm:$0x3]
    %v159 = vld [vmem:[%s9] sm:$0x3]
    %v160 = vld [vmem:[#allocation3] sm:$0xff]
    %v161 = vld [vmem:[#allocation3 + $0x8] sm:$0xff]
    %v162 = vld [vmem:[%s5] sm:$0xff]
    %v163 = vld [vmem:[%s5 + $0x8] sm:$0xff]
    %v164 = vld [vmem:[%s5 + $0x10] sm:$0xff]
    %v165 = vld [vmem:[%s5 + $0x18] sm:$0xff]
    %v167 = vsel %vm146, %v160, 0
    %v170 = vsel %vm146, %v161, 0
    %172 = vmatprep.subr.mxu0 0.0
    %173 = vmatpush1.msra.mxu0 0.0
    %174 = vmatprep.subr.mxu0 0.0
    %175 = vmatpush1.msra.mxu0 0.0
    %176 = vmatprep.subr.mxu0 0.0
    %177 = vmatpush1.msra.mxu0 0.0
    %178 = vmatprep.subr.mxu0 0.0
    %179 = vmatpush1.msra.mxu0 0.0
    %180 = vmatprep.subr.mxu0 0.0
    %181 = vmatpush1.msra.mxu0 0.0
    %182 = vmatprep.subr.mxu0 0.0
    %183 = vmatpush1.msra.mxu0 0.0
    %184 = vmatprep.subr.mxu0 0.0
    %185 = vmatpush1.msra.mxu0 0.0
    %186 = vmatprep.subr.mxu0 0.0
    %187 = vmatpush1.msra.mxu0 0.0
    %188 = vmatprep.subr.mxu0 0.0
    %189 = vmatpush1.msra.mxu0 0.0
    %190 = vmatprep.subr.mxu0 0.0
    %191 = vmatpush1.msra.mxu0 0.0
    %192 = vmatprep.subr.mxu0 0.0
    %193 = vmatpush1.msra.mxu0 0.0
    %194 = vmatprep.subr.mxu0 0.0
    %195 = vmatpush1.msra.mxu0 0.0
    %196 = vmatprep.subr.mxu0 0.0
    %197 = vmatpush1.msra.mxu0 %v165
    %198 = vmatprep.subr.mxu0 0.0
    %199 = vmatpush1.msra.mxu0 %v164
    %200 = vmatprep.subr.mxu0 0.0
    %201 = vmatpush1.msra.mxu0 %v163
    %202 = vmatprep.subr.mxu0 0.0
    %203 = vmatpush1.msra.mxu0 %v162
    %204 = vmatprep.subr.mxu0 0.0
    %205 = vmatpush2.msra.mxu0 0.0
    %206 = vmatprep.subr.mxu0 0.0
    %207 = vmatpush2.msra.mxu0 0.0
    %208 = vmatprep.subr.mxu0 0.0
    %209 = vmatpush2.msra.mxu0 0.0
    %210 = vmatprep.subr.mxu0 0.0
    %211 = vmatpush2.msra.mxu0 0.0
    %212 = vmatprep.subr.mxu0 0.0
    %213 = vmatpush2.msra.mxu0 0.0
    %214 = vmatprep.subr.mxu0 0.0
    %215 = vmatpush2.msra.mxu0 0.0
    %216 = vmatprep.subr.mxu0 0.0
    %217 = vmatpush2.msra.mxu0 0.0
    %218 = vmatprep.subr.mxu0 0.0
    %219 = vmatpush2.msra.mxu0 0.0
    %220 = vmatprep.subr.mxu0 0.0
    %221 = vmatpush2.msra.mxu0 0.0
    %222 = vmatprep.subr.mxu0 0.0
    %223 = vmatpush2.msra.mxu0 0.0
    %224 = vmatprep.subr.mxu0 0.0
    %225 = vmatpush2.msra.mxu0 0.0
    %226 = vmatprep.subr.mxu0 0.0
    %227 = vmatpush2.msra.mxu0 0.0
    %228 = vmatprep.subr.mxu0 0.0
    %229 = vmatpush2.msra.mxu0 0.0
    %230 = vmatprep.subr.mxu0 0.0
    %231 = vmatpush2.msra.mxu0 0.0
    %232 = vmatprep.subr.mxu0 0.0
    %233 = vmatpush2.msra.mxu0 0.0
    %234 = vmatprep.subr.mxu0 0.0
    %235 = vmatpush2.msra.mxu0 0.0
    %236 = vmatprep.mubr.f32.mxu0 0.0
    %237 = vmatmul.mubr.f32.gmra.mxu0 %v167
    %v238 = vpop.f32.mrf.mxu0
    %v239 = vadd.f32 0.0, %v238
    %v240 = vpop.f32.mrf.mxu0
    %241 = vmatprep.mubr.f32.mxu0 0.0
    %242 = vmatmul.mubr.f32.gmra.mxu0 %v170
    %v243 = vpop.f32.mrf.mxu0
    %v244 = vadd.f32 0.0, %v243
    %v245 = vpop.f32.mrf.mxu0
    %246 = vdwg.mxu0
    %vm247 = vcmask 785408
    %248 = vst.msk [vmem:[#allocation2] sm:$0xff] %vm247, %v239
    %249 = vst.msk [vmem:[#allocation2 + $0x8] sm:$0xff] %vm247, %v244
    %v250 = vld [vmem:[#allocation2] sm:$0x1]
    %v251 = vld [vmem:[#allocation2 + $0x8] sm:$0x1]
    %v252 = vld [vmem:[#allocation3] sm:$0x1]
    %v253 = vld [vmem:[#allocation3 + $0x8] sm:$0x1]
    %v254 = vlaneseq
    %v255 = vshrl.u32 %v254, 7
    %v256 = vsub.s32 0, %v255
    %v257 = vrot.slane %v156, %v256
    %v258 = vmul.f32 %v257, %v154
    %260 = vrot.lane.b32.xlu0 %v258, 32
    %v261 = vpop.permute.xlu0 %260
    %v263 = vadd.f32 %v250, %v261
    %v264 = vadd.f32 %v251, %v261
    %v265 = vlaneseq
    %v266 = vshrl.u32 %v265, 7
    %v267 = vsub.s32 0, %v266
    %v268 = vrot.slane %v158, %v267
    %270 = vrot.lane.b32.xlu0 %v268, 32
    %v271 = vpop.permute.xlu0 %270
    %v273 = vadd.f32 %v263, %v271
    %v274 = vadd.f32 %v264, %v271
    %v275 = vxor.u32 %v273, 2147483648
    %v276 = vxor.u32 %v274, 2147483648
    %v277 = vmul.f32 %v275, 1.442695
    %v278 = vpow.pop %v277
    %v279 = vmul.f32 %v276, 1.442695
    %v280 = vpow.pop %v279
    %v281 = vadd.f32 %v278, 1.0
    %v282 = vadd.f32 %v280, 1.0
    %v283 = vrcp.pop %v281
    %v284 = vmul.f32 1.0, %v283
    %v285 = vrcp.pop %v282
    %v286 = vmul.f32 1.0, %v285
    %v287 = vlaneseq
    %v288 = vshrl.u32 %v287, 7
    %v289 = vsub.s32 0, %v288
    %v290 = vrot.slane %v157, %v289
    %v291 = vmul.f32 %v290, %v154
    %293 = vrot.lane.b32.xlu0 %v291, 64
    %v294 = vpop.permute.xlu0 %293
    %v296 = vadd.f32 %v250, %v294
    %v297 = vadd.f32 %v251, %v294
    %v298 = vlaneseq
    %v299 = vshrl.u32 %v298, 7
    %v300 = vsub.s32 0, %v299
    %v301 = vrot.slane %v159, %v300
    %303 = vrot.lane.b32.xlu0 %v301, 64
    %v304 = vpop.permute.xlu0 %303
    %v306 = vadd.f32 %v296, %v304
    %v307 = vadd.f32 %v297, %v304
    %v308 = vxor.u32 %v306, 2147483648
    %v309 = vxor.u32 %v307, 2147483648
    %v310 = vmul.f32 %v308, 1.442695
    %v311 = vpow.pop %v310
    %v312 = vmul.f32 %v309, 1.442695
    %v313 = vpow.pop %v312
    %v314 = vadd.f32 %v311, 1.0
    %v315 = vadd.f32 %v313, 1.0
    %v316 = vrcp.pop %v314
    %v317 = vmul.f32 1.0, %v316
    %v318 = vrcp.pop %v315
    %v319 = vmul.f32 1.0, %v318
    %320 = vrot.lane.b32.xlu0 %v154, 32
    %v321 = vpop.permute.xlu0 %320
    %v323 = vmul.f32 %v284, %v321
    %v324 = vmul.f32 %v286, %v321
    %v325 = vsub.f32 1.0, %v284
    %v326 = vsub.f32 1.0, %v286
    %329 = vrot.lane.b32.xlu0 %v250, 32
    %v330 = vpop.permute.xlu0 %329
    %331 = vrot.lane.b32.xlu0 %v251, 32
    %v332 = vpop.permute.xlu0 %331
    %v335 = vmul.f32 %v325, %v330
    %v336 = vmul.f32 %v326, %v332
    %v337 = vadd.f32 %v323, %v335
    %v338 = vadd.f32 %v324, %v336
    %341 = vrot.lane.b32.xlu0 %v337, 32
    %v342 = vpop.permute.xlu0 %341
    %343 = vrot.lane.b32.xlu0 %v338, 32
    %v344 = vpop.permute.xlu0 %343
    %v347 = vmul.f32 %v317, %v342
    %v348 = vmul.f32 %v319, %v344
    %v349 = vsub.f32 1.0, %v317
    %v350 = vsub.f32 1.0, %v319
    %353 = vrot.lane.b32.xlu0 %v252, 64
    %v354 = vpop.permute.xlu0 %353
    %355 = vrot.lane.b32.xlu0 %v253, 64
    %v356 = vpop.permute.xlu0 %355
    %v359 = vmul.f32 %v349, %v354
    %v360 = vmul.f32 %v350, %v356
    %v361 = vadd.f32 %v347, %v359
    %v362 = vadd.f32 %v348, %v360
    %365 = vrot.lane.b32.xlu0 %v361, 64
    %v366 = vpop.permute.xlu0 %365
    %367 = vrot.lane.b32.xlu0 %v362, 64
    %v368 = vpop.permute.xlu0 %367
    %vm371 = vcmask 253952
    %372 = vst.msk [vmem:[#allocation4] sm:$0x1] %vm371, %v366
    %373 = vst.msk [vmem:[#allocation4 + $0x8] sm:$0x1] %vm371, %v368
    %v374 = vld [vmem:[#allocation2 + $0x1] sm:$0x1]
    %v375 = vld [vmem:[#allocation2 + $0x9] sm:$0x1]
    %v376 = vld [vmem:[#allocation3 + $0x1] sm:$0x1]
    %v377 = vld [vmem:[#allocation3 + $0x9] sm:$0x1]
    %v378 = vrot.slane %v338, 7
    %vm379 = vcmask 1041409
    %v380 = vsel %vm379, %v378, %v337
    %381 = vrot.lane.b32.xlu0 %v380, 96
    %v382 = vpop.permute.xlu0 %381
    %v384 = vmul.f32 %v257, %v382
    %v386 = vrot.slane %v384, 1
    %387 = vrot.lane.b32.xlu0 %v384, 32
    %v388 = vpop.permute.xlu0 %387
    %389 = vrot.lane.b32.xlu0 %v386, 32
    %v390 = vpop.permute.xlu0 %389
    %v393 = vadd.f32 %v374, %v388
    %v394 = vadd.f32 %v375, %v390
    %v395 = vadd.f32 %v393, %v271
    %v396 = vadd.f32 %v394, %v271
    %v397 = vxor.u32 %v395, 2147483648
    %v398 = vxor.u32 %v396, 2147483648
    %v399 = vmul.f32 %v397, 1.442695
    %v400 = vpow.pop %v399
    %v401 = vmul.f32 %v398, 1.442695
    %v402 = vpow.pop %v401
    %v403 = vadd.f32 %v400, 1.0
    %v404 = vadd.f32 %v402, 1.0
    %v405 = vrcp.pop %v403
    %v406 = vmul.f32 1.0, %v405
    %v407 = vrcp.pop %v404
    %v408 = vmul.f32 1.0, %v407
    %v409 = vmul.f32 %v290, %v382
    %v411 = vrot.slane %v409, 1
    %412 = vrot.lane.b32.xlu0 %v409, 64
    %v413 = vpop.permute.xlu0 %412
    %414 = vrot.lane.b32.xlu0 %v411, 64
    %v415 = vpop.permute.xlu0 %414
    %v418 = vadd.f32 %v374, %v413
    %v419 = vadd.f32 %v375, %v415
    %v420 = vadd.f32 %v418, %v304
    %v421 = vadd.f32 %v419, %v304
    %v422 = vxor.u32 %v420, 2147483648
    %v423 = vxor.u32 %v421, 2147483648
    %v424 = vmul.f32 %v422, 1.442695
    %v425 = vpow.pop %v424
    %v426 = vmul.f32 %v423, 1.442695
    %v427 = vpow.pop %v426
    %v428 = vadd.f32 %v425, 1.0
    %v429 = vadd.f32 %v427, 1.0
    %v430 = vrcp.pop %v428
    %v431 = vmul.f32 1.0, %v430
    %v432 = vrcp.pop %v429
    %v433 = vmul.f32 1.0, %v432
    %v434 = vmul.f32 %v406, %v337
    %v435 = vmul.f32 %v408, %v338
    %v436 = vsub.f32 1.0, %v406
    %v437 = vsub.f32 1.0, %v408
    %440 = vrot.lane.b32.xlu0 %v374, 32
    %v441 = vpop.permute.xlu0 %440
    %442 = vrot.lane.b32.xlu0 %v375, 32
    %v443 = vpop.permute.xlu0 %442
    %v446 = vmul.f32 %v436, %v441
    %v447 = vmul.f32 %v437, %v443
    %v448 = vadd.f32 %v434, %v446
    %v449 = vadd.f32 %v435, %v447
    %452 = vrot.lane.b32.xlu0 %v448, 32
    %v453 = vpop.permute.xlu0 %452
    %454 = vrot.lane.b32.xlu0 %v449, 32
    %v455 = vpop.permute.xlu0 %454
    %v458 = vmul.f32 %v431, %v453
    %v459 = vmul.f32 %v433, %v455
    %v460 = vsub.f32 1.0, %v431
    %v461 = vsub.f32 1.0, %v433
    %464 = vrot.lane.b32.xlu0 %v376, 64
    %v465 = vpop.permute.xlu0 %464
    %466 = vrot.lane.b32.xlu0 %v377, 64
    %v467 = vpop.permute.xlu0 %466
    %v470 = vmul.f32 %v460, %v465
    %v471 = vmul.f32 %v461, %v467
    %v472 = vadd.f32 %v458, %v470
    %v473 = vadd.f32 %v459, %v471
    %476 = vrot.lane.b32.xlu0 %v472, 64
    %v477 = vpop.permute.xlu0 %476
    %478 = vrot.lane.b32.xlu0 %v473, 64
    %v479 = vpop.permute.xlu0 %478
    %482 = vst.msk [vmem:[#allocation4 + $0x1] sm:$0x1] %vm371, %v477
    %483 = vst.msk [vmem:[#allocation4 + $0x9] sm:$0x1] %vm371, %v479
    %v484 = vld [vmem:[#allocation2 + $0x2] sm:$0x1]
    %v485 = vld [vmem:[#allocation2 + $0xa] sm:$0x1]
    %v486 = vld [vmem:[#allocation3 + $0x2] sm:$0x1]
    %v487 = vld [vmem:[#allocation3 + $0xa] sm:$0x1]
    %v488 = vrot.slane %v449, 7
    %v489 = vsel %vm379, %v488, %v448
    %490 = vrot.lane.b32.xlu0 %v489, 96
    %v491 = vpop.permute.xlu0 %490
    %v493 = vmul.f32 %v257, %v491
    %v495 = vrot.slane %v493, 1
    %496 = vrot.lane.b32.xlu0 %v493, 32
    %v497 = vpop.permute.xlu0 %496
    %498 = vrot.lane.b32.xlu0 %v495, 32
    %v499 = vpop.permute.xlu0 %498
    %v502 = vadd.f32 %v484, %v497
    %v503 = vadd.f32 %v485, %v499
    %v504 = vadd.f32 %v502, %v271
    %v505 = vadd.f32 %v503, %v271
    %v506 = vxor.u32 %v504, 2147483648
    %v507 = vxor.u32 %v505, 2147483648
    %v508 = vmul.f32 %v506, 1.442695
    %v509 = vpow.pop %v508
    %v510 = vmul.f32 %v507, 1.442695
    %v511 = vpow.pop %v510
    %v512 = vadd.f32 %v509, 1.0
    %v513 = vadd.f32 %v511, 1.0
    %v514 = vrcp.pop %v512
    %v515 = vmul.f32 1.0, %v514
    %v516 = vrcp.pop %v513
    %v517 = vmul.f32 1.0, %v516
    %v518 = vmul.f32 %v290, %v491
    %v520 = vrot.slane %v518, 1
    %521 = vrot.lane.b32.xlu0 %v518, 64
    %v522 = vpop.permute.xlu0 %521
    %523 = vrot.lane.b32.xlu0 %v520, 64
    %v524 = vpop.permute.xlu0 %523
    %v527 = vadd.f32 %v484, %v522
    %v528 = vadd.f32 %v485, %v524
    %v529 = vadd.f32 %v527, %v304
    %v530 = vadd.f32 %v528, %v304
    %v531 = vxor.u32 %v529, 2147483648
    %v532 = vxor.u32 %v530, 2147483648
    %v533 = vmul.f32 %v531, 1.442695
    %v534 = vpow.pop %v533
    %v535 = vmul.f32 %v532, 1.442695
    %v536 = vpow.pop %v535
    %v537 = vadd.f32 %v534, 1.0
    %v538 = vadd.f32 %v536, 1.0
    %v539 = vrcp.pop %v537
    %v540 = vmul.f32 1.0, %v539
    %v541 = vrcp.pop %v538
    %v542 = vmul.f32 1.0, %v541
    %v543 = vmul.f32 %v515, %v448
    %v544 = vmul.f32 %v517, %v449
    %v545 = vsub.f32 1.0, %v515
    %v546 = vsub.f32 1.0, %v517
    %549 = vrot.lane.b32.xlu0 %v484, 32
    %v550 = vpop.permute.xlu0 %549
    %551 = vrot.lane.b32.xlu0 %v485, 32
    %v552 = vpop.permute.xlu0 %551
    %v555 = vmul.f32 %v545, %v550
    %v556 = vmul.f32 %v546, %v552
    %v557 = vadd.f32 %v543, %v555
    %v558 = vadd.f32 %v544, %v556
    %561 = vrot.lane.b32.xlu0 %v557, 32
    %v562 = vpop.permute.xlu0 %561
    %563 = vrot.lane.b32.xlu0 %v558, 32
    %v564 = vpop.permute.xlu0 %563
    %v567 = vmul.f32 %v540, %v562
    %v568 = vmul.f32 %v542, %v564
    %v569 = vsub.f32 1.0, %v540
    %v570 = vsub.f32 1.0, %v542
    %573 = vrot.lane.b32.xlu0 %v486, 64
    %v574 = vpop.permute.xlu0 %573
    %575 = vrot.lane.b32.xlu0 %v487, 64
    %v576 = vpop.permute.xlu0 %575
    %v579 = vmul.f32 %v569, %v574
    %v580 = vmul.f32 %v570, %v576
    %v581 = vadd.f32 %v567, %v579
    %v582 = vadd.f32 %v568, %v580
    %585 = vrot.lane.b32.xlu0 %v581, 64
    %v586 = vpop.permute.xlu0 %585
    %587 = vrot.lane.b32.xlu0 %v582, 64
    %v588 = vpop.permute.xlu0 %587
    %591 = vst.msk [vmem:[#allocation4 + $0x2] sm:$0x1] %vm371, %v586
    %592 = vst.msk [vmem:[#allocation4 + $0xa] sm:$0x1] %vm371, %v588
    %v593 = vld [vmem:[#allocation2 + $0x3] sm:$0x1]
    %v594 = vld [vmem:[#allocation2 + $0xb] sm:$0x1]
    %v595 = vld [vmem:[#allocation3 + $0x3] sm:$0x1]
    %v596 = vld [vmem:[#allocation3 + $0xb] sm:$0x1]
    %v597 = vrot.slane %v558, 7
    %v598 = vsel %vm379, %v597, %v557
    %599 = vrot.lane.b32.xlu0 %v598, 96
    %v600 = vpop.permute.xlu0 %599
    %v602 = vmul.f32 %v257, %v600
    %v604 = vrot.slane %v602, 1
    %605 = vrot.lane.b32.xlu0 %v602, 32
    %v606 = vpop.permute.xlu0 %605
    %607 = vrot.lane.b32.xlu0 %v604, 32
    %v608 = vpop.permute.xlu0 %607
    %v611 = vadd.f32 %v593, %v606
    %v612 = vadd.f32 %v594, %v608
    %v613 = vadd.f32 %v611, %v271
    %v614 = vadd.f32 %v612, %v271
    %v615 = vxor.u32 %v613, 2147483648
    %v616 = vxor.u32 %v614, 2147483648
    %v617 = vmul.f32 %v615, 1.442695
    %v618 = vpow.pop %v617
    %v619 = vmul.f32 %v616, 1.442695
    %v620 = vpow.pop %v619
    %v621 = vadd.f32 %v618, 1.0
    %v622 = vadd.f32 %v620, 1.0
    %v623 = vrcp.pop %v621
    %v624 = vmul.f32 1.0, %v623
    %v625 = vrcp.pop %v622
    %v626 = vmul.f32 1.0, %v625
    %v627 = vmul.f32 %v290, %v600
    %v629 = vrot.slane %v627, 1
    %630 = vrot.lane.b32.xlu0 %v627, 64
    %v631 = vpop.permute.xlu0 %630
    %632 = vrot.lane.b32.xlu0 %v629, 64
    %v633 = vpop.permute.xlu0 %632
    %v636 = vadd.f32 %v593, %v631
    %v637 = vadd.f32 %v594, %v633
    %v638 = vadd.f32 %v636, %v304
    %v639 = vadd.f32 %v637, %v304
    %v640 = vxor.u32 %v638, 2147483648
    %v641 = vxor.u32 %v639, 2147483648
    %v642 = vmul.f32 %v640, 1.442695
    %v643 = vpow.pop %v642
    %v644 = vmul.f32 %v641, 1.442695
    %v645 = vpow.pop %v644
    %v646 = vadd.f32 %v643, 1.0
    %v647 = vadd.f32 %v645, 1.0
    %v648 = vrcp.pop %v646
    %v649 = vmul.f32 1.0, %v648
    %v650 = vrcp.pop %v647
    %v651 = vmul.f32 1.0, %v650
    %v652 = vmul.f32 %v624, %v557
    %v653 = vmul.f32 %v626, %v558
    %v654 = vsub.f32 1.0, %v624
    %v655 = vsub.f32 1.0, %v626
    %658 = vrot.lane.b32.xlu0 %v593, 32
    %v659 = vpop.permute.xlu0 %658
    %660 = vrot.lane.b32.xlu0 %v594, 32
    %v661 = vpop.permute.xlu0 %660
    %v664 = vmul.f32 %v654, %v659
    %v665 = vmul.f32 %v655, %v661
    %v666 = vadd.f32 %v652, %v664
    %v667 = vadd.f32 %v653, %v665
    %670 = vrot.lane.b32.xlu0 %v666, 32
    %v671 = vpop.permute.xlu0 %670
    %672 = vrot.lane.b32.xlu0 %v667, 32
    %v673 = vpop.permute.xlu0 %672
    %v676 = vmul.f32 %v649, %v671
    %v677 = vmul.f32 %v651, %v673
    %v678 = vsub.f32 1.0, %v649
    %v679 = vsub.f32 1.0, %v651
    %682 = vrot.lane.b32.xlu0 %v595, 64
    %v683 = vpop.permute.xlu0 %682
    %684 = vrot.lane.b32.xlu0 %v596, 64
    %v685 = vpop.permute.xlu0 %684
    %v688 = vmul.f32 %v678, %v683
    %v689 = vmul.f32 %v679, %v685
    %v690 = vadd.f32 %v676, %v688
    %v691 = vadd.f32 %v677, %v689
    %694 = vrot.lane.b32.xlu0 %v690, 64
    %v695 = vpop.permute.xlu0 %694
    %696 = vrot.lane.b32.xlu0 %v691, 64
    %v697 = vpop.permute.xlu0 %696
    %700 = vst.msk [vmem:[#allocation4 + $0x3] sm:$0x1] %vm371, %v695
    %701 = vst.msk [vmem:[#allocation4 + $0xb] sm:$0x1] %vm371, %v697
    %v702 = vld [vmem:[#allocation2 + $0x4] sm:$0x1]
    %v703 = vld [vmem:[#allocation2 + $0xc] sm:$0x1]
    %v704 = vld [vmem:[#allocation3 + $0x4] sm:$0x1]
    %v705 = vld [vmem:[#allocation3 + $0xc] sm:$0x1]
    %v706 = vrot.slane %v667, 7
    %v707 = vsel %vm379, %v706, %v666
    %708 = vrot.lane.b32.xlu0 %v707, 96
    %v709 = vpop.permute.xlu0 %708
    %v711 = vmul.f32 %v257, %v709
    %v713 = vrot.slane %v711, 1
    %714 = vrot.lane.b32.xlu0 %v711, 32
    %v715 = vpop.permute.xlu0 %714
    %716 = vrot.lane.b32.xlu0 %v713, 32
    %v717 = vpop.permute.xlu0 %716
    %v720 = vadd.f32 %v702, %v715
    %v721 = vadd.f32 %v703, %v717
    %v722 = vadd.f32 %v720, %v271
    %v723 = vadd.f32 %v721, %v271
    %v724 = vxor.u32 %v722, 2147483648
    %v725 = vxor.u32 %v723, 2147483648
    %v726 = vmul.f32 %v724, 1.442695
    %v727 = vpow.pop %v726
    %v728 = vmul.f32 %v725, 1.442695
    %v729 = vpow.pop %v728
    %v730 = vadd.f32 %v727, 1.0
    %v731 = vadd.f32 %v729, 1.0
    %v732 = vrcp.pop %v730
    %v733 = vmul.f32 1.0, %v732
    %v734 = vrcp.pop %v731
    %v735 = vmul.f32 1.0, %v734
    %v736 = vmul.f32 %v290, %v709
    %v738 = vrot.slane %v736, 1
    %739 = vrot.lane.b32.xlu0 %v736, 64
    %v740 = vpop.permute.xlu0 %739
    %741 = vrot.lane.b32.xlu0 %v738, 64
    %v742 = vpop.permute.xlu0 %741
    %v745 = vadd.f32 %v702, %v740
    %v746 = vadd.f32 %v703, %v742
    %v747 = vadd.f32 %v745, %v304
    %v748 = vadd.f32 %v746, %v304
    %v749 = vxor.u32 %v747, 2147483648
    %v750 = vxor.u32 %v748, 2147483648
    %v751 = vmul.f32 %v749, 1.442695
    %v752 = vpow.pop %v751
    %v753 = vmul.f32 %v750, 1.442695
    %v754 = vpow.pop %v753
    %v755 = vadd.f32 %v752, 1.0
    %v756 = vadd.f32 %v754, 1.0
    %v757 = vrcp.pop %v755
    %v758 = vmul.f32 1.0, %v757
    %v759 = vrcp.pop %v756
    %v760 = vmul.f32 1.0, %v759
    %v761 = vmul.f32 %v733, %v666
    %v762 = vmul.f32 %v735, %v667
    %v763 = vsub.f32 1.0, %v733
    %v764 = vsub.f32 1.0, %v735
    %767 = vrot.lane.b32.xlu0 %v702, 32
    %v768 = vpop.permute.xlu0 %767
    %769 = vrot.lane.b32.xlu0 %v703, 32
    %v770 = vpop.permute.xlu0 %769
    %v773 = vmul.f32 %v763, %v768
    %v774 = vmul.f32 %v764, %v770
    %v775 = vadd.f32 %v761, %v773
    %v776 = vadd.f32 %v762, %v774
    %779 = vrot.lane.b32.xlu0 %v775, 32
    %v780 = vpop.permute.xlu0 %779
    %781 = vrot.lane.b32.xlu0 %v776, 32
    %v782 = vpop.permute.xlu0 %781
    %v785 = vmul.f32 %v758, %v780
    %v786 = vmul.f32 %v760, %v782
    %v787 = vsub.f32 1.0, %v758
    %v788 = vsub.f32 1.0, %v760
    %791 = vrot.lane.b32.xlu0 %v704, 64
    %v792 = vpop.permute.xlu0 %791
    %793 = vrot.lane.b32.xlu0 %v705, 64
    %v794 = vpop.permute.xlu0 %793
    %v797 = vmul.f32 %v787, %v792
    %v798 = vmul.f32 %v788, %v794
    %v799 = vadd.f32 %v785, %v797
    %v800 = vadd.f32 %v786, %v798
    %803 = vrot.lane.b32.xlu0 %v799, 64
    %v804 = vpop.permute.xlu0 %803
    %805 = vrot.lane.b32.xlu0 %v800, 64
    %v806 = vpop.permute.xlu0 %805
    %809 = vst.msk [vmem:[#allocation4 + $0x4] sm:$0x1] %vm371, %v804
    %810 = vst.msk [vmem:[#allocation4 + $0xc] sm:$0x1] %vm371, %v806
    %v811 = vld [vmem:[#allocation2 + $0x5] sm:$0x1]
    %v812 = vld [vmem:[#allocation2 + $0xd] sm:$0x1]
    %v813 = vld [vmem:[#allocation3 + $0x5] sm:$0x1]
    %v814 = vld [vmem:[#allocation3 + $0xd] sm:$0x1]
    %v815 = vrot.slane %v776, 7
    %v816 = vsel %vm379, %v815, %v775
    %817 = vrot.lane.b32.xlu0 %v816, 96
    %v818 = vpop.permute.xlu0 %817
    %v820 = vmul.f32 %v257, %v818
    %v822 = vrot.slane %v820, 1
    %823 = vrot.lane.b32.xlu0 %v820, 32
    %v824 = vpop.permute.xlu0 %823
    %825 = vrot.lane.b32.xlu0 %v822, 32
    %v826 = vpop.permute.xlu0 %825
    %v829 = vadd.f32 %v811, %v824
    %v830 = vadd.f32 %v812, %v826
    %v831 = vadd.f32 %v829, %v271
    %v832 = vadd.f32 %v830, %v271
    %v833 = vxor.u32 %v831, 2147483648
    %v834 = vxor.u32 %v832, 2147483648
    %v835 = vmul.f32 %v833, 1.442695
    %v836 = vpow.pop %v835
    %v837 = vmul.f32 %v834, 1.442695
    %v838 = vpow.pop %v837
    %v839 = vadd.f32 %v836, 1.0
    %v840 = vadd.f32 %v838, 1.0
    %v841 = vrcp.pop %v839
    %v842 = vmul.f32 1.0, %v841
    %v843 = vrcp.pop %v840
    %v844 = vmul.f32 1.0, %v843
    %v845 = vmul.f32 %v290, %v818
    %v847 = vrot.slane %v845, 1
    %848 = vrot.lane.b32.xlu0 %v845, 64
    %v849 = vpop.permute.xlu0 %848
    %850 = vrot.lane.b32.xlu0 %v847, 64
    %v851 = vpop.permute.xlu0 %850
    %v854 = vadd.f32 %v811, %v849
    %v855 = vadd.f32 %v812, %v851
    %v856 = vadd.f32 %v854, %v304
    %v857 = vadd.f32 %v855, %v304
    %v858 = vxor.u32 %v856, 2147483648
    %v859 = vxor.u32 %v857, 2147483648
    %v860 = vmul.f32 %v858, 1.442695
    %v861 = vpow.pop %v860
    %v862 = vmul.f32 %v859, 1.442695
    %v863 = vpow.pop %v862
    %v864 = vadd.f32 %v861, 1.0
    %v865 = vadd.f32 %v863, 1.0
    %v866 = vrcp.pop %v864
    %v867 = vmul.f32 1.0, %v866
    %v868 = vrcp.pop %v865
    %v869 = vmul.f32 1.0, %v868
    %v870 = vmul.f32 %v842, %v775
    %v871 = vmul.f32 %v844, %v776
    %v872 = vsub.f32 1.0, %v842
    %v873 = vsub.f32 1.0, %v844
    %876 = vrot.lane.b32.xlu0 %v811, 32
    %v877 = vpop.permute.xlu0 %876
    %878 = vrot.lane.b32.xlu0 %v812, 32
    %v879 = vpop.permute.xlu0 %878
    %v882 = vmul.f32 %v872, %v877
    %v883 = vmul.f32 %v873, %v879
    %v884 = vadd.f32 %v870, %v882
    %v885 = vadd.f32 %v871, %v883
    %888 = vrot.lane.b32.xlu0 %v884, 32
    %v889 = vpop.permute.xlu0 %888
    %890 = vrot.lane.b32.xlu0 %v885, 32
    %v891 = vpop.permute.xlu0 %890
    %v894 = vmul.f32 %v867, %v889
    %v895 = vmul.f32 %v869, %v891
    %v896 = vsub.f32 1.0, %v867
    %v897 = vsub.f32 1.0, %v869
    %900 = vrot.lane.b32.xlu0 %v813, 64
    %v901 = vpop.permute.xlu0 %900
    %902 = vrot.lane.b32.xlu0 %v814, 64
    %v903 = vpop.permute.xlu0 %902
    %v906 = vmul.f32 %v896, %v901
    %v907 = vmul.f32 %v897, %v903
    %v908 = vadd.f32 %v894, %v906
    %v909 = vadd.f32 %v895, %v907
    %912 = vrot.lane.b32.xlu0 %v908, 64
    %v913 = vpop.permute.xlu0 %912
    %914 = vrot.lane.b32.xlu0 %v909, 64
    %v915 = vpop.permute.xlu0 %914
    %918 = vst.msk [vmem:[#allocation4 + $0x5] sm:$0x1] %vm371, %v913
    %919 = vst.msk [vmem:[#allocation4 + $0xd] sm:$0x1] %vm371, %v915
    %v920 = vld [vmem:[#allocation2 + $0x6] sm:$0x1]
    %v921 = vld [vmem:[#allocation2 + $0xe] sm:$0x1]
    %v922 = vld [vmem:[#allocation3 + $0x6] sm:$0x1]
    %v923 = vld [vmem:[#allocation3 + $0xe] sm:$0x1]
    %v924 = vrot.slane %v885, 7
    %v925 = vsel %vm379, %v924, %v884
    %926 = vrot.lane.b32.xlu0 %v925, 96
    %v927 = vpop.permute.xlu0 %926
    %v929 = vmul.f32 %v257, %v927
    %v931 = vrot.slane %v929, 1
    %932 = vrot.lane.b32.xlu0 %v929, 32
    %v933 = vpop.permute.xlu0 %932
    %934 = vrot.lane.b32.xlu0 %v931, 32
    %v935 = vpop.permute.xlu0 %934
    %v938 = vadd.f32 %v920, %v933
    %v939 = vadd.f32 %v921, %v935
    %v940 = vadd.f32 %v938, %v271
    %v941 = vadd.f32 %v939, %v271
    %v942 = vxor.u32 %v940, 2147483648
    %v943 = vxor.u32 %v941, 2147483648
    %v944 = vmul.f32 %v942, 1.442695
    %v945 = vpow.pop %v944
    %v946 = vmul.f32 %v943, 1.442695
    %v947 = vpow.pop %v946
    %v948 = vadd.f32 %v945, 1.0
    %v949 = vadd.f32 %v947, 1.0
    %v950 = vrcp.pop %v948
    %v951 = vmul.f32 1.0, %v950
    %v952 = vrcp.pop %v949
    %v953 = vmul.f32 1.0, %v952
    %v954 = vmul.f32 %v290, %v927
    %v956 = vrot.slane %v954, 1
    %957 = vrot.lane.b32.xlu0 %v954, 64
    %v958 = vpop.permute.xlu0 %957
    %959 = vrot.lane.b32.xlu0 %v956, 64
    %v960 = vpop.permute.xlu0 %959
    %v963 = vadd.f32 %v920, %v958
    %v964 = vadd.f32 %v921, %v960
    %v965 = vadd.f32 %v963, %v304
    %v966 = vadd.f32 %v964, %v304
    %v967 = vxor.u32 %v965, 2147483648
    %v968 = vxor.u32 %v966, 2147483648
    %v969 = vmul.f32 %v967, 1.442695
    %v970 = vpow.pop %v969
    %v971 = vmul.f32 %v968, 1.442695
    %v972 = vpow.pop %v971
    %v973 = vadd.f32 %v970, 1.0
    %v974 = vadd.f32 %v972, 1.0
    %v975 = vrcp.pop %v973
    %v976 = vmul.f32 1.0, %v975
    %v977 = vrcp.pop %v974
    %v978 = vmul.f32 1.0, %v977
    %v979 = vmul.f32 %v951, %v884
    %v980 = vmul.f32 %v953, %v885
    %v981 = vsub.f32 1.0, %v951
    %v982 = vsub.f32 1.0, %v953
    %985 = vrot.lane.b32.xlu0 %v920, 32
    %v986 = vpop.permute.xlu0 %985
    %987 = vrot.lane.b32.xlu0 %v921, 32
    %v988 = vpop.permute.xlu0 %987
    %v991 = vmul.f32 %v981, %v986
    %v992 = vmul.f32 %v982, %v988
    %v993 = vadd.f32 %v979, %v991
    %v994 = vadd.f32 %v980, %v992
    %997 = vrot.lane.b32.xlu0 %v993, 32
    %v998 = vpop.permute.xlu0 %997
    %999 = vrot.lane.b32.xlu0 %v994, 32
    %v1000 = vpop.permute.xlu0 %999
    %v1003 = vmul.f32 %v976, %v998
    %v1004 = vmul.f32 %v978, %v1000
    %v1005 = vsub.f32 1.0, %v976
    %v1006 = vsub.f32 1.0, %v978
    %1009 = vrot.lane.b32.xlu0 %v922, 64
    %v1010 = vpop.permute.xlu0 %1009
    %1011 = vrot.lane.b32.xlu0 %v923, 64
    %v1012 = vpop.permute.xlu0 %1011
    %v1015 = vmul.f32 %v1005, %v1010
    %v1016 = vmul.f32 %v1006, %v1012
    %v1017 = vadd.f32 %v1003, %v1015
    %v1018 = vadd.f32 %v1004, %v1016
    %1021 = vrot.lane.b32.xlu0 %v1017, 64
    %v1022 = vpop.permute.xlu0 %1021
    %1023 = vrot.lane.b32.xlu0 %v1018, 64
    %v1024 = vpop.permute.xlu0 %1023
    %1027 = vst.msk [vmem:[#allocation4 + $0x6] sm:$0x1] %vm371, %v1022
    %1028 = vst.msk [vmem:[#allocation4 + $0xe] sm:$0x1] %vm371, %v1024
    %v1029 = vld [vmem:[#allocation2 + $0x7] sm:$0x1]
    %v1030 = vld [vmem:[#allocation2 + $0xf] sm:$0x1]
    %v1031 = vld [vmem:[#allocation3 + $0x7] sm:$0x1]
    %v1032 = vld [vmem:[#allocation3 + $0xf] sm:$0x1]
    %v1033 = vrot.slane %v994, 7
    %v1034 = vsel %vm379, %v1033, %v993
    %1035 = vrot.lane.b32.xlu0 %v1034, 96
    %v1036 = vpop.permute.xlu0 %1035
    %v1038 = vmul.f32 %v257, %v1036
    %v1040 = vrot.slane %v1038, 1
    %1041 = vrot.lane.b32.xlu0 %v1038, 32
    %v1042 = vpop.permute.xlu0 %1041
    %1043 = vrot.lane.b32.xlu0 %v1040, 32
    %v1044 = vpop.permute.xlu0 %1043
    %v1047 = vadd.f32 %v1029, %v1042
    %v1048 = vadd.f32 %v1030, %v1044
    %v1049 = vadd.f32 %v1047, %v271
    %v1050 = vadd.f32 %v1048, %v271
    %v1051 = vxor.u32 %v1049, 2147483648
    %v1052 = vxor.u32 %v1050, 2147483648
    %v1053 = vmul.f32 %v1051, 1.442695
    %v1054 = vpow.pop %v1053
    %v1055 = vmul.f32 %v1052, 1.442695
    %v1056 = vpow.pop %v1055
    %v1057 = vadd.f32 %v1054, 1.0
    %v1058 = vadd.f32 %v1056, 1.0
    %v1059 = vrcp.pop %v1057
    %v1060 = vmul.f32 1.0, %v1059
    %v1061 = vrcp.pop %v1058
    %v1062 = vmul.f32 1.0, %v1061
    %v1063 = vmul.f32 %v290, %v1036
    %v1065 = vrot.slane %v1063, 1
    %1066 = vrot.lane.b32.xlu0 %v1063, 64
    %v1067 = vpop.permute.xlu0 %1066
    %1068 = vrot.lane.b32.xlu0 %v1065, 64
    %v1069 = vpop.permute.xlu0 %1068
    %v1072 = vadd.f32 %v1029, %v1067
    %v1073 = vadd.f32 %v1030, %v1069
    %v1074 = vadd.f32 %v1072, %v304
    %v1075 = vadd.f32 %v1073, %v304
    %v1076 = vxor.u32 %v1074, 2147483648
    %v1077 = vxor.u32 %v1075, 2147483648
    %v1078 = vmul.f32 %v1076, 1.442695
    %v1079 = vpow.pop %v1078
    %v1080 = vmul.f32 %v1077, 1.442695
    %v1081 = vpow.pop %v1080
    %v1082 = vadd.f32 %v1079, 1.0
    %v1083 = vadd.f32 %v1081, 1.0
    %v1084 = vrcp.pop %v1082
    %v1085 = vmul.f32 1.0, %v1084
    %v1086 = vrcp.pop %v1083
    %v1087 = vmul.f32 1.0, %v1086
    %v1088 = vmul.f32 %v1060, %v993
    %v1089 = vmul.f32 %v1062, %v994
    %v1090 = vsub.f32 1.0, %v1060
    %v1091 = vsub.f32 1.0, %v1062
    %1094 = vrot.lane.b32.xlu0 %v1029, 32
    %v1095 = vpop.permute.xlu0 %1094
    %1096 = vrot.lane.b32.xlu0 %v1030, 32
    %v1097 = vpop.permute.xlu0 %1096
    %v1100 = vmul.f32 %v1090, %v1095
    %v1101 = vmul.f32 %v1091, %v1097
    %v1102 = vadd.f32 %v1088, %v1100
    %v1103 = vadd.f32 %v1089, %v1101
    %1106 = vrot.lane.b32.xlu0 %v1102, 32
    %v1107 = vpop.permute.xlu0 %1106
    %1108 = vrot.lane.b32.xlu0 %v1103, 32
    %v1109 = vpop.permute.xlu0 %1108
    %v1112 = vmul.f32 %v1085, %v1107
    %v1113 = vmul.f32 %v1087, %v1109
    %v1114 = vsub.f32 1.0, %v1085
    %v1115 = vsub.f32 1.0, %v1087
    %1118 = vrot.lane.b32.xlu0 %v1031, 64
    %v1119 = vpop.permute.xlu0 %1118
    %1120 = vrot.lane.b32.xlu0 %v1032, 64
    %v1121 = vpop.permute.xlu0 %1120
    %v1124 = vmul.f32 %v1114, %v1119
    %v1125 = vmul.f32 %v1115, %v1121
    %v1126 = vadd.f32 %v1112, %v1124
    %v1127 = vadd.f32 %v1113, %v1125
    %1130 = vrot.lane.b32.xlu0 %v1126, 64
    %v1131 = vpop.permute.xlu0 %1130
    %1132 = vrot.lane.b32.xlu0 %v1127, 64
    %v1133 = vpop.permute.xlu0 %1132
    %1136 = vst.msk [vmem:[#allocation4 + $0x7] sm:$0x1] %vm371, %v1131
    %1137 = vst.msk [vmem:[#allocation4 + $0xf] sm:$0x1] %vm371, %v1133
    %v1138 = vld [vmem:[#allocation4] sm:$0xff]
    %v1139 = vld [vmem:[#allocation4 + $0x8] sm:$0xff]
    %s1140 = scalar_lea.vmem %s5, 32
    %v1141 = vld [vmem:[%s1140] sm:$0xff]
    %v1142 = vld [vmem:[%s1140 + $0x8] sm:$0xff]
    %v1143 = vld [vmem:[%s1140 + $0x10] sm:$0xff]
    %v1144 = vld [vmem:[%s1140 + $0x18] sm:$0xff]
    %v1146 = vsel %vm146, %v1138, 0
    %v1149 = vsel %vm146, %v1139, 0
    %1151 = vmatprep.subr.mxu0 0.0
    %1152 = vmatpush1.msra.mxu0 0.0
    %1153 = vmatprep.subr.mxu0 0.0
    %1154 = vmatpush1.msra.mxu0 0.0
    %1155 = vmatprep.subr.mxu0 0.0
    %1156 = vmatpush1.msra.mxu0 0.0
    %1157 = vmatprep.subr.mxu0 0.0
    %1158 = vmatpush1.msra.mxu0 0.0
    %1159 = vmatprep.subr.mxu0 0.0
    %1160 = vmatpush1.msra.mxu0 0.0
    %1161 = vmatprep.subr.mxu0 0.0
    %1162 = vmatpush1.msra.mxu0 0.0
    %1163 = vmatprep.subr.mxu0 0.0
    %1164 = vmatpush1.msra.mxu0 0.0
    %1165 = vmatprep.subr.mxu0 0.0
    %1166 = vmatpush1.msra.mxu0 0.0
    %1167 = vmatprep.subr.mxu0 0.0
    %1168 = vmatpush1.msra.mxu0 0.0
    %1169 = vmatprep.subr.mxu0 0.0
    %1170 = vmatpush1.msra.mxu0 0.0
    %1171 = vmatprep.subr.mxu0 0.0
    %1172 = vmatpush1.msra.mxu0 0.0
    %1173 = vmatprep.subr.mxu0 0.0
    %1174 = vmatpush1.msra.mxu0 0.0
    %1175 = vmatprep.subr.mxu0 0.0
    %1176 = vmatpush1.msra.mxu0 %v1144
    %1177 = vmatprep.subr.mxu0 0.0
    %1178 = vmatpush1.msra.mxu0 %v1143
    %1179 = vmatprep.subr.mxu0 0.0
    %1180 = vmatpush1.msra.mxu0 %v1142
    %1181 = vmatprep.subr.mxu0 0.0
    %1182 = vmatpush1.msra.mxu0 %v1141
    %1183 = vmatprep.subr.mxu0 0.0
    %1184 = vmatpush2.msra.mxu0 0.0
    %1185 = vmatprep.subr.mxu0 0.0
    %1186 = vmatpush2.msra.mxu0 0.0
    %1187 = vmatprep.subr.mxu0 0.0
    %1188 = vmatpush2.msra.mxu0 0.0
    %1189 = vmatprep.subr.mxu0 0.0
    %1190 = vmatpush2.msra.mxu0 0.0
    %1191 = vmatprep.subr.mxu0 0.0
    %1192 = vmatpush2.msra.mxu0 0.0
    %1193 = vmatprep.subr.mxu0 0.0
    %1194 = vmatpush2.msra.mxu0 0.0
    %1195 = vmatprep.subr.mxu0 0.0
    %1196 = vmatpush2.msra.mxu0 0.0
    %1197 = vmatprep.subr.mxu0 0.0
    %1198 = vmatpush2.msra.mxu0 0.0
    %1199 = vmatprep.subr.mxu0 0.0
    %1200 = vmatpush2.msra.mxu0 0.0
    %1201 = vmatprep.subr.mxu0 0.0
    %1202 = vmatpush2.msra.mxu0 0.0
    %1203 = vmatprep.subr.mxu0 0.0
    %1204 = vmatpush2.msra.mxu0 0.0
    %1205 = vmatprep.subr.mxu0 0.0
    %1206 = vmatpush2.msra.mxu0 0.0
    %1207 = vmatprep.subr.mxu0 0.0
    %1208 = vmatpush2.msra.mxu0 0.0
    %1209 = vmatprep.subr.mxu0 0.0
    %1210 = vmatpush2.msra.mxu0 0.0
    %1211 = vmatprep.subr.mxu0 0.0
    %1212 = vmatpush2.msra.mxu0 0.0
    %1213 = vmatprep.subr.mxu0 0.0
    %1214 = vmatpush2.msra.mxu0 0.0
    %1215 = vmatprep.mubr.f32.mxu0 0.0
    %1216 = vmatmul.mubr.f32.gmra.mxu0 %v1146
    %v1217 = vpop.f32.mrf.mxu0
    %v1218 = vadd.f32 0.0, %v1217
    %v1219 = vpop.f32.mrf.mxu0
    %1220 = vmatprep.mubr.f32.mxu0 0.0
    %1221 = vmatmul.mubr.f32.gmra.mxu0 %v1149
    %v1222 = vpop.f32.mrf.mxu0
    %v1223 = vadd.f32 0.0, %v1222
    %v1224 = vpop.f32.mrf.mxu0
    %1225 = vdwg.mxu0
    %1226 = vst.msk [vmem:[#allocation2] sm:$0xff] %vm247, %v1218
    %1227 = vst.msk [vmem:[#allocation2 + $0x8] sm:$0xff] %vm247, %v1223
    %v1228 = vld [vmem:[#allocation2] sm:$0x1]
    %v1229 = vld [vmem:[#allocation2 + $0x8] sm:$0x1]
    %v1230 = vld [vmem:[#allocation4] sm:$0x1]
    %v1231 = vld [vmem:[#allocation4 + $0x8] sm:$0x1]
    %v1232 = vlaneseq
    %v1233 = vshrl.u32 %v1232, 7
    %v1234 = vsub.s32 1, %v1233
    %v1235 = vrot.slane %v156, %v1234
    %v1236 = vmul.f32 %v1235, %v154
    %1238 = vrot.lane.b32.xlu0 %v1236, 32
    %v1239 = vpop.permute.xlu0 %1238
    %v1241 = vadd.f32 %v1228, %v1239
    %v1242 = vadd.f32 %v1229, %v1239
    %v1243 = vlaneseq
    %v1244 = vshrl.u32 %v1243, 7
    %v1245 = vsub.s32 1, %v1244
    %v1246 = vrot.slane %v158, %v1245
    %1248 = vrot.lane.b32.xlu0 %v1246, 32
    %v1249 = vpop.permute.xlu0 %1248
    %v1251 = vadd.f32 %v1241, %v1249
    %v1252 = vadd.f32 %v1242, %v1249
    %v1253 = vxor.u32 %v1251, 2147483648
    %v1254 = vxor.u32 %v1252, 2147483648
    %v1255 = vmul.f32 %v1253, 1.442695
    %v1256 = vpow.pop %v1255
    %v1257 = vmul.f32 %v1254, 1.442695
    %v1258 = vpow.pop %v1257
    %v1259 = vadd.f32 %v1256, 1.0
    %v1260 = vadd.f32 %v1258, 1.0
    %v1261 = vrcp.pop %v1259
    %v1262 = vmul.f32 1.0, %v1261
    %v1263 = vrcp.pop %v1260
    %v1264 = vmul.f32 1.0, %v1263
    %v1265 = vlaneseq
    %v1266 = vshrl.u32 %v1265, 7
    %v1267 = vsub.s32 1, %v1266
    %v1268 = vrot.slane %v157, %v1267
    %v1269 = vmul.f32 %v1268, %v154
    %1271 = vrot.lane.b32.xlu0 %v1269, 64
    %v1272 = vpop.permute.xlu0 %1271
    %v1274 = vadd.f32 %v1228, %v1272
    %v1275 = vadd.f32 %v1229, %v1272
    %v1276 = vlaneseq
    %v1277 = vshrl.u32 %v1276, 7
    %v1278 = vsub.s32 1, %v1277
    %v1279 = vrot.slane %v159, %v1278
    %1281 = vrot.lane.b32.xlu0 %v1279, 64
    %v1282 = vpop.permute.xlu0 %1281
    %v1284 = vadd.f32 %v1274, %v1282
    %v1285 = vadd.f32 %v1275, %v1282
    %v1286 = vxor.u32 %v1284, 2147483648
    %v1287 = vxor.u32 %v1285, 2147483648
    %v1288 = vmul.f32 %v1286, 1.442695
    %v1289 = vpow.pop %v1288
    %v1290 = vmul.f32 %v1287, 1.442695
    %v1291 = vpow.pop %v1290
    %v1292 = vadd.f32 %v1289, 1.0
    %v1293 = vadd.f32 %v1291, 1.0
    %v1294 = vrcp.pop %v1292
    %v1295 = vmul.f32 1.0, %v1294
    %v1296 = vrcp.pop %v1293
    %v1297 = vmul.f32 1.0, %v1296
    %v1298 = vmul.f32 %v1262, %v321
    %v1299 = vmul.f32 %v1264, %v321
    %v1300 = vsub.f32 1.0, %v1262
    %v1301 = vsub.f32 1.0, %v1264
    %1304 = vrot.lane.b32.xlu0 %v1228, 32
    %v1305 = vpop.permute.xlu0 %1304
    %1306 = vrot.lane.b32.xlu0 %v1229, 32
    %v1307 = vpop.permute.xlu0 %1306
    %v1310 = vmul.f32 %v1300, %v1305
    %v1311 = vmul.f32 %v1301, %v1307
    %v1312 = vadd.f32 %v1298, %v1310
    %v1313 = vadd.f32 %v1299, %v1311
    %1316 = vrot.lane.b32.xlu0 %v1312, 32
    %v1317 = vpop.permute.xlu0 %1316
    %1318 = vrot.lane.b32.xlu0 %v1313, 32
    %v1319 = vpop.permute.xlu0 %1318
    %v1322 = vmul.f32 %v1295, %v1317
    %v1323 = vmul.f32 %v1297, %v1319
    %v1324 = vsub.f32 1.0, %v1295
    %v1325 = vsub.f32 1.0, %v1297
    %1328 = vrot.lane.b32.xlu0 %v1230, 64
    %v1329 = vpop.permute.xlu0 %1328
    %1330 = vrot.lane.b32.xlu0 %v1231, 64
    %v1331 = vpop.permute.xlu0 %1330
    %v1334 = vmul.f32 %v1324, %v1329
    %v1335 = vmul.f32 %v1325, %v1331
    %v1336 = vadd.f32 %v1322, %v1334
    %v1337 = vadd.f32 %v1323, %v1335
    %1340 = vrot.lane.b32.xlu0 %v1336, 64
    %v1341 = vpop.permute.xlu0 %1340
    %1342 = vrot.lane.b32.xlu0 %v1337, 64
    %v1343 = vpop.permute.xlu0 %1342
    %1346 = vst.msk [vmem:[#allocation3] sm:$0x1] %vm371, %v1341
    %1347 = vst.msk [vmem:[#allocation3 + $0x8] sm:$0x1] %vm371, %v1343
    %v1348 = vld [vmem:[#allocation2 + $0x1] sm:$0x1]
    %v1349 = vld [vmem:[#allocation2 + $0x9] sm:$0x1]
    %v1350 = vld [vmem:[#allocation4 + $0x1] sm:$0x1]
    %v1351 = vld [vmem:[#allocation4 + $0x9] sm:$0x1]
    %v1352 = vrot.slane %v1313, 7
    %v1353 = vsel %vm379, %v1352, %v1312
    %1354 = vrot.lane.b32.xlu0 %v1353, 96
    %v1355 = vpop.permute.xlu0 %1354
    %v1357 = vmul.f32 %v1235, %v1355
    %v1359 = vrot.slane %v1357, 1
    %1360 = vrot.lane.b32.xlu0 %v1357, 32
    %v1361 = vpop.permute.xlu0 %1360
    %1362 = vrot.lane.b32.xlu0 %v1359, 32
    %v1363 = vpop.permute.xlu0 %1362
    %v1366 = vadd.f32 %v1348, %v1361
    %v1367 = vadd.f32 %v1349, %v1363
    %v1368 = vadd.f32 %v1366, %v1249
    %v1369 = vadd.f32 %v1367, %v1249
    %v1370 = vxor.u32 %v1368, 2147483648
    %v1371 = vxor.u32 %v1369, 2147483648
    %v1372 = vmul.f32 %v1370, 1.442695
    %v1373 = vpow.pop %v1372
    %v1374 = vmul.f32 %v1371, 1.442695
    %v1375 = vpow.pop %v1374
    %v1376 = vadd.f32 %v1373, 1.0
    %v1377 = vadd.f32 %v1375, 1.0
    %v1378 = vrcp.pop %v1376
    %v1379 = vmul.f32 1.0, %v1378
    %v1380 = vrcp.pop %v1377
    %v1381 = vmul.f32 1.0, %v1380
    %v1382 = vmul.f32 %v1268, %v1355
    %v1384 = vrot.slane %v1382, 1
    %1385 = vrot.lane.b32.xlu0 %v1382, 64
    %v1386 = vpop.permute.xlu0 %1385
    %1387 = vrot.lane.b32.xlu0 %v1384, 64
    %v1388 = vpop.permute.xlu0 %1387
    %v1391 = vadd.f32 %v1348, %v1386
    %v1392 = vadd.f32 %v1349, %v1388
    %v1393 = vadd.f32 %v1391, %v1282
    %v1394 = vadd.f32 %v1392, %v1282
    %v1395 = vxor.u32 %v1393, 2147483648
    %v1396 = vxor.u32 %v1394, 2147483648
    %v1397 = vmul.f32 %v1395, 1.442695
    %v1398 = vpow.pop %v1397
    %v1399 = vmul.f32 %v1396, 1.442695
    %v1400 = vpow.pop %v1399
    %v1401 = vadd.f32 %v1398, 1.0
    %v1402 = vadd.f32 %v1400, 1.0
    %v1403 = vrcp.pop %v1401
    %v1404 = vmul.f32 1.0, %v1403
    %v1405 = vrcp.pop %v1402
    %v1406 = vmul.f32 1.0, %v1405
    %v1407 = vmul.f32 %v1379, %v1312
    %v1408 = vmul.f32 %v1381, %v1313
    %v1409 = vsub.f32 1.0, %v1379
    %v1410 = vsub.f32 1.0, %v1381
    %1413 = vrot.lane.b32.xlu0 %v1348, 32
    %v1414 = vpop.permute.xlu0 %1413
    %1415 = vrot.lane.b32.xlu0 %v1349, 32
    %v1416 = vpop.permute.xlu0 %1415
    %v1419 = vmul.f32 %v1409, %v1414
    %v1420 = vmul.f32 %v1410, %v1416
    %v1421 = vadd.f32 %v1407, %v1419
    %v1422 = vadd.f32 %v1408, %v1420
    %1425 = vrot.lane.b32.xlu0 %v1421, 32
    %v1426 = vpop.permute.xlu0 %1425
    %1427 = vrot.lane.b32.xlu0 %v1422, 32
    %v1428 = vpop.permute.xlu0 %1427
    %v1431 = vmul.f32 %v1404, %v1426
    %v1432 = vmul.f32 %v1406, %v1428
    %v1433 = vsub.f32 1.0, %v1404
    %v1434 = vsub.f32 1.0, %v1406
    %1437 = vrot.lane.b32.xlu0 %v1350, 64
    %v1438 = vpop.permute.xlu0 %1437
    %1439 = vrot.lane.b32.xlu0 %v1351, 64
    %v1440 = vpop.permute.xlu0 %1439
    %v1443 = vmul.f32 %v1433, %v1438
    %v1444 = vmul.f32 %v1434, %v1440
    %v1445 = vadd.f32 %v1431, %v1443
    %v1446 = vadd.f32 %v1432, %v1444
    %1449 = vrot.lane.b32.xlu0 %v1445, 64
    %v1450 = vpop.permute.xlu0 %1449
    %1451 = vrot.lane.b32.xlu0 %v1446, 64
    %v1452 = vpop.permute.xlu0 %1451
    %1455 = vst.msk [vmem:[#allocation3 + $0x1] sm:$0x1] %vm371, %v1450
    %1456 = vst.msk [vmem:[#allocation3 + $0x9] sm:$0x1] %vm371, %v1452
    %v1457 = vld [vmem:[#allocation2 + $0x2] sm:$0x1]
    %v1458 = vld [vmem:[#allocation2 + $0xa] sm:$0x1]
    %v1459 = vld [vmem:[#allocation4 + $0x2] sm:$0x1]
    %v1460 = vld [vmem:[#allocation4 + $0xa] sm:$0x1]
    %v1461 = vrot.slane %v1422, 7
    %v1462 = vsel %vm379, %v1461, %v1421
    %1463 = vrot.lane.b32.xlu0 %v1462, 96
    %v1464 = vpop.permute.xlu0 %1463
    %v1466 = vmul.f32 %v1235, %v1464
    %v1468 = vrot.slane %v1466, 1
    %1469 = vrot.lane.b32.xlu0 %v1466, 32
    %v1470 = vpop.permute.xlu0 %1469
    %1471 = vrot.lane.b32.xlu0 %v1468, 32
    %v1472 = vpop.permute.xlu0 %1471
    %v1475 = vadd.f32 %v1457, %v1470
    %v1476 = vadd.f32 %v1458, %v1472
    %v1477 = vadd.f32 %v1475, %v1249
    %v1478 = vadd.f32 %v1476, %v1249
    %v1479 = vxor.u32 %v1477, 2147483648
    %v1480 = vxor.u32 %v1478, 2147483648
    %v1481 = vmul.f32 %v1479, 1.442695
    %v1482 = vpow.pop %v1481
    %v1483 = vmul.f32 %v1480, 1.442695
    %v1484 = vpow.pop %v1483
    %v1485 = vadd.f32 %v1482, 1.0
    %v1486 = vadd.f32 %v1484, 1.0
    %v1487 = vrcp.pop %v1485
    %v1488 = vmul.f32 1.0, %v1487
    %v1489 = vrcp.pop %v1486
    %v1490 = vmul.f32 1.0, %v1489
    %v1491 = vmul.f32 %v1268, %v1464
    %v1493 = vrot.slane %v1491, 1
    %1494 = vrot.lane.b32.xlu0 %v1491, 64
    %v1495 = vpop.permute.xlu0 %1494
    %1496 = vrot.lane.b32.xlu0 %v1493, 64
    %v1497 = vpop.permute.xlu0 %1496
    %v1500 = vadd.f32 %v1457, %v1495
    %v1501 = vadd.f32 %v1458, %v1497
    %v1502 = vadd.f32 %v1500, %v1282
    %v1503 = vadd.f32 %v1501, %v1282
    %v1504 = vxor.u32 %v1502, 2147483648
    %v1505 = vxor.u32 %v1503, 2147483648
    %v1506 = vmul.f32 %v1504, 1.442695
    %v1507 = vpow.pop %v1506
    %v1508 = vmul.f32 %v1505, 1.442695
    %v1509 = vpow.pop %v1508
    %v1510 = vadd.f32 %v1507, 1.0
    %v1511 = vadd.f32 %v1509, 1.0
    %v1512 = vrcp.pop %v1510
    %v1513 = vmul.f32 1.0, %v1512
    %v1514 = vrcp.pop %v1511
    %v1515 = vmul.f32 1.0, %v1514
    %v1516 = vmul.f32 %v1488, %v1421
    %v1517 = vmul.f32 %v1490, %v1422
    %v1518 = vsub.f32 1.0, %v1488
    %v1519 = vsub.f32 1.0, %v1490
    %1522 = vrot.lane.b32.xlu0 %v1457, 32
    %v1523 = vpop.permute.xlu0 %1522
    %1524 = vrot.lane.b32.xlu0 %v1458, 32
    %v1525 = vpop.permute.xlu0 %1524
    %v1528 = vmul.f32 %v1518, %v1523
    %v1529 = vmul.f32 %v1519, %v1525
    %v1530 = vadd.f32 %v1516, %v1528
    %v1531 = vadd.f32 %v1517, %v1529
    %1534 = vrot.lane.b32.xlu0 %v1530, 32
    %v1535 = vpop.permute.xlu0 %1534
    %1536 = vrot.lane.b32.xlu0 %v1531, 32
    %v1537 = vpop.permute.xlu0 %1536
    %v1540 = vmul.f32 %v1513, %v1535
    %v1541 = vmul.f32 %v1515, %v1537
    %v1542 = vsub.f32 1.0, %v1513
    %v1543 = vsub.f32 1.0, %v1515
    %1546 = vrot.lane.b32.xlu0 %v1459, 64
    %v1547 = vpop.permute.xlu0 %1546
    %1548 = vrot.lane.b32.xlu0 %v1460, 64
    %v1549 = vpop.permute.xlu0 %1548
    %v1552 = vmul.f32 %v1542, %v1547
    %v1553 = vmul.f32 %v1543, %v1549
    %v1554 = vadd.f32 %v1540, %v1552
    %v1555 = vadd.f32 %v1541, %v1553
    %1558 = vrot.lane.b32.xlu0 %v1554, 64
    %v1559 = vpop.permute.xlu0 %1558
    %1560 = vrot.lane.b32.xlu0 %v1555, 64
    %v1561 = vpop.permute.xlu0 %1560
    %1564 = vst.msk [vmem:[#allocation3 + $0x2] sm:$0x1] %vm371, %v1559
    %1565 = vst.msk [vmem:[#allocation3 + $0xa] sm:$0x1] %vm371, %v1561
    %v1566 = vld [vmem:[#allocation2 + $0x3] sm:$0x1]
    %v1567 = vld [vmem:[#allocation2 + $0xb] sm:$0x1]
    %v1568 = vld [vmem:[#allocation4 + $0x3] sm:$0x1]
    %v1569 = vld [vmem:[#allocation4 + $0xb] sm:$0x1]
    %v1570 = vrot.slane %v1531, 7
    %v1571 = vsel %vm379, %v1570, %v1530
    %1572 = vrot.lane.b32.xlu0 %v1571, 96
    %v1573 = vpop.permute.xlu0 %1572
    %v1575 = vmul.f32 %v1235, %v1573
    %v1577 = vrot.slane %v1575, 1
    %1578 = vrot.lane.b32.xlu0 %v1575, 32
    %v1579 = vpop.permute.xlu0 %1578
    %1580 = vrot.lane.b32.xlu0 %v1577, 32
    %v1581 = vpop.permute.xlu0 %1580
    %v1584 = vadd.f32 %v1566, %v1579
    %v1585 = vadd.f32 %v1567, %v1581
    %v1586 = vadd.f32 %v1584, %v1249
    %v1587 = vadd.f32 %v1585, %v1249
    %v1588 = vxor.u32 %v1586, 2147483648
    %v1589 = vxor.u32 %v1587, 2147483648
    %v1590 = vmul.f32 %v1588, 1.442695
    %v1591 = vpow.pop %v1590
    %v1592 = vmul.f32 %v1589, 1.442695
    %v1593 = vpow.pop %v1592
    %v1594 = vadd.f32 %v1591, 1.0
    %v1595 = vadd.f32 %v1593, 1.0
    %v1596 = vrcp.pop %v1594
    %v1597 = vmul.f32 1.0, %v1596
    %v1598 = vrcp.pop %v1595
    %v1599 = vmul.f32 1.0, %v1598
    %v1600 = vmul.f32 %v1268, %v1573
    %v1602 = vrot.slane %v1600, 1
    %1603 = vrot.lane.b32.xlu0 %v1600, 64
    %v1604 = vpop.permute.xlu0 %1603
    %1605 = vrot.lane.b32.xlu0 %v1602, 64
    %v1606 = vpop.permute.xlu0 %1605
    %v1609 = vadd.f32 %v1566, %v1604
    %v1610 = vadd.f32 %v1567, %v1606
    %v1611 = vadd.f32 %v1609, %v1282
    %v1612 = vadd.f32 %v1610, %v1282
    %v1613 = vxor.u32 %v1611, 2147483648
    %v1614 = vxor.u32 %v1612, 2147483648
    %v1615 = vmul.f32 %v1613, 1.442695
    %v1616 = vpow.pop %v1615
    %v1617 = vmul.f32 %v1614, 1.442695
    %v1618 = vpow.pop %v1617
    %v1619 = vadd.f32 %v1616, 1.0
    %v1620 = vadd.f32 %v1618, 1.0
    %v1621 = vrcp.pop %v1619
    %v1622 = vmul.f32 1.0, %v1621
    %v1623 = vrcp.pop %v1620
    %v1624 = vmul.f32 1.0, %v1623
    %v1625 = vmul.f32 %v1597, %v1530
    %v1626 = vmul.f32 %v1599, %v1531
    %v1627 = vsub.f32 1.0, %v1597
    %v1628 = vsub.f32 1.0, %v1599
    %1631 = vrot.lane.b32.xlu0 %v1566, 32
    %v1632 = vpop.permute.xlu0 %1631
    %1633 = vrot.lane.b32.xlu0 %v1567, 32
    %v1634 = vpop.permute.xlu0 %1633
    %v1637 = vmul.f32 %v1627, %v1632
    %v1638 = vmul.f32 %v1628, %v1634
    %v1639 = vadd.f32 %v1625, %v1637
    %v1640 = vadd.f32 %v1626, %v1638
    %1643 = vrot.lane.b32.xlu0 %v1639, 32
    %v1644 = vpop.permute.xlu0 %1643
    %1645 = vrot.lane.b32.xlu0 %v1640, 32
    %v1646 = vpop.permute.xlu0 %1645
    %v1649 = vmul.f32 %v1622, %v1644
    %v1650 = vmul.f32 %v1624, %v1646
    %v1651 = vsub.f32 1.0, %v1622
    %v1652 = vsub.f32 1.0, %v1624
    %1655 = vrot.lane.b32.xlu0 %v1568, 64
    %v1656 = vpop.permute.xlu0 %1655
    %1657 = vrot.lane.b32.xlu0 %v1569, 64
    %v1658 = vpop.permute.xlu0 %1657
    %v1661 = vmul.f32 %v1651, %v1656
    %v1662 = vmul.f32 %v1652, %v1658
    %v1663 = vadd.f32 %v1649, %v1661
    %v1664 = vadd.f32 %v1650, %v1662
    %1667 = vrot.lane.b32.xlu0 %v1663, 64
    %v1668 = vpop.permute.xlu0 %1667
    %1669 = vrot.lane.b32.xlu0 %v1664, 64
    %v1670 = vpop.permute.xlu0 %1669
    %1673 = vst.msk [vmem:[#allocation3 + $0x3] sm:$0x1] %vm371, %v1668
    %1674 = vst.msk [vmem:[#allocation3 + $0xb] sm:$0x1] %vm371, %v1670
    %v1675 = vld [vmem:[#allocation2 + $0x4] sm:$0x1]
    %v1676 = vld [vmem:[#allocation2 + $0xc] sm:$0x1]
    %v1677 = vld [vmem:[#allocation4 + $0x4] sm:$0x1]
    %v1678 = vld [vmem:[#allocation4 + $0xc] sm:$0x1]
    %v1679 = vrot.slane %v1640, 7
    %v1680 = vsel %vm379, %v1679, %v1639
    %1681 = vrot.lane.b32.xlu0 %v1680, 96
    %v1682 = vpop.permute.xlu0 %1681
    %v1684 = vmul.f32 %v1235, %v1682
    %v1686 = vrot.slane %v1684, 1
    %1687 = vrot.lane.b32.xlu0 %v1684, 32
    %v1688 = vpop.permute.xlu0 %1687
    %1689 = vrot.lane.b32.xlu0 %v1686, 32
    %v1690 = vpop.permute.xlu0 %1689
    %v1693 = vadd.f32 %v1675, %v1688
    %v1694 = vadd.f32 %v1676, %v1690
    %v1695 = vadd.f32 %v1693, %v1249
    %v1696 = vadd.f32 %v1694, %v1249
    %v1697 = vxor.u32 %v1695, 2147483648
    %v1698 = vxor.u32 %v1696, 2147483648
    %v1699 = vmul.f32 %v1697, 1.442695
    %v1700 = vpow.pop %v1699
    %v1701 = vmul.f32 %v1698, 1.442695
    %v1702 = vpow.pop %v1701
    %v1703 = vadd.f32 %v1700, 1.0
    %v1704 = vadd.f32 %v1702, 1.0
    %v1705 = vrcp.pop %v1703
    %v1706 = vmul.f32 1.0, %v1705
    %v1707 = vrcp.pop %v1704
    %v1708 = vmul.f32 1.0, %v1707
    %v1709 = vmul.f32 %v1268, %v1682
    %v1711 = vrot.slane %v1709, 1
    %1712 = vrot.lane.b32.xlu0 %v1709, 64
    %v1713 = vpop.permute.xlu0 %1712
    %1714 = vrot.lane.b32.xlu0 %v1711, 64
    %v1715 = vpop.permute.xlu0 %1714
    %v1718 = vadd.f32 %v1675, %v1713
    %v1719 = vadd.f32 %v1676, %v1715
    %v1720 = vadd.f32 %v1718, %v1282
    %v1721 = vadd.f32 %v1719, %v1282
    %v1722 = vxor.u32 %v1720, 2147483648
    %v1723 = vxor.u32 %v1721, 2147483648
    %v1724 = vmul.f32 %v1722, 1.442695
    %v1725 = vpow.pop %v1724
    %v1726 = vmul.f32 %v1723, 1.442695
    %v1727 = vpow.pop %v1726
    %v1728 = vadd.f32 %v1725, 1.0
    %v1729 = vadd.f32 %v1727, 1.0
    %v1730 = vrcp.pop %v1728
    %v1731 = vmul.f32 1.0, %v1730
    %v1732 = vrcp.pop %v1729
    %v1733 = vmul.f32 1.0, %v1732
    %v1734 = vmul.f32 %v1706, %v1639
    %v1735 = vmul.f32 %v1708, %v1640
    %v1736 = vsub.f32 1.0, %v1706
    %v1737 = vsub.f32 1.0, %v1708
    %1740 = vrot.lane.b32.xlu0 %v1675, 32
    %v1741 = vpop.permute.xlu0 %1740
    %1742 = vrot.lane.b32.xlu0 %v1676, 32
    %v1743 = vpop.permute.xlu0 %1742
    %v1746 = vmul.f32 %v1736, %v1741
    %v1747 = vmul.f32 %v1737, %v1743
    %v1748 = vadd.f32 %v1734, %v1746
    %v1749 = vadd.f32 %v1735, %v1747
    %1752 = vrot.lane.b32.xlu0 %v1748, 32
    %v1753 = vpop.permute.xlu0 %1752
    %1754 = vrot.lane.b32.xlu0 %v1749, 32
    %v1755 = vpop.permute.xlu0 %1754
    %v1758 = vmul.f32 %v1731, %v1753
    %v1759 = vmul.f32 %v1733, %v1755
    %v1760 = vsub.f32 1.0, %v1731
    %v1761 = vsub.f32 1.0, %v1733
    %1764 = vrot.lane.b32.xlu0 %v1677, 64
    %v1765 = vpop.permute.xlu0 %1764
    %1766 = vrot.lane.b32.xlu0 %v1678, 64
    %v1767 = vpop.permute.xlu0 %1766
    %v1770 = vmul.f32 %v1760, %v1765
    %v1771 = vmul.f32 %v1761, %v1767
    %v1772 = vadd.f32 %v1758, %v1770
    %v1773 = vadd.f32 %v1759, %v1771
    %1776 = vrot.lane.b32.xlu0 %v1772, 64
    %v1777 = vpop.permute.xlu0 %1776
    %1778 = vrot.lane.b32.xlu0 %v1773, 64
    %v1779 = vpop.permute.xlu0 %1778
    %1782 = vst.msk [vmem:[#allocation3 + $0x4] sm:$0x1] %vm371, %v1777
    %1783 = vst.msk [vmem:[#allocation3 + $0xc] sm:$0x1] %vm371, %v1779
    %v1784 = vld [vmem:[#allocation2 + $0x5] sm:$0x1]
    %v1785 = vld [vmem:[#allocation2 + $0xd] sm:$0x1]
    %v1786 = vld [vmem:[#allocation4 + $0x5] sm:$0x1]
    %v1787 = vld [vmem:[#allocation4 + $0xd] sm:$0x1]
    %v1788 = vrot.slane %v1749, 7
    %v1789 = vsel %vm379, %v1788, %v1748
    %1790 = vrot.lane.b32.xlu0 %v1789, 96
    %v1791 = vpop.permute.xlu0 %1790
    %v1793 = vmul.f32 %v1235, %v1791
    %v1795 = vrot.slane %v1793, 1
    %1796 = vrot.lane.b32.xlu0 %v1793, 32
    %v1797 = vpop.permute.xlu0 %1796
    %1798 = vrot.lane.b32.xlu0 %v1795, 32
    %v1799 = vpop.permute.xlu0 %1798
    %v1802 = vadd.f32 %v1784, %v1797
    %v1803 = vadd.f32 %v1785, %v1799
    %v1804 = vadd.f32 %v1802, %v1249
    %v1805 = vadd.f32 %v1803, %v1249
    %v1806 = vxor.u32 %v1804, 2147483648
    %v1807 = vxor.u32 %v1805, 2147483648
    %v1808 = vmul.f32 %v1806, 1.442695
    %v1809 = vpow.pop %v1808
    %v1810 = vmul.f32 %v1807, 1.442695
    %v1811 = vpow.pop %v1810
    %v1812 = vadd.f32 %v1809, 1.0
    %v1813 = vadd.f32 %v1811, 1.0
    %v1814 = vrcp.pop %v1812
    %v1815 = vmul.f32 1.0, %v1814
    %v1816 = vrcp.pop %v1813
    %v1817 = vmul.f32 1.0, %v1816
    %v1818 = vmul.f32 %v1268, %v1791
    %v1820 = vrot.slane %v1818, 1
    %1821 = vrot.lane.b32.xlu0 %v1818, 64
    %v1822 = vpop.permute.xlu0 %1821
    %1823 = vrot.lane.b32.xlu0 %v1820, 64
    %v1824 = vpop.permute.xlu0 %1823
    %v1827 = vadd.f32 %v1784, %v1822
    %v1828 = vadd.f32 %v1785, %v1824
    %v1829 = vadd.f32 %v1827, %v1282
    %v1830 = vadd.f32 %v1828, %v1282
    %v1831 = vxor.u32 %v1829, 2147483648
    %v1832 = vxor.u32 %v1830, 2147483648
    %v1833 = vmul.f32 %v1831, 1.442695
    %v1834 = vpow.pop %v1833
    %v1835 = vmul.f32 %v1832, 1.442695
    %v1836 = vpow.pop %v1835
    %v1837 = vadd.f32 %v1834, 1.0
    %v1838 = vadd.f32 %v1836, 1.0
    %v1839 = vrcp.pop %v1837
    %v1840 = vmul.f32 1.0, %v1839
    %v1841 = vrcp.pop %v1838
    %v1842 = vmul.f32 1.0, %v1841
    %v1843 = vmul.f32 %v1815, %v1748
    %v1844 = vmul.f32 %v1817, %v1749
    %v1845 = vsub.f32 1.0, %v1815
    %v1846 = vsub.f32 1.0, %v1817
    %1849 = vrot.lane.b32.xlu0 %v1784, 32
    %v1850 = vpop.permute.xlu0 %1849
    %1851 = vrot.lane.b32.xlu0 %v1785, 32
    %v1852 = vpop.permute.xlu0 %1851
    %v1855 = vmul.f32 %v1845, %v1850
    %v1856 = vmul.f32 %v1846, %v1852
    %v1857 = vadd.f32 %v1843, %v1855
    %v1858 = vadd.f32 %v1844, %v1856
    %1861 = vrot.lane.b32.xlu0 %v1857, 32
    %v1862 = vpop.permute.xlu0 %1861
    %1863 = vrot.lane.b32.xlu0 %v1858, 32
    %v1864 = vpop.permute.xlu0 %1863
    %v1867 = vmul.f32 %v1840, %v1862
    %v1868 = vmul.f32 %v1842, %v1864
    %v1869 = vsub.f32 1.0, %v1840
    %v1870 = vsub.f32 1.0, %v1842
    %1873 = vrot.lane.b32.xlu0 %v1786, 64
    %v1874 = vpop.permute.xlu0 %1873
    %1875 = vrot.lane.b32.xlu0 %v1787, 64
    %v1876 = vpop.permute.xlu0 %1875
    %v1879 = vmul.f32 %v1869, %v1874
    %v1880 = vmul.f32 %v1870, %v1876
    %v1881 = vadd.f32 %v1867, %v1879
    %v1882 = vadd.f32 %v1868, %v1880
    %1885 = vrot.lane.b32.xlu0 %v1881, 64
    %v1886 = vpop.permute.xlu0 %1885
    %1887 = vrot.lane.b32.xlu0 %v1882, 64
    %v1888 = vpop.permute.xlu0 %1887
    %1891 = vst.msk [vmem:[#allocation3 + $0x5] sm:$0x1] %vm371, %v1886
    %1892 = vst.msk [vmem:[#allocation3 + $0xd] sm:$0x1] %vm371, %v1888
    %v1893 = vld [vmem:[#allocation2 + $0x6] sm:$0x1]
    %v1894 = vld [vmem:[#allocation2 + $0xe] sm:$0x1]
    %v1895 = vld [vmem:[#allocation4 + $0x6] sm:$0x1]
    %v1896 = vld [vmem:[#allocation4 + $0xe] sm:$0x1]
    %v1897 = vrot.slane %v1858, 7
    %v1898 = vsel %vm379, %v1897, %v1857
    %1899 = vrot.lane.b32.xlu0 %v1898, 96
    %v1900 = vpop.permute.xlu0 %1899
    %v1902 = vmul.f32 %v1235, %v1900
    %v1904 = vrot.slane %v1902, 1
    %1905 = vrot.lane.b32.xlu0 %v1902, 32
    %v1906 = vpop.permute.xlu0 %1905
    %1907 = vrot.lane.b32.xlu0 %v1904, 32
    %v1908 = vpop.permute.xlu0 %1907
    %v1911 = vadd.f32 %v1893, %v1906
    %v1912 = vadd.f32 %v1894, %v1908
    %v1913 = vadd.f32 %v1911, %v1249
    %v1914 = vadd.f32 %v1912, %v1249
    %v1915 = vxor.u32 %v1913, 2147483648
    %v1916 = vxor.u32 %v1914, 2147483648
    %v1917 = vmul.f32 %v1915, 1.442695
    %v1918 = vpow.pop %v1917
    %v1919 = vmul.f32 %v1916, 1.442695
    %v1920 = vpow.pop %v1919
    %v1921 = vadd.f32 %v1918, 1.0
    %v1922 = vadd.f32 %v1920, 1.0
    %v1923 = vrcp.pop %v1921
    %v1924 = vmul.f32 1.0, %v1923
    %v1925 = vrcp.pop %v1922
    %v1926 = vmul.f32 1.0, %v1925
    %v1927 = vmul.f32 %v1268, %v1900
    %v1929 = vrot.slane %v1927, 1
    %1930 = vrot.lane.b32.xlu0 %v1927, 64
    %v1931 = vpop.permute.xlu0 %1930
    %1932 = vrot.lane.b32.xlu0 %v1929, 64
    %v1933 = vpop.permute.xlu0 %1932
    %v1936 = vadd.f32 %v1893, %v1931
    %v1937 = vadd.f32 %v1894, %v1933
    %v1938 = vadd.f32 %v1936, %v1282
    %v1939 = vadd.f32 %v1937, %v1282
    %v1940 = vxor.u32 %v1938, 2147483648
    %v1941 = vxor.u32 %v1939, 2147483648
    %v1942 = vmul.f32 %v1940, 1.442695
    %v1943 = vpow.pop %v1942
    %v1944 = vmul.f32 %v1941, 1.442695
    %v1945 = vpow.pop %v1944
    %v1946 = vadd.f32 %v1943, 1.0
    %v1947 = vadd.f32 %v1945, 1.0
    %v1948 = vrcp.pop %v1946
    %v1949 = vmul.f32 1.0, %v1948
    %v1950 = vrcp.pop %v1947
    %v1951 = vmul.f32 1.0, %v1950
    %v1952 = vmul.f32 %v1924, %v1857
    %v1953 = vmul.f32 %v1926, %v1858
    %v1954 = vsub.f32 1.0, %v1924
    %v1955 = vsub.f32 1.0, %v1926
    %1958 = vrot.lane.b32.xlu0 %v1893, 32
    %v1959 = vpop.permute.xlu0 %1958
    %1960 = vrot.lane.b32.xlu0 %v1894, 32
    %v1961 = vpop.permute.xlu0 %1960
    %v1964 = vmul.f32 %v1954, %v1959
    %v1965 = vmul.f32 %v1955, %v1961
    %v1966 = vadd.f32 %v1952, %v1964
    %v1967 = vadd.f32 %v1953, %v1965
    %1970 = vrot.lane.b32.xlu0 %v1966, 32
    %v1971 = vpop.permute.xlu0 %1970
    %1972 = vrot.lane.b32.xlu0 %v1967, 32
    %v1973 = vpop.permute.xlu0 %1972
    %v1976 = vmul.f32 %v1949, %v1971
    %v1977 = vmul.f32 %v1951, %v1973
    %v1978 = vsub.f32 1.0, %v1949
    %v1979 = vsub.f32 1.0, %v1951
    %1982 = vrot.lane.b32.xlu0 %v1895, 64
    %v1983 = vpop.permute.xlu0 %1982
    %1984 = vrot.lane.b32.xlu0 %v1896, 64
    %v1985 = vpop.permute.xlu0 %1984
    %v1988 = vmul.f32 %v1978, %v1983
    %v1989 = vmul.f32 %v1979, %v1985
    %v1990 = vadd.f32 %v1976, %v1988
    %v1991 = vadd.f32 %v1977, %v1989
    %1994 = vrot.lane.b32.xlu0 %v1990, 64
    %v1995 = vpop.permute.xlu0 %1994
    %1996 = vrot.lane.b32.xlu0 %v1991, 64
    %v1997 = vpop.permute.xlu0 %1996
    %2000 = vst.msk [vmem:[#allocation3 + $0x6] sm:$0x1] %vm371, %v1995
    %2001 = vst.msk [vmem:[#allocation3 + $0xe] sm:$0x1] %vm371, %v1997
    %v2002 = vld [vmem:[#allocation2 + $0x7] sm:$0x1]
    %v2003 = vld [vmem:[#allocation2 + $0xf] sm:$0x1]
    %v2004 = vld [vmem:[#allocation4 + $0x7] sm:$0x1]
    %v2005 = vld [vmem:[#allocation4 + $0xf] sm:$0x1]
    %v2006 = vrot.slane %v1967, 7
    %v2007 = vsel %vm379, %v2006, %v1966
    %2008 = vrot.lane.b32.xlu0 %v2007, 96
    %v2009 = vpop.permute.xlu0 %2008
    %v2011 = vmul.f32 %v1235, %v2009
    %v2013 = vrot.slane %v2011, 1
    %2014 = vrot.lane.b32.xlu0 %v2011, 32
    %v2015 = vpop.permute.xlu0 %2014
    %2016 = vrot.lane.b32.xlu0 %v2013, 32
    %v2017 = vpop.permute.xlu0 %2016
    %v2020 = vadd.f32 %v2002, %v2015
    %v2021 = vadd.f32 %v2003, %v2017
    %v2022 = vadd.f32 %v2020, %v1249
    %v2023 = vadd.f32 %v2021, %v1249
    %v2024 = vxor.u32 %v2022, 2147483648
    %v2025 = vxor.u32 %v2023, 2147483648
    %v2026 = vmul.f32 %v2024, 1.442695
    %v2027 = vpow.pop %v2026
    %v2028 = vmul.f32 %v2025, 1.442695
    %v2029 = vpow.pop %v2028
    %v2030 = vadd.f32 %v2027, 1.0
    %v2031 = vadd.f32 %v2029, 1.0
    %v2032 = vrcp.pop %v2030
    %v2033 = vmul.f32 1.0, %v2032
    %v2034 = vrcp.pop %v2031
    %v2035 = vmul.f32 1.0, %v2034
    %v2036 = vmul.f32 %v1268, %v2009
    %v2038 = vrot.slane %v2036, 1
    %2039 = vrot.lane.b32.xlu0 %v2036, 64
    %v2040 = vpop.permute.xlu0 %2039
    %2041 = vrot.lane.b32.xlu0 %v2038, 64
    %v2042 = vpop.permute.xlu0 %2041
    %v2045 = vadd.f32 %v2002, %v2040
    %v2046 = vadd.f32 %v2003, %v2042
    %v2047 = vadd.f32 %v2045, %v1282
    %v2048 = vadd.f32 %v2046, %v1282
    %v2049 = vxor.u32 %v2047, 2147483648
    %v2050 = vxor.u32 %v2048, 2147483648
    %v2051 = vmul.f32 %v2049, 1.442695
    %v2052 = vpow.pop %v2051
    %v2053 = vmul.f32 %v2050, 1.442695
    %v2054 = vpow.pop %v2053
    %v2055 = vadd.f32 %v2052, 1.0
    %v2056 = vadd.f32 %v2054, 1.0
    %v2057 = vrcp.pop %v2055
    %v2058 = vmul.f32 1.0, %v2057
    %v2059 = vrcp.pop %v2056
    %v2060 = vmul.f32 1.0, %v2059
    %v2061 = vmul.f32 %v2033, %v1966
    %v2062 = vmul.f32 %v2035, %v1967
    %v2063 = vsub.f32 1.0, %v2033
    %v2064 = vsub.f32 1.0, %v2035
    %2067 = vrot.lane.b32.xlu0 %v2002, 32
    %v2068 = vpop.permute.xlu0 %2067
    %2069 = vrot.lane.b32.xlu0 %v2003, 32
    %v2070 = vpop.permute.xlu0 %2069
    %v2073 = vmul.f32 %v2063, %v2068
    %v2074 = vmul.f32 %v2064, %v2070
    %v2075 = vadd.f32 %v2061, %v2073
    %v2076 = vadd.f32 %v2062, %v2074
    %2079 = vrot.lane.b32.xlu0 %v2075, 32
    %v2080 = vpop.permute.xlu0 %2079
    %2081 = vrot.lane.b32.xlu0 %v2076, 32
    %v2082 = vpop.permute.xlu0 %2081
    %v2085 = vmul.f32 %v2058, %v2080
    %v2086 = vmul.f32 %v2060, %v2082
    %v2087 = vsub.f32 1.0, %v2058
    %v2088 = vsub.f32 1.0, %v2060
    %2091 = vrot.lane.b32.xlu0 %v2004, 64
    %v2092 = vpop.permute.xlu0 %2091
    %2093 = vrot.lane.b32.xlu0 %v2005, 64
    %v2094 = vpop.permute.xlu0 %2093
    %v2097 = vmul.f32 %v2087, %v2092
    %v2098 = vmul.f32 %v2088, %v2094
    %v2099 = vadd.f32 %v2085, %v2097
    %v2100 = vadd.f32 %v2086, %v2098
    %2103 = vrot.lane.b32.xlu0 %v2099, 64
    %v2104 = vpop.permute.xlu0 %2103
    %2105 = vrot.lane.b32.xlu0 %v2100, 64
    %v2106 = vpop.permute.xlu0 %2105
    %2109 = vst.msk [vmem:[#allocation3 + $0x7] sm:$0x1] %vm371, %v2104
    %2110 = vst.msk [vmem:[#allocation3 + $0xf] sm:$0x1] %vm371, %v2106
    %v2111 = vld [vmem:[#allocation3] sm:$0xff]
    %v2112 = vld [vmem:[#allocation3 + $0x8] sm:$0xff]
    %v2113 = vld [vmem:[%s10] sm:$0xff]
    %v2114 = vld [vmem:[%s10 + $0x8] sm:$0xff]
    %v2115 = vld [vmem:[%s10 + $0x10] sm:$0xff]
    %v2116 = vld [vmem:[%s10 + $0x18] sm:$0xff]
    %v2117 = vld [vmem:[%s11] sm:$0x1]
    %v2119 = vlaneseq
    %v2120 = vshrl.u32 %v2119, 7
    %v2121 = vsub.s32 0, %v2120
    %v2122 = vrot.slane %v2117, %v2121
    %v2125 = vsel %vm146, %v2111, 0
    %v2128 = vsel %vm146, %v2112, 0
    %2130 = vmatprep.subr.mxu0 0.0
    %2131 = vmatpush1.msra.mxu0 0.0
    %2132 = vmatprep.subr.mxu0 0.0
    %2133 = vmatpush1.msra.mxu0 0.0
    %2134 = vmatprep.subr.mxu0 0.0
    %2135 = vmatpush1.msra.mxu0 0.0
    %2136 = vmatprep.subr.mxu0 0.0
    %2137 = vmatpush1.msra.mxu0 0.0
    %2138 = vmatprep.subr.mxu0 0.0
    %2139 = vmatpush1.msra.mxu0 0.0
    %2140 = vmatprep.subr.mxu0 0.0
    %2141 = vmatpush1.msra.mxu0 0.0
    %2142 = vmatprep.subr.mxu0 0.0
    %2143 = vmatpush1.msra.mxu0 0.0
    %2144 = vmatprep.subr.mxu0 0.0
    %2145 = vmatpush1.msra.mxu0 0.0
    %2146 = vmatprep.subr.mxu0 0.0
    %2147 = vmatpush1.msra.mxu0 0.0
    %2148 = vmatprep.subr.mxu0 0.0
    %2149 = vmatpush1.msra.mxu0 0.0
    %2150 = vmatprep.subr.mxu0 0.0
    %2151 = vmatpush1.msra.mxu0 0.0
    %2152 = vmatprep.subr.mxu0 0.0
    %2153 = vmatpush1.msra.mxu0 0.0
    %2154 = vmatprep.subr.mxu0 0.0
    %2155 = vmatpush1.msra.mxu0 %v2116
    %2156 = vmatprep.subr.mxu0 0.0
    %2157 = vmatpush1.msra.mxu0 %v2115
    %2158 = vmatprep.subr.mxu0 0.0
    %2159 = vmatpush1.msra.mxu0 %v2114
    %2160 = vmatprep.subr.mxu0 0.0
    %2161 = vmatpush1.msra.mxu0 %v2113
    %2162 = vmatprep.subr.mxu0 0.0
    %2163 = vmatpush2.msra.mxu0 0.0
    %2164 = vmatprep.subr.mxu0 0.0
    %2165 = vmatpush2.msra.mxu0 0.0
    %2166 = vmatprep.subr.mxu0 0.0
    %2167 = vmatpush2.msra.mxu0 0.0
    %2168 = vmatprep.subr.mxu0 0.0
    %2169 = vmatpush2.msra.mxu0 0.0
    %2170 = vmatprep.subr.mxu0 0.0
    %2171 = vmatpush2.msra.mxu0 0.0
    %2172 = vmatprep.subr.mxu0 0.0
    %2173 = vmatpush2.msra.mxu0 0.0
    %2174 = vmatprep.subr.mxu0 0.0
    %2175 = vmatpush2.msra.mxu0 0.0
    %2176 = vmatprep.subr.mxu0 0.0
    %2177 = vmatpush2.msra.mxu0 0.0
    %2178 = vmatprep.subr.mxu0 0.0
    %2179 = vmatpush2.msra.mxu0 0.0
    %2180 = vmatprep.subr.mxu0 0.0
    %2181 = vmatpush2.msra.mxu0 0.0
    %2182 = vmatprep.subr.mxu0 0.0
    %2183 = vmatpush2.msra.mxu0 0.0
    %2184 = vmatprep.subr.mxu0 0.0
    %2185 = vmatpush2.msra.mxu0 0.0
    %2186 = vmatprep.subr.mxu0 0.0
    %2187 = vmatpush2.msra.mxu0 0.0
    %2188 = vmatprep.subr.mxu0 0.0
    %2189 = vmatpush2.msra.mxu0 0.0
    %2190 = vmatprep.subr.mxu0 0.0
    %2191 = vmatpush2.msra.mxu0 0.0
    %2192 = vmatprep.subr.mxu0 0.0
    %2193 = vmatpush2.msra.mxu0 0.0
    %2194 = vmatprep.mubr.f32.mxu0 0.0
    %2195 = vmatmul.mubr.f32.gmra.mxu0 %v2125
    %v2196 = vpop.f32.mrf.mxu0
    %v2197 = vadd.f32 %v2122, %v2196
    %v2198 = vpop.f32.mrf.mxu0
    %2199 = vmatprep.mubr.f32.mxu0 0.0
    %2200 = vmatmul.mubr.f32.gmra.mxu0 %v2128
    %v2201 = vpop.f32.mrf.mxu0
    %v2202 = vadd.f32 %v2122, %v2201
    %v2203 = vpop.f32.mrf.mxu0
    %2204 = vdwg.mxu0
    %v2205 = vmax.f32 %v2197, 0.0
    %v2206 = vmax.f32 %v2202, 0.0
    %v2207 = vld [vmem:[%s12] sm:$0xff]
    %v2208 = vld [vmem:[%s12 + $0x8] sm:$0xff]
    %v2209 = vld [vmem:[%s12 + $0x10] sm:$0xff]
    %v2210 = vld [vmem:[%s12 + $0x18] sm:$0xff]
    %v2211 = vld [vmem:[%s13] sm:$0x1]
    %v2213 = vlaneseq
    %v2214 = vshrl.u32 %v2213, 7
    %v2215 = vsub.s32 0, %v2214
    %v2216 = vrot.slane %v2211, %v2215
    %v2219 = vsel %vm146, %v2205, 0
    %v2222 = vsel %vm146, %v2206, 0
    %2224 = vmatprep.subr.mxu0 0.0
    %2225 = vmatpush1.msra.mxu0 0.0
    %2226 = vmatprep.subr.mxu0 0.0
    %2227 = vmatpush1.msra.mxu0 0.0
    %2228 = vmatprep.subr.mxu0 0.0
    %2229 = vmatpush1.msra.mxu0 0.0
    %2230 = vmatprep.subr.mxu0 0.0
    %2231 = vmatpush1.msra.mxu0 0.0
    %2232 = vmatprep.subr.mxu0 0.0
    %2233 = vmatpush1.msra.mxu0 0.0
    %2234 = vmatprep.subr.mxu0 0.0
    %2235 = vmatpush1.msra.mxu0 0.0
    %2236 = vmatprep.subr.mxu0 0.0
    %2237 = vmatpush1.msra.mxu0 0.0
    %2238 = vmatprep.subr.mxu0 0.0
    %2239 = vmatpush1.msra.mxu0 0.0
    %2240 = vmatprep.subr.mxu0 0.0
    %2241 = vmatpush1.msra.mxu0 0.0
    %2242 = vmatprep.subr.mxu0 0.0
    %2243 = vmatpush1.msra.mxu0 0.0
    %2244 = vmatprep.subr.mxu0 0.0
    %2245 = vmatpush1.msra.mxu0 0.0
    %2246 = vmatprep.subr.mxu0 0.0
    %2247 = vmatpush1.msra.mxu0 0.0
    %2248 = vmatprep.subr.mxu0 0.0
    %2249 = vmatpush1.msra.mxu0 %v2210
    %2250 = vmatprep.subr.mxu0 0.0
    %2251 = vmatpush1.msra.mxu0 %v2209
    %2252 = vmatprep.subr.mxu0 0.0
    %2253 = vmatpush1.msra.mxu0 %v2208
    %2254 = vmatprep.subr.mxu0 0.0
    %2255 = vmatpush1.msra.mxu0 %v2207
    %2256 = vmatprep.subr.mxu0 0.0
    %2257 = vmatpush2.msra.mxu0 0.0
    %2258 = vmatprep.subr.mxu0 0.0
    %2259 = vmatpush2.msra.mxu0 0.0
    %2260 = vmatprep.subr.mxu0 0.0
    %2261 = vmatpush2.msra.mxu0 0.0
    %2262 = vmatprep.subr.mxu0 0.0
    %2263 = vmatpush2.msra.mxu0 0.0
    %2264 = vmatprep.subr.mxu0 0.0
    %2265 = vmatpush2.msra.mxu0 0.0
    %2266 = vmatprep.subr.mxu0 0.0
    %2267 = vmatpush2.msra.mxu0 0.0
    %2268 = vmatprep.subr.mxu0 0.0
    %2269 = vmatpush2.msra.mxu0 0.0
    %2270 = vmatprep.subr.mxu0 0.0
    %2271 = vmatpush2.msra.mxu0 0.0
    %2272 = vmatprep.subr.mxu0 0.0
    %2273 = vmatpush2.msra.mxu0 0.0
    %2274 = vmatprep.subr.mxu0 0.0
    %2275 = vmatpush2.msra.mxu0 0.0
    %2276 = vmatprep.subr.mxu0 0.0
    %2277 = vmatpush2.msra.mxu0 0.0
    %2278 = vmatprep.subr.mxu0 0.0
    %2279 = vmatpush2.msra.mxu0 0.0
    %2280 = vmatprep.subr.mxu0 0.0
    %2281 = vmatpush2.msra.mxu0 0.0
    %2282 = vmatprep.subr.mxu0 0.0
    %2283 = vmatpush2.msra.mxu0 0.0
    %2284 = vmatprep.subr.mxu0 0.0
    %2285 = vmatpush2.msra.mxu0 0.0
    %2286 = vmatprep.subr.mxu0 0.0
    %2287 = vmatpush2.msra.mxu0 0.0
    %2288 = vmatprep.mubr.f32.mxu0 0.0
    %2289 = vmatmul.mubr.f32.gmra.mxu0 %v2219
    %v2290 = vpop.f32.mrf.mxu0
    %v2291 = vadd.f32 %v2216, %v2290
    %v2292 = vpop.f32.mrf.mxu0
    %2293 = vmatprep.mubr.f32.mxu0 0.0
    %2294 = vmatmul.mubr.f32.gmra.mxu0 %v2222
    %v2295 = vpop.f32.mrf.mxu0
    %v2296 = vadd.f32 %v2216, %v2295
    %v2297 = vpop.f32.mrf.mxu0
    %2298 = vdwg.mxu0
    %2299 = vst.msk [vmem:[#allocation5] sm:$0xff] %vm62, %v2291
    %2300 = vst.msk [vmem:[#allocation5 + $0x8] sm:$0xff] %vm62, %v2296
    %v2301 = vld [vmem:[%s1] sm:$0xff]
    %v2302 = vld [vmem:[%s1 + $0x8] sm:$0xff]
    %v2303 = vsub.f32 %v2301, %v2291
    %v2304 = vsub.f32 %v2302, %v2296
    %v2305 = vmul.f32 %v2303, %v2303
    %v2306 = vmul.f32 %v2304, %v2304
    %v2307 = vsel %vm62, %v2305, 0.0
    %v2308 = vsel %vm62, %v2306, 0.0
    %v2309 = vadd.f32 %v2307, %v2308
    %2310 = vadd.xlane.f32.xlu0 %v2309
    %v2311 = vpop.xlane.xlu0 %2310
    %v2312 = vrot.slane %v2311, 4
    %v2313 = vadd.f32 %v2311, %v2312
    %v2314 = vrot.slane %v2313, 2
    %v2315 = vadd.f32 %v2313, %v2314
    %v2316 = vrot.slane %v2315, 1
    %v2317 = vadd.f32 %v2315, %v2316
    %s2318 = vtos %v2317
    %v2319 = vrcp.pop 256.0
    %s2320 = vtos %v2319
    %s2321 = smul.f32 %s2318, %s2320
    %v2322 = vstv %s2321
    %vm2323 = vcmask 0
    %2324 = vst.msk [vmem:[#allocation7] sm:$0x1] %vm2323, %v2322
    // Predicated region
    $region58: #{_lambda_.1} parent=1 // pred_check
      _
    $region59: #{_lambda_.1} parent=1 // pred_check_branch
      %2326 = sbr.rel (0) target = $region61
    $region60: #{_lambda_.1} parent=1 // pred_region
      %s2328 = ssub.s32 256, 256
      %2329 = vsyncadd [#allocation6], %s2328
      %s2330 = sshll.u32 [#allocation5], 4
      %s2331 = int_to_ptr.vmem [resolvable:$true] %s2330
      %2336 = dma.vmem_to_hbm [thread:$0]  %s2331, 256, %s14, [#allocation6], 128, 128, 8
    $region61: #{_lambda_.1} parent=1 // pred_fallthru
      _
    // Predicated region
    $region62: #{_lambda_.1} parent=1 // pred_check
      _
    $region63: #{_lambda_.1} parent=1 // pred_check_branch
      %2338 = sbr.rel (0) target = $region65
    $region64: #{_lambda_.1} parent=1 // pred_region
      %s2340 = ssub.s32 16, 16
      %2341 = vsyncadd [#allocation8], %s2340
      %s2343 = sshll.u32 [#allocation7], 4
      %s2344 = int_to_ptr.vmem [resolvable:$true] %s2343
      %2346 = dma.vmem_to_hbm [thread:$0]  %s2344, 16, %s15, [#allocation8]
    $region65: #{_lambda_.1} parent=1 // pred_fallthru
      _
    // Predicated region
    $region66: #{_lambda_.1} parent=1 // pred_check
      _
    $region67: #{_lambda_.1} parent=1 // pred_check_branch
      %2348 = sbr.rel (0) target = $region69
    $region68: #{_lambda_.1} parent=1 // pred_region
      %2349 = dma.done [#allocation6], 256
    $region69: #{_lambda_.1} parent=1 // pred_fallthru
      _
    // Predicated region
    $region70: #{_lambda_.1} parent=1 // pred_check
      _
    $region71: #{_lambda_.1} parent=1 // pred_check_branch
      %2351 = sbr.rel (0) target = $region73
    $region72: #{_lambda_.1} parent=1 // pred_region
      %2352 = dma.done [#allocation8], 16
    $region73: #{_lambda_.1} parent=1 // pred_fallthru
      _
    %2353 = vsyncpa [#allocation6], 1
    %2354 = vsyncpa [#allocation8], 1

</llo_original>
